<compile_context>
chip_gen: v7x
topology: tpu7x:2x2x1
jax: 0.10.0
libtpu: 0.0.40
codegen_flags: <defaults>
</compile_context>

<pallas_src>
import jax
import jax.numpy as jnp
import numpy as np
from jax import lax
from jax.experimental import pallas as pl
from jax.experimental.pallas import tpu as pltpu

# ----------------------------- hyper-parameters ------------------------------
INPUT_DIM = 3          # module default input_dim=3
INPUT_PAD = 8          # zero-padded contraction dim (sublane quantum)
EMBED_DIM = 32         # scaled-down embed_dim
SEQ_LEN = 8            # scaled-down seq_length
NUM_HEADS = 4
NUM_LAYERS = 2
NUM_CLASSES = 5
HEAD_DIM = EMBED_DIM // NUM_HEADS
FF_DIM = EMBED_DIM * 4
LN_EPS = 1e-5
BATCH = 2
SLAB_WIDTH = 128       # lane width of the packed weight slabs / output


def _ceil8(n):
    return (n + 7) // 8 * 8


# ------------------- packed-weight layouts (compile-time) --------------------
def _build_mat_layout():
    """bf16 matrix slab: name -> (row_off, lane_off, rows, cols).

    Every chunk starts on a 16-row boundary (bf16 sublane tile) so all
    in-kernel slices are row-aligned; lanes are packed densely.
    """
    E, F, T = EMBED_DIM, FF_DIM, SEQ_LEN
    lay = {"we": (0, 0, INPUT_PAD, E), "pos": (0, E, T, E)}
    row = 16
    for l in range(NUM_LAYERS):
        lay[f"inw{l}"] = (row, 0, E, 3 * E)          # (E, 3E) QKV projection
        lay[f"ow{l}"] = (row, 3 * E, E, E)           # (E, E)  attn out-proj
        row += E
    for l in range(NUM_LAYERS):
        lay[f"w1{l}"] = (row, 0, E, F)               # (E, 4E) FFN up
        row += E
    lay["wh"] = (row, 0, E, SLAB_WIDTH)              # classifier, lane-dense out
    row += E
    for l in range(NUM_LAYERS):
        lay[f"w2{l}"] = (row, l * E, F, E)           # (4E, E) FFN down, side by side
    row += F
    return lay, row                                  # 304 rows x 128 lanes


def _build_vec_layout():
    """f32 vector slab: one bias / LayerNorm vector per row -> name:(row, width)."""
    E, F = EMBED_DIM, FF_DIM
    names = [("be", E), ("bh", SLAB_WIDTH)]
    for l in range(NUM_LAYERS):
        names += [(f"inb{l}", 3 * E), (f"ob{l}", E),
                  (f"ln1g{l}", E), (f"ln1b{l}", E),
                  (f"b1{l}", F), (f"b2{l}", E),
                  (f"ln2g{l}", E), (f"ln2b{l}", E)]
    lay = {name: (i, width) for i, (name, width) in enumerate(names)}
    return lay, _ceil8(len(names))


_MAT_LAYOUT, _MAT_ROWS = _build_mat_layout()
_VEC_LAYOUT, _VEC_ROWS = _build_vec_layout()


# ------------------------------ one-time packing ------------------------------
def pack_weights(p):
    """Pack PyTorch-shaped weights ONCE into (bf16 matrix slab, f32 vector slab)."""
    mat = np.zeros((_MAT_ROWS, SLAB_WIDTH), np.float32)
    vec = np.zeros((_VEC_ROWS, SLAB_WIDTH), np.float32)

    def put_mat(name, arr):
        arr = np.asarray(arr, np.float32)
        r, c, rows, cols = _MAT_LAYOUT[name]
        assert arr.shape[0] <= rows and arr.shape[1] <= cols, (name, arr.shape)
        mat[r:r + arr.shape[0], c:c + arr.shape[1]] = arr

    def put_vec(name, arr):
        arr = np.asarray(arr, np.float32).reshape(-1)
        r, width = _VEC_LAYOUT[name]
        assert arr.shape[0] <= width, (name, arr.shape)
        vec[r, :arr.shape[0]] = arr

    put_mat("we", np.asarray(p["we"]).T)          # (input_dim, E); padded rows stay 0
    put_mat("pos", p["pos"])
    put_mat("wh", np.asarray(p["wh"]).T)          # (E, C) in an (E, 128) slot
    put_vec("be", p["be"])
    put_vec("bh", p["bh"])
    for l in range(NUM_LAYERS):
        put_mat(f"inw{l}", np.asarray(p["inw"][l]).T)   # (E, 3E)
        put_mat(f"ow{l}", np.asarray(p["ow"][l]).T)     # (E, E)
        put_mat(f"w1{l}", np.asarray(p["w1"][l]).T)     # (E, 4E)
        put_mat(f"w2{l}", np.asarray(p["w2"][l]).T)     # (4E, E)
        put_vec(f"inb{l}", p["inb"][l])
        put_vec(f"ob{l}", p["ob"][l])
        put_vec(f"ln1g{l}", p["ln1g"][l])
        put_vec(f"ln1b{l}", p["ln1b"][l])
        put_vec(f"b1{l}", p["b1"][l])
        put_vec(f"b2{l}", p["b2"][l])
        put_vec(f"ln2g{l}", p["ln2g"][l])
        put_vec(f"ln2b{l}", p["ln2b"][l])
    return (jnp.asarray(mat, dtype=jnp.bfloat16),
            jnp.asarray(vec, dtype=jnp.float32))


def _layernorm(x, g, b):
    # single-pass variance: E[x^2] - E[x]^2  (f32 throughout)
    m = jnp.mean(x, axis=-1, keepdims=True)
    var = jnp.mean(x * x, axis=-1, keepdims=True) - m * m
    return (x - m) * lax.rsqrt(var + LN_EPS) * g + b


# --------------------------------- forward ------------------------------------
@jax.jit
def imu_transformer_forward(x, mat_slab, vec_slab):
    """x: (B, T, INPUT_DIM) f32; slabs from pack_weights (built once at init)."""
    B, T, _ = x.shape
    assert T == SEQ_LEN and x.shape[2] == INPUT_DIM
    M = B * T
    OUT_ROWS = _ceil8(B)
    E, H, D = EMBED_DIM, NUM_HEADS, HEAD_DIM
    scale = 1.0 / float(D) ** 0.5
    f32, bf16 = jnp.float32, jnp.bfloat16

    def kernel(x_ref, m_ref, v_ref, out_ref):
        def mat(name):                                  # bf16 matrix chunk
            r, c, rows, cols = _MAT_LAYOUT[name]
            return m_ref[r:r + rows, c:c + cols]

        def vec(name):                                  # f32 (1, width) vector
            r, w = _VEC_LAYOUT[name]
            return v_ref[r:r + 1, :w]

        # ---- embedding + positional embedding (whole batch at once) ----
        xin = x_ref[...].astype(bf16)                                   # (M, 8)
        h = jnp.dot(xin, mat("we"), preferred_element_type=f32) + vec("be")
        h = (h.reshape(B, T, E) + mat("pos").astype(f32)[None]).reshape(M, E)

        for l in range(NUM_LAYERS):                                     # unrolled
            # -------- multi-head self-attention (post-norm, eval) --------
            qkv = jnp.dot(h.astype(bf16), mat(f"inw{l}"),
                          preferred_element_type=f32) + vec(f"inb{l}")  # (M, 3E)

            def heads(base):     # gather Q/K/V as (B*H, T, D), head-major rows
                return jnp.concatenate(
                    [qkv[:, base + hd * D: base + (hd + 1) * D].reshape(B, T, D)
                     for hd in range(H)], axis=0)

            qx, kx, vx = heads(0), heads(E), heads(2 * E)
            s = jnp.einsum("xtd,xsd->xts", qx, kx,
                           preferred_element_type=f32) * scale          # (BH,T,T)
            s = s - jnp.max(s, axis=-1, keepdims=True)
            p = jnp.exp(s)
            p = p * pl.reciprocal(jnp.sum(p, axis=-1, keepdims=True), approx=True)
            o = jnp.einsum("xts,xsd->xtd", p, vx,
                           preferred_element_type=f32)                  # (BH,T,D)
            o_cat = jnp.concatenate(                                    # (M, E)
                [o[hd * B:(hd + 1) * B].reshape(M, D) for hd in range(H)],
                axis=-1)
            attn = jnp.dot(o_cat.astype(bf16), mat(f"ow{l}"),
                           preferred_element_type=f32) + vec(f"ob{l}")
            # TODO(synk): dropout in TransformerEncoderLayer is eval-mode identity.
            h = _layernorm(h + attn, vec(f"ln1g{l}"), vec(f"ln1b{l}"))

            # ------------------------ feed forward ------------------------
            ff = jnp.dot(h.astype(bf16), mat(f"w1{l}"),
                         preferred_element_type=f32) + vec(f"b1{l}")
            ff = jnp.maximum(ff, 0.0)                                   # ReLU
            ff = jnp.dot(ff.astype(bf16), mat(f"w2{l}"),
                         preferred_element_type=f32) + vec(f"b2{l}")
            h = _layernorm(h + ff, vec(f"ln2g{l}"), vec(f"ln2b{l}"))

        # ---- mean pool over time + classification head (lane-dense out) ----
        pooled = jnp.mean(h.reshape(B, T, E), axis=1)                   # (B, E)
        if OUT_ROWS > B:
            pooled = jnp.concatenate(
                [pooled, jnp.zeros((OUT_ROWS - B, E), f32)], axis=0)    # (8, E)
        out_ref[...] = (jnp.dot(pooled.astype(bf16), mat("wh"),
                                preferred_element_type=f32) + vec("bh"))

    x_pad = jnp.pad(x.reshape(M, INPUT_DIM).astype(jnp.float32),
                    ((0, 0), (0, INPUT_PAD - INPUT_DIM)))

    out = pl.pallas_call(
        kernel,
        out_shape=jax.ShapeDtypeStruct((OUT_ROWS, SLAB_WIDTH), jnp.float32),
        grid=(1,),
        in_specs=[pl.BlockSpec((M, INPUT_PAD), lambda i: (0, 0)),
                  pl.BlockSpec((_MAT_ROWS, SLAB_WIDTH), lambda i: (0, 0)),
                  pl.BlockSpec((_VEC_ROWS, SLAB_WIDTH), lambda i: (0, 0))],
        out_specs=pl.BlockSpec((OUT_ROWS, SLAB_WIDTH), lambda i: (0, 0)),
        compiler_params=pltpu.CompilerParams(
            dimension_semantics=("arbitrary",)),
    )(x_pad, mat_slab, vec_slab)
    return out[:B, :NUM_CLASSES]


# -------------------------- pure-JAX reference --------------------------------
def reference_forward(x, p):
    h = x @ p["we"].T + p["be"] + p["pos"][None]           # (B, T, E)
    B, T, _ = h.shape
    scale = 1.0 / float(HEAD_DIM) ** 0.5
    for l in range(NUM_LAYERS):
        qkv = h @ p["inw"][l].T + p["inb"][l]              # (B, T, 3E)
        q, k, v = jnp.split(qkv, 3, axis=-1)
        q = q.reshape(B, T, NUM_HEADS, HEAD_DIM)
        k = k.reshape(B, T, NUM_HEADS, HEAD_DIM)
        v = v.reshape(B, T, NUM_HEADS, HEAD_DIM)
        s = jnp.einsum("bthd,bshd->bhts", q, k) * scale
        a = jax.nn.softmax(s, axis=-1)
        o = jnp.einsum("bhts,bshd->bthd", a, v).reshape(B, T, EMBED_DIM)
        attn = o @ p["ow"][l].T + p["ob"][l]
        h = _layernorm(h + attn, p["ln1g"][l], p["ln1b"][l])
        ff = jax.nn.relu(h @ p["w1"][l].T + p["b1"][l]) @ p["w2"][l].T + p["b2"][l]
        h = _layernorm(h + ff, p["ln2g"][l], p["ln2b"][l])
    return h.mean(axis=1) @ p["wh"].T + p["bh"]


# ------------------------------ param init ------------------------------------
def init_params(key):
    ks = iter(jax.random.split(key, 32))

    def w(shape, scale=0.05):
        return (scale * jax.random.normal(next(ks), shape)).astype(jnp.float32)

    L, E, F, C, D = NUM_LAYERS, EMBED_DIM, FF_DIM, NUM_CLASSES, INPUT_DIM
    return {
        "pos": w((SEQ_LEN, E)),               # nn.Embedding(seq_length, E) rows 0..T-1
        "we": w((E, D)), "be": w((E,)),       # nn.Linear(input_dim, E)
        "inw": w((L, 3 * E, E)), "inb": w((L, 3 * E)),   # MHA in_proj
        "ow": w((L, E, E)), "ob": w((L, E)),             # MHA out_proj
        "ln1g": jnp.ones((L, E), jnp.float32), "ln1b": jnp.zeros((L, E), jnp.float32),
        "w1": w((L, F, E)), "b1": w((L, F)),             # FFN linear1
        "w2": w((L, E, F)), "b2": w((L, E)),             # FFN linear2
        "ln2g": jnp.ones((L, E), jnp.float32), "ln2b": jnp.zeros((L, E), jnp.float32),
        "wh": w((C, E)), "bh": w((C,)),                  # classification head
    }


# ---------------------------------- main ---------------------------------------
if __name__ == "__main__":
    key = jax.random.PRNGKey(0)
    pkey, xkey = jax.random.split(key)
    params = init_params(pkey)
    x = jax.random.normal(xkey, (BATCH, SEQ_LEN, INPUT_DIM), dtype=jnp.float32)

    # Weight slabs are packed ONCE at init time (hoisted out of the forward).
    mat_slab, vec_slab = pack_weights(params)

    out = imu_transformer_forward(x, mat_slab, vec_slab)
    out = jax.block_until_ready(out)
    assert out.shape == (BATCH, NUM_CLASSES), out.shape

    ref = jax.block_until_ready(reference_forward(x, params))
    # bf16 weight slab -> compare against the f32 reference at bf16-level tolerance.
    np.testing.assert_allclose(np.asarray(out), np.asarray(ref), rtol=2e-2, atol=2e-2)
    print("KERNEL_OK")
</pallas_src>

<mosaic_0001>
module attributes {stable_mosaic.version = 11 : i64} {
  func.func @kernel(%arg0: i32, %arg1: memref<16x8xf32, #tpu.memory_space<vmem>>, %arg2: memref<304x128xbf16, #tpu.memory_space<vmem>>, %arg3: memref<24x128xf32, #tpu.memory_space<vmem>>, %arg4: memref<8x128xf32, #tpu.memory_space<vmem>>) attributes {dimension_semantics = [#tpu.dimension_semantics<arbitrary>], iteration_bounds = array<i64: 1>, scalar_prefetch = 0 : i64, scratch_operands = 0 : i64, tpu.core_type = #tpu.core_type<tc>, window_params = [{pipeline_mode = #tpu.pipeline_mode<synchronous>, transform_indices = @transform_0, window_bounds = array<i64: 16, 8>}, {pipeline_mode = #tpu.pipeline_mode<synchronous>, transform_indices = @transform_1, window_bounds = array<i64: 304, 128>}, {pipeline_mode = #tpu.pipeline_mode<synchronous>, transform_indices = @transform_2, window_bounds = array<i64: 24, 128>}, {pipeline_mode = #tpu.pipeline_mode<synchronous>, transform_indices = @transform_3, window_bounds = array<i64: 8, 128>}]} {
    %c0 = arith.constant 0 : index
    %c0_0 = arith.constant 0 : index
    %0 = vector.load %arg1[%c0, %c0_0] : memref<16x8xf32, #tpu.memory_space<vmem>>, vector<16x8xf32>
    %1 = arith.truncf %0 : vector<16x8xf32> to vector<16x8xbf16>
    %c0_1 = arith.constant 0 : index
    %c0_2 = arith.constant 0 : index
    %2 = vector.load %arg2[%c0_1, %c0_2] : memref<304x128xbf16, #tpu.memory_space<vmem>>, vector<8x32xbf16>
    %cst = arith.constant dense<0.000000e+00> : vector<16x32xf32>
    %3 = tpu.matmul %1, %2, %cst {dimension_numbers = #tpu.dot_dimension_numbers<[1], [0], [0], [1], [0, 0, 1, 1], [], []>} : vector<16x8xbf16>, vector<8x32xbf16>, vector<16x32xf32> -> vector<16x32xf32>
    %c0_3 = arith.constant 0 : index
    %c0_4 = arith.constant 0 : index
    %4 = vector.load %arg3[%c0_3, %c0_4] : memref<24x128xf32, #tpu.memory_space<vmem>>, vector<1x32xf32>
    %5 = vector.broadcast %4 : vector<1x32xf32> to vector<16x32xf32>
    %6 = arith.addf %3, %5 : vector<16x32xf32>
    %7 = vector.shape_cast %6 : vector<16x32xf32> to vector<2x8x32xf32>
    %c0_5 = arith.constant 0 : index
    %c32 = arith.constant 32 : index
    %8 = vector.load %arg2[%c0_5, %c32] : memref<304x128xbf16, #tpu.memory_space<vmem>>, vector<8x32xbf16>
    %9 = arith.extf %8 : vector<8x32xbf16> to vector<8x32xf32>
    %10 = vector.shape_cast %9 : vector<8x32xf32> to vector<1x8x32xf32>
    %11 = vector.broadcast %10 : vector<1x8x32xf32> to vector<2x8x32xf32>
    %12 = arith.addf %7, %11 : vector<2x8x32xf32>
    %13 = vector.shape_cast %12 : vector<2x8x32xf32> to vector<16x32xf32>
    %14 = arith.truncf %13 : vector<16x32xf32> to vector<16x32xbf16>
    %c16 = arith.constant 16 : index
    %c0_6 = arith.constant 0 : index
    %15 = vector.load %arg2[%c16, %c0_6] : memref<304x128xbf16, #tpu.memory_space<vmem>>, vector<32x96xbf16>
    %cst_7 = arith.constant dense<0.000000e+00> : vector<16x96xf32>
    %16 = tpu.matmul %14, %15, %cst_7 {dimension_numbers = #tpu.dot_dimension_numbers<[1], [0], [0], [1], [0, 0, 1, 1], [], []>} : vector<16x32xbf16>, vector<32x96xbf16>, vector<16x96xf32> -> vector<16x96xf32>
    %c2 = arith.constant 2 : index
    %c0_8 = arith.constant 0 : index
    %17 = vector.load %arg3[%c2, %c0_8] : memref<24x128xf32, #tpu.memory_space<vmem>>, vector<1x96xf32>
    %18 = vector.broadcast %17 : vector<1x96xf32> to vector<16x96xf32>
    %19 = arith.addf %16, %18 : vector<16x96xf32>
    %20 = vector.extract_strided_slice %19 {offsets = [0, 0], sizes = [16, 8], strides = [1, 1]} : vector<16x96xf32> to vector<16x8xf32>
    %21 = vector.shape_cast %20 : vector<16x8xf32> to vector<2x8x8xf32>
    %22 = vector.extract_strided_slice %19 {offsets = [0, 8], sizes = [16, 8], strides = [1, 1]} : vector<16x96xf32> to vector<16x8xf32>
    %23 = vector.shape_cast %22 : vector<16x8xf32> to vector<2x8x8xf32>
    %24 = vector.extract_strided_slice %19 {offsets = [0, 16], sizes = [16, 8], strides = [1, 1]} : vector<16x96xf32> to vector<16x8xf32>
    %25 = vector.shape_cast %24 : vector<16x8xf32> to vector<2x8x8xf32>
    %26 = vector.extract_strided_slice %19 {offsets = [0, 24], sizes = [16, 8], strides = [1, 1]} : vector<16x96xf32> to vector<16x8xf32>
    %27 = vector.shape_cast %26 : vector<16x8xf32> to vector<2x8x8xf32>
    %28 = tpu.concatenate %21, %23, %25, %27 in 0 : vector<2x8x8xf32>, vector<2x8x8xf32>, vector<2x8x8xf32>, vector<2x8x8xf32> -> vector<8x8x8xf32>
    %29 = vector.extract_strided_slice %19 {offsets = [0, 32], sizes = [16, 8], strides = [1, 1]} : vector<16x96xf32> to vector<16x8xf32>
    %30 = vector.shape_cast %29 : vector<16x8xf32> to vector<2x8x8xf32>
    %31 = vector.extract_strided_slice %19 {offsets = [0, 40], sizes = [16, 8], strides = [1, 1]} : vector<16x96xf32> to vector<16x8xf32>
    %32 = vector.shape_cast %31 : vector<16x8xf32> to vector<2x8x8xf32>
    %33 = vector.extract_strided_slice %19 {offsets = [0, 48], sizes = [16, 8], strides = [1, 1]} : vector<16x96xf32> to vector<16x8xf32>
    %34 = vector.shape_cast %33 : vector<16x8xf32> to vector<2x8x8xf32>
    %35 = vector.extract_strided_slice %19 {offsets = [0, 56], sizes = [16, 8], strides = [1, 1]} : vector<16x96xf32> to vector<16x8xf32>
    %36 = vector.shape_cast %35 : vector<16x8xf32> to vector<2x8x8xf32>
    %37 = tpu.concatenate %30, %32, %34, %36 in 0 : vector<2x8x8xf32>, vector<2x8x8xf32>, vector<2x8x8xf32>, vector<2x8x8xf32> -> vector<8x8x8xf32>
    %38 = vector.extract_strided_slice %19 {offsets = [0, 64], sizes = [16, 8], strides = [1, 1]} : vector<16x96xf32> to vector<16x8xf32>
    %39 = vector.shape_cast %38 : vector<16x8xf32> to vector<2x8x8xf32>
    %40 = vector.extract_strided_slice %19 {offsets = [0, 72], sizes = [16, 8], strides = [1, 1]} : vector<16x96xf32> to vector<16x8xf32>
    %41 = vector.shape_cast %40 : vector<16x8xf32> to vector<2x8x8xf32>
    %42 = vector.extract_strided_slice %19 {offsets = [0, 80], sizes = [16, 8], strides = [1, 1]} : vector<16x96xf32> to vector<16x8xf32>
    %43 = vector.shape_cast %42 : vector<16x8xf32> to vector<2x8x8xf32>
    %44 = vector.extract_strided_slice %19 {offsets = [0, 88], sizes = [16, 8], strides = [1, 1]} : vector<16x96xf32> to vector<16x8xf32>
    %45 = vector.shape_cast %44 : vector<16x8xf32> to vector<2x8x8xf32>
    %46 = tpu.concatenate %39, %41, %43, %45 in 0 : vector<2x8x8xf32>, vector<2x8x8xf32>, vector<2x8x8xf32>, vector<2x8x8xf32> -> vector<8x8x8xf32>
    "tpu.trace_start"() <{level = 10 : i32, message = "xtd,xsd->xts"}> : () -> ()
    %cst_9 = arith.constant dense<0.000000e+00> : vector<8x8x8xf32>
    %47 = tpu.matmul %28, %37, %cst_9 {dimension_numbers = #tpu.dot_dimension_numbers<[2], [2], [1], [1], [0, 0, 0, 1, 1, 1], [0], [0]>} : vector<8x8x8xf32>, vector<8x8x8xf32>, vector<8x8x8xf32> -> vector<8x8x8xf32>
    "tpu.trace_stop"() : () -> ()
    %cst_10 = arith.constant 0.353553385 : f32
    %48 = vector.broadcast %cst_10 : f32 to vector<8x8x8xf32>
    %49 = arith.mulf %47, %48 : vector<8x8x8xf32>
    %cst_11 = arith.constant dense<0xFF800000> : vector<8x8xf32>
    %50 = vector.multi_reduction <maximumf>, %49, %cst_11 [2] : vector<8x8x8xf32> to vector<8x8xf32>
    %51 = vector.shape_cast %50 : vector<8x8xf32> to vector<8x8x1xf32>
    %52 = vector.broadcast %51 : vector<8x8x1xf32> to vector<8x8x8xf32>
    %53 = arith.subf %49, %52 : vector<8x8x8xf32>
    %54 = math.exp %53 : vector<8x8x8xf32>
    %cst_12 = arith.constant dense<0.000000e+00> : vector<8x8xf32>
    %55 = vector.multi_reduction <add>, %54, %cst_12 [2] : vector<8x8x8xf32> to vector<8x8xf32>
    %56 = vector.shape_cast %55 : vector<8x8xf32> to vector<8x8x1xf32>
    %57 = tpu.reciprocal %56 {approx = true} : vector<8x8x1xf32> -> vector<8x8x1xf32>
    %58 = vector.broadcast %57 : vector<8x8x1xf32> to vector<8x8x8xf32>
    %59 = arith.mulf %54, %58 : vector<8x8x8xf32>
    "tpu.trace_start"() <{level = 10 : i32, message = "xts,xsd->xtd"}> : () -> ()
    %cst_13 = arith.constant dense<0.000000e+00> : vector<8x8x8xf32>
    %60 = tpu.matmul %59, %46, %cst_13 {dimension_numbers = #tpu.dot_dimension_numbers<[2], [1], [1], [2], [0, 0, 0, 1, 1, 2], [0], [0]>} : vector<8x8x8xf32>, vector<8x8x8xf32>, vector<8x8x8xf32> -> vector<8x8x8xf32>
    "tpu.trace_stop"() : () -> ()
    %61 = vector.extract_strided_slice %60 {offsets = [0, 0, 0], sizes = [2, 8, 8], strides = [1, 1, 1]} : vector<8x8x8xf32> to vector<2x8x8xf32>
    %62 = vector.shape_cast %61 : vector<2x8x8xf32> to vector<16x8xf32>
    %63 = vector.extract_strided_slice %60 {offsets = [2, 0, 0], sizes = [2, 8, 8], strides = [1, 1, 1]} : vector<8x8x8xf32> to vector<2x8x8xf32>
    %64 = vector.shape_cast %63 : vector<2x8x8xf32> to vector<16x8xf32>
    %65 = vector.extract_strided_slice %60 {offsets = [4, 0, 0], sizes = [2, 8, 8], strides = [1, 1, 1]} : vector<8x8x8xf32> to vector<2x8x8xf32>
    %66 = vector.shape_cast %65 : vector<2x8x8xf32> to vector<16x8xf32>
    %67 = vector.extract_strided_slice %60 {offsets = [6, 0, 0], sizes = [2, 8, 8], strides = [1, 1, 1]} : vector<8x8x8xf32> to vector<2x8x8xf32>
    %68 = vector.shape_cast %67 : vector<2x8x8xf32> to vector<16x8xf32>
    %69 = tpu.concatenate %62, %64, %66, %68 in 1 : vector<16x8xf32>, vector<16x8xf32>, vector<16x8xf32>, vector<16x8xf32> -> vector<16x32xf32>
    %70 = arith.truncf %69 : vector<16x32xf32> to vector<16x32xbf16>
    %c16_14 = arith.constant 16 : index
    %c96 = arith.constant 96 : index
    %71 = vector.load %arg2[%c16_14, %c96] : memref<304x128xbf16, #tpu.memory_space<vmem>>, vector<32x32xbf16>
    %cst_15 = arith.constant dense<0.000000e+00> : vector<16x32xf32>
    %72 = tpu.matmul %70, %71, %cst_15 {dimension_numbers = #tpu.dot_dimension_numbers<[1], [0], [0], [1], [0, 0, 1, 1], [], []>} : vector<16x32xbf16>, vector<32x32xbf16>, vector<16x32xf32> -> vector<16x32xf32>
    %c3 = arith.constant 3 : index
    %c0_16 = arith.constant 0 : index
    %73 = vector.load %arg3[%c3, %c0_16] : memref<24x128xf32, #tpu.memory_space<vmem>>, vector<1x32xf32>
    %74 = vector.broadcast %73 : vector<1x32xf32> to vector<16x32xf32>
    %75 = arith.addf %72, %74 : vector<16x32xf32>
    %76 = arith.addf %13, %75 : vector<16x32xf32>
    %c4 = arith.constant 4 : index
    %c0_17 = arith.constant 0 : index
    %77 = vector.load %arg3[%c4, %c0_17] : memref<24x128xf32, #tpu.memory_space<vmem>>, vector<1x32xf32>
    %c5 = arith.constant 5 : index
    %c0_18 = arith.constant 0 : index
    %78 = vector.load %arg3[%c5, %c0_18] : memref<24x128xf32, #tpu.memory_space<vmem>>, vector<1x32xf32>
    %cst_19 = arith.constant dense<0.000000e+00> : vector<16xf32>
    %79 = vector.multi_reduction <add>, %76, %cst_19 [1] : vector<16x32xf32> to vector<16xf32>
    %80 = vector.shape_cast %79 : vector<16xf32> to vector<16x1xf32>
    %cst_20 = arith.constant 3.200000e+01 : f32
    %81 = vector.broadcast %cst_20 : f32 to vector<16x1xf32>
    %82 = arith.divf %80, %81 : vector<16x1xf32>
    %83 = arith.mulf %76, %76 : vector<16x32xf32>
    %cst_21 = arith.constant dense<0.000000e+00> : vector<16xf32>
    %84 = vector.multi_reduction <add>, %83, %cst_21 [1] : vector<16x32xf32> to vector<16xf32>
    %85 = vector.shape_cast %84 : vector<16xf32> to vector<16x1xf32>
    %cst_22 = arith.constant 3.200000e+01 : f32
    %86 = vector.broadcast %cst_22 : f32 to vector<16x1xf32>
    %87 = arith.divf %85, %86 : vector<16x1xf32>
    %88 = arith.mulf %82, %82 : vector<16x1xf32>
    %89 = arith.subf %87, %88 : vector<16x1xf32>
    %90 = vector.broadcast %82 : vector<16x1xf32> to vector<16x32xf32>
    %91 = arith.subf %76, %90 : vector<16x32xf32>
    %cst_23 = arith.constant 9.99999974E-6 : f32
    %92 = vector.broadcast %cst_23 : f32 to vector<16x1xf32>
    %93 = arith.addf %89, %92 : vector<16x1xf32>
    %94 = math.rsqrt %93 : vector<16x1xf32>
    %95 = vector.broadcast %94 : vector<16x1xf32> to vector<16x32xf32>
    %96 = arith.mulf %91, %95 : vector<16x32xf32>
    %97 = vector.broadcast %77 : vector<1x32xf32> to vector<16x32xf32>
    %98 = arith.mulf %96, %97 : vector<16x32xf32>
    %99 = vector.broadcast %78 : vector<1x32xf32> to vector<16x32xf32>
    %100 = arith.addf %98, %99 : vector<16x32xf32>
    %101 = arith.truncf %100 : vector<16x32xf32> to vector<16x32xbf16>
    %c80 = arith.constant 80 : index
    %c0_24 = arith.constant 0 : index
    %102 = vector.load %arg2[%c80, %c0_24] : memref<304x128xbf16, #tpu.memory_space<vmem>>, vector<32x128xbf16>
    %cst_25 = arith.constant dense<0.000000e+00> : vector<16x128xf32>
    %103 = tpu.matmul %101, %102, %cst_25 {dimension_numbers = #tpu.dot_dimension_numbers<[1], [0], [0], [1], [0, 0, 1, 1], [], []>} : vector<16x32xbf16>, vector<32x128xbf16>, vector<16x128xf32> -> vector<16x128xf32>
    %c6 = arith.constant 6 : index
    %c0_26 = arith.constant 0 : index
    %104 = vector.load %arg3[%c6, %c0_26] : memref<24x128xf32, #tpu.memory_space<vmem>>, vector<1x128xf32>
    %105 = vector.broadcast %104 : vector<1x128xf32> to vector<16x128xf32>
    %106 = arith.addf %103, %105 : vector<16x128xf32>
    %cst_27 = arith.constant 0.000000e+00 : f32
    %107 = vector.broadcast %cst_27 : f32 to vector<16x128xf32>
    %108 = arith.maximumf %106, %107 : vector<16x128xf32>
    %109 = arith.truncf %108 : vector<16x128xf32> to vector<16x128xbf16>
    %c176 = arith.constant 176 : index
    %c0_28 = arith.constant 0 : index
    %110 = vector.load %arg2[%c176, %c0_28] : memref<304x128xbf16, #tpu.memory_space<vmem>>, vector<128x32xbf16>
    %cst_29 = arith.constant dense<0.000000e+00> : vector<16x32xf32>
    %111 = tpu.matmul %109, %110, %cst_29 {dimension_numbers = #tpu.dot_dimension_numbers<[1], [0], [0], [1], [0, 0, 1, 1], [], []>} : vector<16x128xbf16>, vector<128x32xbf16>, vector<16x32xf32> -> vector<16x32xf32>
    %c7 = arith.constant 7 : index
    %c0_30 = arith.constant 0 : index
    %112 = vector.load %arg3[%c7, %c0_30] : memref<24x128xf32, #tpu.memory_space<vmem>>, vector<1x32xf32>
    %113 = vector.broadcast %112 : vector<1x32xf32> to vector<16x32xf32>
    %114 = arith.addf %111, %113 : vector<16x32xf32>
    %115 = arith.addf %100, %114 : vector<16x32xf32>
    %c8 = arith.constant 8 : index
    %c0_31 = arith.constant 0 : index
    %116 = vector.load %arg3[%c8, %c0_31] : memref<24x128xf32, #tpu.memory_space<vmem>>, vector<1x32xf32>
    %c9 = arith.constant 9 : index
    %c0_32 = arith.constant 0 : index
    %117 = vector.load %arg3[%c9, %c0_32] : memref<24x128xf32, #tpu.memory_space<vmem>>, vector<1x32xf32>
    %cst_33 = arith.constant dense<0.000000e+00> : vector<16xf32>
    %118 = vector.multi_reduction <add>, %115, %cst_33 [1] : vector<16x32xf32> to vector<16xf32>
    %119 = vector.shape_cast %118 : vector<16xf32> to vector<16x1xf32>
    %cst_34 = arith.constant 3.200000e+01 : f32
    %120 = vector.broadcast %cst_34 : f32 to vector<16x1xf32>
    %121 = arith.divf %119, %120 : vector<16x1xf32>
    %122 = arith.mulf %115, %115 : vector<16x32xf32>
    %cst_35 = arith.constant dense<0.000000e+00> : vector<16xf32>
    %123 = vector.multi_reduction <add>, %122, %cst_35 [1] : vector<16x32xf32> to vector<16xf32>
    %124 = vector.shape_cast %123 : vector<16xf32> to vector<16x1xf32>
    %cst_36 = arith.constant 3.200000e+01 : f32
    %125 = vector.broadcast %cst_36 : f32 to vector<16x1xf32>
    %126 = arith.divf %124, %125 : vector<16x1xf32>
    %127 = arith.mulf %121, %121 : vector<16x1xf32>
    %128 = arith.subf %126, %127 : vector<16x1xf32>
    %129 = vector.broadcast %121 : vector<16x1xf32> to vector<16x32xf32>
    %130 = arith.subf %115, %129 : vector<16x32xf32>
    %cst_37 = arith.constant 9.99999974E-6 : f32
    %131 = vector.broadcast %cst_37 : f32 to vector<16x1xf32>
    %132 = arith.addf %128, %131 : vector<16x1xf32>
    %133 = math.rsqrt %132 : vector<16x1xf32>
    %134 = vector.broadcast %133 : vector<16x1xf32> to vector<16x32xf32>
    %135 = arith.mulf %130, %134 : vector<16x32xf32>
    %136 = vector.broadcast %116 : vector<1x32xf32> to vector<16x32xf32>
    %137 = arith.mulf %135, %136 : vector<16x32xf32>
    %138 = vector.broadcast %117 : vector<1x32xf32> to vector<16x32xf32>
    %139 = arith.addf %137, %138 : vector<16x32xf32>
    %140 = arith.truncf %139 : vector<16x32xf32> to vector<16x32xbf16>
    %c48 = arith.constant 48 : index
    %c0_38 = arith.constant 0 : index
    %141 = vector.load %arg2[%c48, %c0_38] : memref<304x128xbf16, #tpu.memory_space<vmem>>, vector<32x96xbf16>
    %cst_39 = arith.constant dense<0.000000e+00> : vector<16x96xf32>
    %142 = tpu.matmul %140, %141, %cst_39 {dimension_numbers = #tpu.dot_dimension_numbers<[1], [0], [0], [1], [0, 0, 1, 1], [], []>} : vector<16x32xbf16>, vector<32x96xbf16>, vector<16x96xf32> -> vector<16x96xf32>
    %c10 = arith.constant 10 : index
    %c0_40 = arith.constant 0 : index
    %143 = vector.load %arg3[%c10, %c0_40] : memref<24x128xf32, #tpu.memory_space<vmem>>, vector<1x96xf32>
    %144 = vector.broadcast %143 : vector<1x96xf32> to vector<16x96xf32>
    %145 = arith.addf %142, %144 : vector<16x96xf32>
    %146 = vector.extract_strided_slice %145 {offsets = [0, 0], sizes = [16, 8], strides = [1, 1]} : vector<16x96xf32> to vector<16x8xf32>
    %147 = vector.shape_cast %146 : vector<16x8xf32> to vector<2x8x8xf32>
    %148 = vector.extract_strided_slice %145 {offsets = [0, 8], sizes = [16, 8], strides = [1, 1]} : vector<16x96xf32> to vector<16x8xf32>
    %149 = vector.shape_cast %148 : vector<16x8xf32> to vector<2x8x8xf32>
    %150 = vector.extract_strided_slice %145 {offsets = [0, 16], sizes = [16, 8], strides = [1, 1]} : vector<16x96xf32> to vector<16x8xf32>
    %151 = vector.shape_cast %150 : vector<16x8xf32> to vector<2x8x8xf32>
    %152 = vector.extract_strided_slice %145 {offsets = [0, 24], sizes = [16, 8], strides = [1, 1]} : vector<16x96xf32> to vector<16x8xf32>
    %153 = vector.shape_cast %152 : vector<16x8xf32> to vector<2x8x8xf32>
    %154 = tpu.concatenate %147, %149, %151, %153 in 0 : vector<2x8x8xf32>, vector<2x8x8xf32>, vector<2x8x8xf32>, vector<2x8x8xf32> -> vector<8x8x8xf32>
    %155 = vector.extract_strided_slice %145 {offsets = [0, 32], sizes = [16, 8], strides = [1, 1]} : vector<16x96xf32> to vector<16x8xf32>
    %156 = vector.shape_cast %155 : vector<16x8xf32> to vector<2x8x8xf32>
    %157 = vector.extract_strided_slice %145 {offsets = [0, 40], sizes = [16, 8], strides = [1, 1]} : vector<16x96xf32> to vector<16x8xf32>
    %158 = vector.shape_cast %157 : vector<16x8xf32> to vector<2x8x8xf32>
    %159 = vector.extract_strided_slice %145 {offsets = [0, 48], sizes = [16, 8], strides = [1, 1]} : vector<16x96xf32> to vector<16x8xf32>
    %160 = vector.shape_cast %159 : vector<16x8xf32> to vector<2x8x8xf32>
    %161 = vector.extract_strided_slice %145 {offsets = [0, 56], sizes = [16, 8], strides = [1, 1]} : vector<16x96xf32> to vector<16x8xf32>
    %162 = vector.shape_cast %161 : vector<16x8xf32> to vector<2x8x8xf32>
    %163 = tpu.concatenate %156, %158, %160, %162 in 0 : vector<2x8x8xf32>, vector<2x8x8xf32>, vector<2x8x8xf32>, vector<2x8x8xf32> -> vector<8x8x8xf32>
    %164 = vector.extract_strided_slice %145 {offsets = [0, 64], sizes = [16, 8], strides = [1, 1]} : vector<16x96xf32> to vector<16x8xf32>
    %165 = vector.shape_cast %164 : vector<16x8xf32> to vector<2x8x8xf32>
    %166 = vector.extract_strided_slice %145 {offsets = [0, 72], sizes = [16, 8], strides = [1, 1]} : vector<16x96xf32> to vector<16x8xf32>
    %167 = vector.shape_cast %166 : vector<16x8xf32> to vector<2x8x8xf32>
    %168 = vector.extract_strided_slice %145 {offsets = [0, 80], sizes = [16, 8], strides = [1, 1]} : vector<16x96xf32> to vector<16x8xf32>
    %169 = vector.shape_cast %168 : vector<16x8xf32> to vector<2x8x8xf32>
    %170 = vector.extract_strided_slice %145 {offsets = [0, 88], sizes = [16, 8], strides = [1, 1]} : vector<16x96xf32> to vector<16x8xf32>
    %171 = vector.shape_cast %170 : vector<16x8xf32> to vector<2x8x8xf32>
    %172 = tpu.concatenate %165, %167, %169, %171 in 0 : vector<2x8x8xf32>, vector<2x8x8xf32>, vector<2x8x8xf32>, vector<2x8x8xf32> -> vector<8x8x8xf32>
    "tpu.trace_start"() <{level = 10 : i32, message = "xtd,xsd->xts"}> : () -> ()
    %cst_41 = arith.constant dense<0.000000e+00> : vector<8x8x8xf32>
    %173 = tpu.matmul %154, %163, %cst_41 {dimension_numbers = #tpu.dot_dimension_numbers<[2], [2], [1], [1], [0, 0, 0, 1, 1, 1], [0], [0]>} : vector<8x8x8xf32>, vector<8x8x8xf32>, vector<8x8x8xf32> -> vector<8x8x8xf32>
    "tpu.trace_stop"() : () -> ()
    %cst_42 = arith.constant 0.353553385 : f32
    %174 = vector.broadcast %cst_42 : f32 to vector<8x8x8xf32>
    %175 = arith.mulf %173, %174 : vector<8x8x8xf32>
    %cst_43 = arith.constant dense<0xFF800000> : vector<8x8xf32>
    %176 = vector.multi_reduction <maximumf>, %175, %cst_43 [2] : vector<8x8x8xf32> to vector<8x8xf32>
    %177 = vector.shape_cast %176 : vector<8x8xf32> to vector<8x8x1xf32>
    %178 = vector.broadcast %177 : vector<8x8x1xf32> to vector<8x8x8xf32>
    %179 = arith.subf %175, %178 : vector<8x8x8xf32>
    %180 = math.exp %179 : vector<8x8x8xf32>
    %cst_44 = arith.constant dense<0.000000e+00> : vector<8x8xf32>
    %181 = vector.multi_reduction <add>, %180, %cst_44 [2] : vector<8x8x8xf32> to vector<8x8xf32>
    %182 = vector.shape_cast %181 : vector<8x8xf32> to vector<8x8x1xf32>
    %183 = tpu.reciprocal %182 {approx = true} : vector<8x8x1xf32> -> vector<8x8x1xf32>
    %184 = vector.broadcast %183 : vector<8x8x1xf32> to vector<8x8x8xf32>
    %185 = arith.mulf %180, %184 : vector<8x8x8xf32>
    "tpu.trace_start"() <{level = 10 : i32, message = "xts,xsd->xtd"}> : () -> ()
    %cst_45 = arith.constant dense<0.000000e+00> : vector<8x8x8xf32>
    %186 = tpu.matmul %185, %172, %cst_45 {dimension_numbers = #tpu.dot_dimension_numbers<[2], [1], [1], [2], [0, 0, 0, 1, 1, 2], [0], [0]>} : vector<8x8x8xf32>, vector<8x8x8xf32>, vector<8x8x8xf32> -> vector<8x8x8xf32>
    "tpu.trace_stop"() : () -> ()
    %187 = vector.extract_strided_slice %186 {offsets = [0, 0, 0], sizes = [2, 8, 8], strides = [1, 1, 1]} : vector<8x8x8xf32> to vector<2x8x8xf32>
    %188 = vector.shape_cast %187 : vector<2x8x8xf32> to vector<16x8xf32>
    %189 = vector.extract_strided_slice %186 {offsets = [2, 0, 0], sizes = [2, 8, 8], strides = [1, 1, 1]} : vector<8x8x8xf32> to vector<2x8x8xf32>
    %190 = vector.shape_cast %189 : vector<2x8x8xf32> to vector<16x8xf32>
    %191 = vector.extract_strided_slice %186 {offsets = [4, 0, 0], sizes = [2, 8, 8], strides = [1, 1, 1]} : vector<8x8x8xf32> to vector<2x8x8xf32>
    %192 = vector.shape_cast %191 : vector<2x8x8xf32> to vector<16x8xf32>
    %193 = vector.extract_strided_slice %186 {offsets = [6, 0, 0], sizes = [2, 8, 8], strides = [1, 1, 1]} : vector<8x8x8xf32> to vector<2x8x8xf32>
    %194 = vector.shape_cast %193 : vector<2x8x8xf32> to vector<16x8xf32>
    %195 = tpu.concatenate %188, %190, %192, %194 in 1 : vector<16x8xf32>, vector<16x8xf32>, vector<16x8xf32>, vector<16x8xf32> -> vector<16x32xf32>
    %196 = arith.truncf %195 : vector<16x32xf32> to vector<16x32xbf16>
    %c48_46 = arith.constant 48 : index
    %c96_47 = arith.constant 96 : index
    %197 = vector.load %arg2[%c48_46, %c96_47] : memref<304x128xbf16, #tpu.memory_space<vmem>>, vector<32x32xbf16>
    %cst_48 = arith.constant dense<0.000000e+00> : vector<16x32xf32>
    %198 = tpu.matmul %196, %197, %cst_48 {dimension_numbers = #tpu.dot_dimension_numbers<[1], [0], [0], [1], [0, 0, 1, 1], [], []>} : vector<16x32xbf16>, vector<32x32xbf16>, vector<16x32xf32> -> vector<16x32xf32>
    %c11 = arith.constant 11 : index
    %c0_49 = arith.constant 0 : index
    %199 = vector.load %arg3[%c11, %c0_49] : memref<24x128xf32, #tpu.memory_space<vmem>>, vector<1x32xf32>
    %200 = vector.broadcast %199 : vector<1x32xf32> to vector<16x32xf32>
    %201 = arith.addf %198, %200 : vector<16x32xf32>
    %202 = arith.addf %139, %201 : vector<16x32xf32>
    %c12 = arith.constant 12 : index
    %c0_50 = arith.constant 0 : index
    %203 = vector.load %arg3[%c12, %c0_50] : memref<24x128xf32, #tpu.memory_space<vmem>>, vector<1x32xf32>
    %c13 = arith.constant 13 : index
    %c0_51 = arith.constant 0 : index
    %204 = vector.load %arg3[%c13, %c0_51] : memref<24x128xf32, #tpu.memory_space<vmem>>, vector<1x32xf32>
    %cst_52 = arith.constant dense<0.000000e+00> : vector<16xf32>
    %205 = vector.multi_reduction <add>, %202, %cst_52 [1] : vector<16x32xf32> to vector<16xf32>
    %206 = vector.shape_cast %205 : vector<16xf32> to vector<16x1xf32>
    %cst_53 = arith.constant 3.200000e+01 : f32
    %207 = vector.broadcast %cst_53 : f32 to vector<16x1xf32>
    %208 = arith.divf %206, %207 : vector<16x1xf32>
    %209 = arith.mulf %202, %202 : vector<16x32xf32>
    %cst_54 = arith.constant dense<0.000000e+00> : vector<16xf32>
    %210 = vector.multi_reduction <add>, %209, %cst_54 [1] : vector<16x32xf32> to vector<16xf32>
    %211 = vector.shape_cast %210 : vector<16xf32> to vector<16x1xf32>
    %cst_55 = arith.constant 3.200000e+01 : f32
    %212 = vector.broadcast %cst_55 : f32 to vector<16x1xf32>
    %213 = arith.divf %211, %212 : vector<16x1xf32>
    %214 = arith.mulf %208, %208 : vector<16x1xf32>
    %215 = arith.subf %213, %214 : vector<16x1xf32>
    %216 = vector.broadcast %208 : vector<16x1xf32> to vector<16x32xf32>
    %217 = arith.subf %202, %216 : vector<16x32xf32>
    %cst_56 = arith.constant 9.99999974E-6 : f32
    %218 = vector.broadcast %cst_56 : f32 to vector<16x1xf32>
    %219 = arith.addf %215, %218 : vector<16x1xf32>
    %220 = math.rsqrt %219 : vector<16x1xf32>
    %221 = vector.broadcast %220 : vector<16x1xf32> to vector<16x32xf32>
    %222 = arith.mulf %217, %221 : vector<16x32xf32>
    %223 = vector.broadcast %203 : vector<1x32xf32> to vector<16x32xf32>
    %224 = arith.mulf %222, %223 : vector<16x32xf32>
    %225 = vector.broadcast %204 : vector<1x32xf32> to vector<16x32xf32>
    %226 = arith.addf %224, %225 : vector<16x32xf32>
    %227 = arith.truncf %226 : vector<16x32xf32> to vector<16x32xbf16>
    %c112 = arith.constant 112 : index
    %c0_57 = arith.constant 0 : index
    %228 = vector.load %arg2[%c112, %c0_57] : memref<304x128xbf16, #tpu.memory_space<vmem>>, vector<32x128xbf16>
    %cst_58 = arith.constant dense<0.000000e+00> : vector<16x128xf32>
    %229 = tpu.matmul %227, %228, %cst_58 {dimension_numbers = #tpu.dot_dimension_numbers<[1], [0], [0], [1], [0, 0, 1, 1], [], []>} : vector<16x32xbf16>, vector<32x128xbf16>, vector<16x128xf32> -> vector<16x128xf32>
    %c14 = arith.constant 14 : index
    %c0_59 = arith.constant 0 : index
    %230 = vector.load %arg3[%c14, %c0_59] : memref<24x128xf32, #tpu.memory_space<vmem>>, vector<1x128xf32>
    %231 = vector.broadcast %230 : vector<1x128xf32> to vector<16x128xf32>
    %232 = arith.addf %229, %231 : vector<16x128xf32>
    %cst_60 = arith.constant 0.000000e+00 : f32
    %233 = vector.broadcast %cst_60 : f32 to vector<16x128xf32>
    %234 = arith.maximumf %232, %233 : vector<16x128xf32>
    %235 = arith.truncf %234 : vector<16x128xf32> to vector<16x128xbf16>
    %c176_61 = arith.constant 176 : index
    %c32_62 = arith.constant 32 : index
    %236 = vector.load %arg2[%c176_61, %c32_62] : memref<304x128xbf16, #tpu.memory_space<vmem>>, vector<128x32xbf16>
    %cst_63 = arith.constant dense<0.000000e+00> : vector<16x32xf32>
    %237 = tpu.matmul %235, %236, %cst_63 {dimension_numbers = #tpu.dot_dimension_numbers<[1], [0], [0], [1], [0, 0, 1, 1], [], []>} : vector<16x128xbf16>, vector<128x32xbf16>, vector<16x32xf32> -> vector<16x32xf32>
    %c15 = arith.constant 15 : index
    %c0_64 = arith.constant 0 : index
    %238 = vector.load %arg3[%c15, %c0_64] : memref<24x128xf32, #tpu.memory_space<vmem>>, vector<1x32xf32>
    %239 = vector.broadcast %238 : vector<1x32xf32> to vector<16x32xf32>
    %240 = arith.addf %237, %239 : vector<16x32xf32>
    %241 = arith.addf %226, %240 : vector<16x32xf32>
    %c16_65 = arith.constant 16 : index
    %c0_66 = arith.constant 0 : index
    %242 = vector.load %arg3[%c16_65, %c0_66] : memref<24x128xf32, #tpu.memory_space<vmem>>, vector<1x32xf32>
    %c17 = arith.constant 17 : index
    %c0_67 = arith.constant 0 : index
    %243 = vector.load %arg3[%c17, %c0_67] : memref<24x128xf32, #tpu.memory_space<vmem>>, vector<1x32xf32>
    %cst_68 = arith.constant dense<0.000000e+00> : vector<16xf32>
    %244 = vector.multi_reduction <add>, %241, %cst_68 [1] : vector<16x32xf32> to vector<16xf32>
    %245 = vector.shape_cast %244 : vector<16xf32> to vector<16x1xf32>
    %cst_69 = arith.constant 3.200000e+01 : f32
    %246 = vector.broadcast %cst_69 : f32 to vector<16x1xf32>
    %247 = arith.divf %245, %246 : vector<16x1xf32>
    %248 = arith.mulf %241, %241 : vector<16x32xf32>
    %cst_70 = arith.constant dense<0.000000e+00> : vector<16xf32>
    %249 = vector.multi_reduction <add>, %248, %cst_70 [1] : vector<16x32xf32> to vector<16xf32>
    %250 = vector.shape_cast %249 : vector<16xf32> to vector<16x1xf32>
    %cst_71 = arith.constant 3.200000e+01 : f32
    %251 = vector.broadcast %cst_71 : f32 to vector<16x1xf32>
    %252 = arith.divf %250, %251 : vector<16x1xf32>
    %253 = arith.mulf %247, %247 : vector<16x1xf32>
    %254 = arith.subf %252, %253 : vector<16x1xf32>
    %255 = vector.broadcast %247 : vector<16x1xf32> to vector<16x32xf32>
    %256 = arith.subf %241, %255 : vector<16x32xf32>
    %cst_72 = arith.constant 9.99999974E-6 : f32
    %257 = vector.broadcast %cst_72 : f32 to vector<16x1xf32>
    %258 = arith.addf %254, %257 : vector<16x1xf32>
    %259 = math.rsqrt %258 : vector<16x1xf32>
    %260 = vector.broadcast %259 : vector<16x1xf32> to vector<16x32xf32>
    %261 = arith.mulf %256, %260 : vector<16x32xf32>
    %262 = vector.broadcast %242 : vector<1x32xf32> to vector<16x32xf32>
    %263 = arith.mulf %261, %262 : vector<16x32xf32>
    %264 = vector.broadcast %243 : vector<1x32xf32> to vector<16x32xf32>
    %265 = arith.addf %263, %264 : vector<16x32xf32>
    %266 = vector.shape_cast %265 : vector<16x32xf32> to vector<2x8x32xf32>
    %cst_73 = arith.constant dense<0.000000e+00> : vector<2x32xf32>
    %267 = vector.multi_reduction <add>, %266, %cst_73 [1] : vector<2x8x32xf32> to vector<2x32xf32>
    %cst_74 = arith.constant 8.000000e+00 : f32
    %268 = vector.broadcast %cst_74 : f32 to vector<2x32xf32>
    %269 = arith.divf %267, %268 : vector<2x32xf32>
    %cst_75 = arith.constant 0.000000e+00 : f32
    %270 = vector.broadcast %cst_75 : f32 to vector<6x32xf32>
    %271 = tpu.concatenate %269, %270 in 0 : vector<2x32xf32>, vector<6x32xf32> -> vector<8x32xf32>
    %272 = arith.truncf %271 : vector<8x32xf32> to vector<8x32xbf16>
    %c144 = arith.constant 144 : index
    %c0_76 = arith.constant 0 : index
    %273 = vector.load %arg2[%c144, %c0_76] : memref<304x128xbf16, #tpu.memory_space<vmem>>, vector<32x128xbf16>
    %cst_77 = arith.constant dense<0.000000e+00> : vector<8x128xf32>
    %274 = tpu.matmul %272, %273, %cst_77 {dimension_numbers = #tpu.dot_dimension_numbers<[1], [0], [0], [1], [0, 0, 1, 1], [], []>} : vector<8x32xbf16>, vector<32x128xbf16>, vector<8x128xf32> -> vector<8x128xf32>
    %c1 = arith.constant 1 : index
    %c0_78 = arith.constant 0 : index
    %275 = vector.load %arg3[%c1, %c0_78] : memref<24x128xf32, #tpu.memory_space<vmem>>, vector<1x128xf32>
    %276 = vector.broadcast %275 : vector<1x128xf32> to vector<8x128xf32>
    %277 = arith.addf %274, %276 : vector<8x128xf32>
    %c0_79 = arith.constant 0 : index
    %c0_80 = arith.constant 0 : index
    %278 = vector.load %arg4[%c0_79, %c0_80] : memref<8x128xf32, #tpu.memory_space<vmem>>, vector<8x128xf32>
    tpu.vector_store %arg4[%c0_79, %c0_80], %277 {strides = array<i32>} : memref<8x128xf32, #tpu.memory_space<vmem>>, vector<8x128xf32>,
    return
  }
  func.func @transform_0(%arg0: i32) -> (i32, i32) {
    %c0_i32 = arith.constant 0 : i32
    %c0_i32_0 = arith.constant 0 : i32
    %c0_i32_1 = arith.constant 0 : i32
    return %c0_i32, %c0_i32_0 : i32, i32
  }
  func.func @transform_1(%arg0: i32) -> (i32, i32) {
    %c0_i32 = arith.constant 0 : i32
    %c0_i32_0 = arith.constant 0 : i32
    %c0_i32_1 = arith.constant 0 : i32
    return %c0_i32, %c0_i32_0 : i32, i32
  }
  func.func @transform_2(%arg0: i32) -> (i32, i32) {
    %c0_i32 = arith.constant 0 : i32
    %c0_i32_0 = arith.constant 0 : i32
    %c0_i32_1 = arith.constant 0 : i32
    return %c0_i32, %c0_i32_0 : i32, i32
  }
  func.func @transform_3(%arg0: i32) -> (i32, i32) {
    %c0_i32 = arith.constant 0 : i32
    %c0_i32_0 = arith.constant 0 : i32
    %c0_i32_1 = arith.constant 0 : i32
    return %c0_i32, %c0_i32_0 : i32, i32
  }
}

</mosaic_0001>

<llo_original>
// kernel: imu_transformer_forward.1
$region0: #{imu_transformer_forward.1}
  #allocation0 [shape = 'u32[]', space=smem, size = 0x4, offset = 0x4, fixed_abs, tag = 'smem constant byte address 0x4 - core index']
  #allocation1 [shape = 'u32[144,128]{1,0:T(1,128)}', space=vmem, size = 0x12000, scoped, tag = 'internal scratch']
  %s0 = inlined_call_operand.vmem [shape: f32[16,8], index: 0, kind: input, shape index: {}]
  %s1 = inlined_call_operand.hbm [shape: bf16[304,128], index: 1, kind: input, shape index: {}]
  %s2 = inlined_call_operand.vmem [shape: f32[24,128], index: 2, kind: input, shape index: {}]
  %s3 = inlined_call_operand.vmem [shape: f32[8,128], index: 3, kind: output, shape index: {}]
  %s4 = sld [smem:[#allocation0]]
  $region26: #{imu_transformer_forward.1} parent=0
    _
  %s6 = ssub.s32 1, %s4
  %s7 = scalar_select 0, %s6, %s4
  $region1: #{imu_transformer_forward.1} parent=0
    #allocation2 [shape = 'u8[77824]{0}', space=vmem, size = 0x13000, scoped, tag = 'input window, operand 1, single buffered']
    #allocation3 [shape = 's32[1]{0}', space=sflag, size = 0x4, scoped, tag = 'scoped memory for imu_transformer_forward.1']
    %8 = vsyncpa [#allocation3], 0
    // Predicated region
    $region2: #{imu_transformer_forward.1} parent=1 // pred_check
      _
    $region3: #{imu_transformer_forward.1} parent=1 // pred_check_branch
      %10 = sbr.rel (0) target = $region5
    $region4: #{imu_transformer_forward.1} parent=1 // pred_region
      _
    $region5: #{imu_transformer_forward.1} parent=1 // pred_fallthru
      _
    // Predicated region
    $region6: #{imu_transformer_forward.1} parent=1 // pred_check
      _
    $region7: #{imu_transformer_forward.1} parent=1 // pred_check_branch
      %12 = sbr.rel (0) target = $region9
    $region8: #{imu_transformer_forward.1} parent=1 // pred_region
      %s14 = ssub.s32 2432, 2432
      %15 = vsyncadd [#allocation3], %s14
      %s16 = sshll.u32 [#allocation2], 4
      %s17 = int_to_ptr.vmem [resolvable:$true] %s16
      %22 = dma.hbm_to_vmem [thread:$0]  %s1, 2432, %s17, [#allocation3], 64, 64, 4
    $region9: #{imu_transformer_forward.1} parent=1 // pred_fallthru
      _
    // Predicated region
    $region10: #{imu_transformer_forward.1} parent=1 // pred_check
      _
    $region11: #{imu_transformer_forward.1} parent=1 // pred_check_branch
      %24 = sbr.rel (0) target = $region13
    $region12: #{imu_transformer_forward.1} parent=1 // pred_region
      _
    $region13: #{imu_transformer_forward.1} parent=1 // pred_fallthru
      _
    // Predicated region
    $region14: #{imu_transformer_forward.1} parent=1 // pred_check
      _
    $region15: #{imu_transformer_forward.1} parent=1 // pred_check_branch
      %26 = sbr.rel (0) target = $region17
    $region16: #{imu_transformer_forward.1} parent=1 // pred_region
      %27 = dma.done [#allocation3], 2432
    $region17: #{imu_transformer_forward.1} parent=1 // pred_fallthru
      _
    %v29 = vld [vmem:[%s0] sm:$0xff]
    %v30 = vld [vmem:[%s0 + $0x8] sm:$0xff]
    %v31 = vpack.c.bf16 %v30, %v29
    %v32 = vld [vmem:[#allocation2] sm:$0xf]
    %v33 = vld [vmem:[%s2] sm:$0x1]
    %v34 = vlaneseq
    %v35 = vshrl.u32 %v34, 7
    %v36 = vsub.s32 0, %v35
    %v37 = vrot.slane %v33, %v36
    %vm38 = vcmask 64512
    %v40 = vsel %vm38, %v31, 0
    %vm42 = vcmask 1043456
    %v44 = vsel %vm42, %v32, 0
    %46 = vmatprep.subr.bf16.mxu0 0
    %47 = vmatpush1.bf16.msra.mxu0 %v44
    %48 = vmatprep.subr.bf16.mxu0 0
    %49 = vmatpush1.bf16.msra.mxu0 0
    %50 = vmatprep.subr.bf16.mxu0 0
    %51 = vmatpush1.bf16.msra.mxu0 0
    %52 = vmatprep.subr.bf16.mxu0 0
    %53 = vmatpush1.bf16.msra.mxu0 0
    %54 = vmatprep.subr.bf16.mxu0 0
    %55 = vmatpush1.bf16.msra.mxu0 0
    %56 = vmatprep.subr.bf16.mxu0 0
    %57 = vmatpush1.bf16.msra.mxu0 0
    %58 = vmatprep.subr.bf16.mxu0 0
    %59 = vmatpush1.bf16.msra.mxu0 0
    %60 = vmatprep.subr.bf16.mxu0 0
    %61 = vmatpush1.bf16.msra.mxu0 0
    %62 = vmatprep.subr.bf16.mxu0 0
    %63 = vmatpush1.bf16.msra.mxu0 0
    %64 = vmatprep.subr.bf16.mxu0 0
    %65 = vmatpush1.bf16.msra.mxu0 0
    %66 = vmatprep.subr.bf16.mxu0 0
    %67 = vmatpush1.bf16.msra.mxu0 0
    %68 = vmatprep.subr.bf16.mxu0 0
    %69 = vmatpush1.bf16.msra.mxu0 0
    %70 = vmatprep.subr.bf16.mxu0 0
    %71 = vmatpush1.bf16.msra.mxu0 0
    %72 = vmatprep.subr.bf16.mxu0 0
    %73 = vmatpush1.bf16.msra.mxu0 0
    %74 = vmatprep.subr.bf16.mxu0 0
    %75 = vmatpush1.bf16.msra.mxu0 0
    %76 = vmatprep.subr.bf16.mxu0 0
    %77 = vmatpush1.bf16.msra.mxu0 0
    %78 = vmatprep.mubr.bf16.mxu0 0
    %79 = vmatmul.mubr.bf16.gmra.mrb[0].mxu0 %v40
    %v80 = vpop.f32.mrb[0].mxu0
    %v81 = vadd.f32 %v37, %v80
    %v82 = vpop.f32.mrb[0].mxu0
    %v83 = vpop.f32.mrb[0].mxu0
    %v84 = vadd.f32 %v37, %v83
    %v85 = vpop.f32.mrb[0].mxu0
    %86 = vdwg.mxu0
    %v87 = vunpack.c.l.bf16 %v32
    %89 = vrot.lane.b32.xlu0 %v87, 96
    %v90 = vpop.permute.xlu0 %89
    %v92 = vadd.f32 %v81, %v90
    %v93 = vadd.f32 %v84, %v90
    %v94 = vpack.c.bf16 %v93, %v92
    %v95 = vld [vmem:[#allocation2 + $0x8] sm:$0xf]
    %v96 = vld [vmem:[#allocation2 + $0xc] sm:$0xf]
    %v97 = vld [vmem:[#allocation2 + $0x10] sm:$0xf]
    %v98 = vld [vmem:[#allocation2 + $0x14] sm:$0xf]
    %v99 = vld [vmem:[%s2 + $0x2] sm:$0x1]
    %v100 = vlaneseq
    %v101 = vshrl.u32 %v100, 7
    %v102 = vsub.s32 0, %v101
    %v103 = vrot.slane %v99, %v102
    %v108 = vunpack.c.l.b16 %v95
    %v109 = vunpack.c.l.b16 %v96
    %v110 = vunpack.c.l.b16 %v97
    %v111 = vunpack.c.l.b16 %v98
    %v112 = vpack.c.b16 %v109, %v108
    %v113 = vpack.c.b16 %v111, %v110
    %vm116 = vcmask 261120
    %v118 = vsel %vm116, %v94, 0
    %120 = vmatprep.subr.bf16.mxu0 0
    %121 = vmatpush1.bf16.msra.mxu0 %v112
    %122 = vmatprep.subr.bf16.mxu0 0
    %123 = vmatpush1.bf16.msra.mxu0 %v113
    %124 = vmatprep.subr.bf16.mxu0 0
    %125 = vmatpush1.bf16.msra.mxu0 0
    %126 = vmatprep.subr.bf16.mxu0 0
    %127 = vmatpush1.bf16.msra.mxu0 0
    %128 = vmatprep.subr.bf16.mxu0 0
    %129 = vmatpush1.bf16.msra.mxu0 0
    %130 = vmatprep.subr.bf16.mxu0 0
    %131 = vmatpush1.bf16.msra.mxu0 0
    %132 = vmatprep.subr.bf16.mxu0 0
    %133 = vmatpush1.bf16.msra.mxu0 0
    %134 = vmatprep.subr.bf16.mxu0 0
    %135 = vmatpush1.bf16.msra.mxu0 0
    %136 = vmatprep.subr.bf16.mxu0 0
    %137 = vmatpush1.bf16.msra.mxu0 0
    %138 = vmatprep.subr.bf16.mxu0 0
    %139 = vmatpush1.bf16.msra.mxu0 0
    %140 = vmatprep.subr.bf16.mxu0 0
    %141 = vmatpush1.bf16.msra.mxu0 0
    %142 = vmatprep.subr.bf16.mxu0 0
    %143 = vmatpush1.bf16.msra.mxu0 0
    %144 = vmatprep.subr.bf16.mxu0 0
    %145 = vmatpush1.bf16.msra.mxu0 0
    %146 = vmatprep.subr.bf16.mxu0 0
    %147 = vmatpush1.bf16.msra.mxu0 0
    %148 = vmatprep.subr.bf16.mxu0 0
    %149 = vmatpush1.bf16.msra.mxu0 0
    %150 = vmatprep.subr.bf16.mxu0 0
    %151 = vmatpush1.bf16.msra.mxu0 0
    %152 = vmatprep.mubr.bf16.mxu0 0
    %153 = vmatmul.mubr.bf16.gmra.mrb[0].mxu0 %v118
    %v154 = vpop.f32.mrb[0].mxu0
    %v155 = vadd.f32 %v103, %v154
    %v156 = vpop.f32.mrb[0].mxu0
    %v157 = vpop.f32.mrb[0].mxu0
    %v158 = vadd.f32 %v103, %v157
    %v159 = vpop.f32.mrb[0].mxu0
    %160 = vdwg.mxu0
    %163 = vrot.lane.b32.xlu0 %v155, 120
    %v164 = vpop.permute.xlu0 %163
    %165 = vrot.lane.b32.xlu0 %v158, 120
    %v166 = vpop.permute.xlu0 %165
    %167 = vrot.lane.b32.xlu0 %v155, 112
    %v168 = vpop.permute.xlu0 %167
    %169 = vrot.lane.b32.xlu0 %v158, 112
    %v170 = vpop.permute.xlu0 %169
    %171 = vrot.lane.b32.xlu0 %v155, 104
    %v172 = vpop.permute.xlu0 %171
    %173 = vrot.lane.b32.xlu0 %v158, 104
    %v174 = vpop.permute.xlu0 %173
    %175 = vrot.lane.b32.xlu0 %v155, 96
    %v176 = vpop.permute.xlu0 %175
    %v177 = vsel %vm38, %v155, 0
    %v179 = vsel %vm38, %v176, 0
    %181 = vmatprep.subr.mxu0 0.0
    %182 = vmatpush1.xpose.msra.mxu0 %v179
    %183 = vmatprep.subr.mxu0 0.0
    %184 = vmatpush1.xpose.msra.mxu0 0.0
    %185 = vmatprep.subr.mxu0 0.0
    %186 = vmatpush1.xpose.msra.mxu0 0.0
    %187 = vmatprep.subr.mxu0 0.0
    %188 = vmatpush1.xpose.msra.mxu0 0.0
    %189 = vmatprep.subr.mxu0 0.0
    %190 = vmatpush1.xpose.msra.mxu0 0.0
    %191 = vmatprep.subr.mxu0 0.0
    %192 = vmatpush1.xpose.msra.mxu0 0.0
    %193 = vmatprep.subr.mxu0 0.0
    %194 = vmatpush1.xpose.msra.mxu0 0.0
    %195 = vmatprep.subr.mxu0 0.0
    %196 = vmatpush1.xpose.msra.mxu0 0.0
    %197 = vmatprep.subr.mxu0 0.0
    %198 = vmatpush1.xpose.msra.mxu0 0.0
    %199 = vmatprep.subr.mxu0 0.0
    %200 = vmatpush1.xpose.msra.mxu0 0.0
    %201 = vmatprep.subr.mxu0 0.0
    %202 = vmatpush1.xpose.msra.mxu0 0.0
    %203 = vmatprep.subr.mxu0 0.0
    %204 = vmatpush1.xpose.msra.mxu0 0.0
    %205 = vmatprep.subr.mxu0 0.0
    %206 = vmatpush1.xpose.msra.mxu0 0.0
    %207 = vmatprep.subr.mxu0 0.0
    %208 = vmatpush1.xpose.msra.mxu0 0.0
    %209 = vmatprep.subr.mxu0 0.0
    %210 = vmatpush1.xpose.msra.mxu0 0.0
    %211 = vmatprep.subr.mxu0 0.0
    %212 = vmatpush1.xpose.msra.mxu0 0.0
    %213 = vmatprep.subr.mxu0 0.0
    %214 = vmatpush1.xpose.msra.mxu0 0.0
    %215 = vmatprep.subr.mxu0 0.0
    %216 = vmatpush1.xpose.msra.mxu0 0.0
    %217 = vmatprep.subr.mxu0 0.0
    %218 = vmatpush1.xpose.msra.mxu0 0.0
    %219 = vmatprep.subr.mxu0 0.0
    %220 = vmatpush1.xpose.msra.mxu0 0.0
    %221 = vmatprep.subr.mxu0 0.0
    %222 = vmatpush1.xpose.msra.mxu0 0.0
    %223 = vmatprep.subr.mxu0 0.0
    %224 = vmatpush1.xpose.msra.mxu0 0.0
    %225 = vmatprep.subr.mxu0 0.0
    %226 = vmatpush1.xpose.msra.mxu0 0.0
    %227 = vmatprep.subr.mxu0 0.0
    %228 = vmatpush1.xpose.msra.mxu0 0.0
    %229 = vmatprep.subr.mxu0 0.0
    %230 = vmatpush1.xpose.msra.mxu0 0.0
    %231 = vmatprep.subr.mxu0 0.0
    %232 = vmatpush1.xpose.msra.mxu0 0.0
    %233 = vmatprep.subr.mxu0 0.0
    %234 = vmatpush1.xpose.msra.mxu0 0.0
    %235 = vmatprep.subr.mxu0 0.0
    %236 = vmatpush1.xpose.msra.mxu0 0.0
    %237 = vmatprep.subr.mxu0 0.0
    %238 = vmatpush1.xpose.msra.mxu0 0.0
    %239 = vmatprep.subr.mxu0 0.0
    %240 = vmatpush1.xpose.msra.mxu0 0.0
    %241 = vmatprep.subr.mxu0 0.0
    %242 = vmatpush1.xpose.msra.mxu0 0.0
    %243 = vmatprep.subr.mxu0 0.0
    %244 = vmatpush1.xpose.msra.mxu0 0.0
    %245 = vmatprep.mubr.f32.mxu0 0.0
    %246 = vmatmul.mubr.f32.gmra.mrb[0].mxu0 %v177
    %v247 = vpop.f32.mrb[0].mxu0
    %v248 = vadd.f32 0.0, %v247
    %v249 = vpop.f32.mrb[0].mxu0
    %250 = vdwg.mxu0
    %251 = vrot.lane.b32.xlu0 %v158, 96
    %v252 = vpop.permute.xlu0 %251
    %v253 = vsel %vm38, %v158, 0
    %v255 = vsel %vm38, %v252, 0
    %257 = vmatprep.subr.mxu0 0.0
    %258 = vmatpush1.xpose.msra.mxu0 %v255
    %259 = vmatprep.subr.mxu0 0.0
    %260 = vmatpush1.xpose.msra.mxu0 0.0
    %261 = vmatprep.subr.mxu0 0.0
    %262 = vmatpush1.xpose.msra.mxu0 0.0
    %263 = vmatprep.subr.mxu0 0.0
    %264 = vmatpush1.xpose.msra.mxu0 0.0
    %265 = vmatprep.subr.mxu0 0.0
    %266 = vmatpush1.xpose.msra.mxu0 0.0
    %267 = vmatprep.subr.mxu0 0.0
    %268 = vmatpush1.xpose.msra.mxu0 0.0
    %269 = vmatprep.subr.mxu0 0.0
    %270 = vmatpush1.xpose.msra.mxu0 0.0
    %271 = vmatprep.subr.mxu0 0.0
    %272 = vmatpush1.xpose.msra.mxu0 0.0
    %273 = vmatprep.subr.mxu0 0.0
    %274 = vmatpush1.xpose.msra.mxu0 0.0
    %275 = vmatprep.subr.mxu0 0.0
    %276 = vmatpush1.xpose.msra.mxu0 0.0
    %277 = vmatprep.subr.mxu0 0.0
    %278 = vmatpush1.xpose.msra.mxu0 0.0
    %279 = vmatprep.subr.mxu0 0.0
    %280 = vmatpush1.xpose.msra.mxu0 0.0
    %281 = vmatprep.subr.mxu0 0.0
    %282 = vmatpush1.xpose.msra.mxu0 0.0
    %283 = vmatprep.subr.mxu0 0.0
    %284 = vmatpush1.xpose.msra.mxu0 0.0
    %285 = vmatprep.subr.mxu0 0.0
    %286 = vmatpush1.xpose.msra.mxu0 0.0
    %287 = vmatprep.subr.mxu0 0.0
    %288 = vmatpush1.xpose.msra.mxu0 0.0
    %289 = vmatprep.subr.mxu0 0.0
    %290 = vmatpush1.xpose.msra.mxu0 0.0
    %291 = vmatprep.subr.mxu0 0.0
    %292 = vmatpush1.xpose.msra.mxu0 0.0
    %293 = vmatprep.subr.mxu0 0.0
    %294 = vmatpush1.xpose.msra.mxu0 0.0
    %295 = vmatprep.subr.mxu0 0.0
    %296 = vmatpush1.xpose.msra.mxu0 0.0
    %297 = vmatprep.subr.mxu0 0.0
    %298 = vmatpush1.xpose.msra.mxu0 0.0
    %299 = vmatprep.subr.mxu0 0.0
    %300 = vmatpush1.xpose.msra.mxu0 0.0
    %301 = vmatprep.subr.mxu0 0.0
    %302 = vmatpush1.xpose.msra.mxu0 0.0
    %303 = vmatprep.subr.mxu0 0.0
    %304 = vmatpush1.xpose.msra.mxu0 0.0
    %305 = vmatprep.subr.mxu0 0.0
    %306 = vmatpush1.xpose.msra.mxu0 0.0
    %307 = vmatprep.subr.mxu0 0.0
    %308 = vmatpush1.xpose.msra.mxu0 0.0
    %309 = vmatprep.subr.mxu0 0.0
    %310 = vmatpush1.xpose.msra.mxu0 0.0
    %311 = vmatprep.subr.mxu0 0.0
    %312 = vmatpush1.xpose.msra.mxu0 0.0
    %313 = vmatprep.subr.mxu0 0.0
    %314 = vmatpush1.xpose.msra.mxu0 0.0
    %315 = vmatprep.subr.mxu0 0.0
    %316 = vmatpush1.xpose.msra.mxu0 0.0
    %317 = vmatprep.subr.mxu0 0.0
    %318 = vmatpush1.xpose.msra.mxu0 0.0
    %319 = vmatprep.subr.mxu0 0.0
    %320 = vmatpush1.xpose.msra.mxu0 0.0
    %321 = vmatprep.mubr.f32.mxu0 0.0
    %322 = vmatmul.mubr.f32.gmra.mrb[0].mxu0 %v253
    %v323 = vpop.f32.mrb[0].mxu0
    %v324 = vadd.f32 0.0, %v323
    %v325 = vpop.f32.mrb[0].mxu0
    %326 = vdwg.mxu0
    %327 = vrot.lane.b32.xlu0 %v164, 96
    %v328 = vpop.permute.xlu0 %327
    %v329 = vsel %vm38, %v164, 0
    %v331 = vsel %vm38, %v328, 0
    %333 = vmatprep.subr.mxu0 0.0
    %334 = vmatpush1.xpose.msra.mxu0 %v331
    %335 = vmatprep.subr.mxu0 0.0
    %336 = vmatpush1.xpose.msra.mxu0 0.0
    %337 = vmatprep.subr.mxu0 0.0
    %338 = vmatpush1.xpose.msra.mxu0 0.0
    %339 = vmatprep.subr.mxu0 0.0
    %340 = vmatpush1.xpose.msra.mxu0 0.0
    %341 = vmatprep.subr.mxu0 0.0
    %342 = vmatpush1.xpose.msra.mxu0 0.0
    %343 = vmatprep.subr.mxu0 0.0
    %344 = vmatpush1.xpose.msra.mxu0 0.0
    %345 = vmatprep.subr.mxu0 0.0
    %346 = vmatpush1.xpose.msra.mxu0 0.0
    %347 = vmatprep.subr.mxu0 0.0
    %348 = vmatpush1.xpose.msra.mxu0 0.0
    %349 = vmatprep.subr.mxu0 0.0
    %350 = vmatpush1.xpose.msra.mxu0 0.0
    %351 = vmatprep.subr.mxu0 0.0
    %352 = vmatpush1.xpose.msra.mxu0 0.0
    %353 = vmatprep.subr.mxu0 0.0
    %354 = vmatpush1.xpose.msra.mxu0 0.0
    %355 = vmatprep.subr.mxu0 0.0
    %356 = vmatpush1.xpose.msra.mxu0 0.0
    %357 = vmatprep.subr.mxu0 0.0
    %358 = vmatpush1.xpose.msra.mxu0 0.0
    %359 = vmatprep.subr.mxu0 0.0
    %360 = vmatpush1.xpose.msra.mxu0 0.0
    %361 = vmatprep.subr.mxu0 0.0
    %362 = vmatpush1.xpose.msra.mxu0 0.0
    %363 = vmatprep.subr.mxu0 0.0
    %364 = vmatpush1.xpose.msra.mxu0 0.0
    %365 = vmatprep.subr.mxu0 0.0
    %366 = vmatpush1.xpose.msra.mxu0 0.0
    %367 = vmatprep.subr.mxu0 0.0
    %368 = vmatpush1.xpose.msra.mxu0 0.0
    %369 = vmatprep.subr.mxu0 0.0
    %370 = vmatpush1.xpose.msra.mxu0 0.0
    %371 = vmatprep.subr.mxu0 0.0
    %372 = vmatpush1.xpose.msra.mxu0 0.0
    %373 = vmatprep.subr.mxu0 0.0
    %374 = vmatpush1.xpose.msra.mxu0 0.0
    %375 = vmatprep.subr.mxu0 0.0
    %376 = vmatpush1.xpose.msra.mxu0 0.0
    %377 = vmatprep.subr.mxu0 0.0
    %378 = vmatpush1.xpose.msra.mxu0 0.0
    %379 = vmatprep.subr.mxu0 0.0
    %380 = vmatpush1.xpose.msra.mxu0 0.0
    %381 = vmatprep.subr.mxu0 0.0
    %382 = vmatpush1.xpose.msra.mxu0 0.0
    %383 = vmatprep.subr.mxu0 0.0
    %384 = vmatpush1.xpose.msra.mxu0 0.0
    %385 = vmatprep.subr.mxu0 0.0
    %386 = vmatpush1.xpose.msra.mxu0 0.0
    %387 = vmatprep.subr.mxu0 0.0
    %388 = vmatpush1.xpose.msra.mxu0 0.0
    %389 = vmatprep.subr.mxu0 0.0
    %390 = vmatpush1.xpose.msra.mxu0 0.0
    %391 = vmatprep.subr.mxu0 0.0
    %392 = vmatpush1.xpose.msra.mxu0 0.0
    %393 = vmatprep.subr.mxu0 0.0
    %394 = vmatpush1.xpose.msra.mxu0 0.0
    %395 = vmatprep.subr.mxu0 0.0
    %396 = vmatpush1.xpose.msra.mxu0 0.0
    %397 = vmatprep.mubr.f32.mxu0 0.0
    %398 = vmatmul.mubr.f32.gmra.mrb[0].mxu0 %v329
    %v399 = vpop.f32.mrb[0].mxu0
    %v400 = vadd.f32 0.0, %v399
    %v401 = vpop.f32.mrb[0].mxu0
    %402 = vdwg.mxu0
    %403 = vrot.lane.b32.xlu0 %v166, 96
    %v404 = vpop.permute.xlu0 %403
    %v405 = vsel %vm38, %v166, 0
    %v407 = vsel %vm38, %v404, 0
    %409 = vmatprep.subr.mxu0 0.0
    %410 = vmatpush1.xpose.msra.mxu0 %v407
    %411 = vmatprep.subr.mxu0 0.0
    %412 = vmatpush1.xpose.msra.mxu0 0.0
    %413 = vmatprep.subr.mxu0 0.0
    %414 = vmatpush1.xpose.msra.mxu0 0.0
    %415 = vmatprep.subr.mxu0 0.0
    %416 = vmatpush1.xpose.msra.mxu0 0.0
    %417 = vmatprep.subr.mxu0 0.0
    %418 = vmatpush1.xpose.msra.mxu0 0.0
    %419 = vmatprep.subr.mxu0 0.0
    %420 = vmatpush1.xpose.msra.mxu0 0.0
    %421 = vmatprep.subr.mxu0 0.0
    %422 = vmatpush1.xpose.msra.mxu0 0.0
    %423 = vmatprep.subr.mxu0 0.0
    %424 = vmatpush1.xpose.msra.mxu0 0.0
    %425 = vmatprep.subr.mxu0 0.0
    %426 = vmatpush1.xpose.msra.mxu0 0.0
    %427 = vmatprep.subr.mxu0 0.0
    %428 = vmatpush1.xpose.msra.mxu0 0.0
    %429 = vmatprep.subr.mxu0 0.0
    %430 = vmatpush1.xpose.msra.mxu0 0.0
    %431 = vmatprep.subr.mxu0 0.0
    %432 = vmatpush1.xpose.msra.mxu0 0.0
    %433 = vmatprep.subr.mxu0 0.0
    %434 = vmatpush1.xpose.msra.mxu0 0.0
    %435 = vmatprep.subr.mxu0 0.0
    %436 = vmatpush1.xpose.msra.mxu0 0.0
    %437 = vmatprep.subr.mxu0 0.0
    %438 = vmatpush1.xpose.msra.mxu0 0.0
    %439 = vmatprep.subr.mxu0 0.0
    %440 = vmatpush1.xpose.msra.mxu0 0.0
    %441 = vmatprep.subr.mxu0 0.0
    %442 = vmatpush1.xpose.msra.mxu0 0.0
    %443 = vmatprep.subr.mxu0 0.0
    %444 = vmatpush1.xpose.msra.mxu0 0.0
    %445 = vmatprep.subr.mxu0 0.0
    %446 = vmatpush1.xpose.msra.mxu0 0.0
    %447 = vmatprep.subr.mxu0 0.0
    %448 = vmatpush1.xpose.msra.mxu0 0.0
    %449 = vmatprep.subr.mxu0 0.0
    %450 = vmatpush1.xpose.msra.mxu0 0.0
    %451 = vmatprep.subr.mxu0 0.0
    %452 = vmatpush1.xpose.msra.mxu0 0.0
    %453 = vmatprep.subr.mxu0 0.0
    %454 = vmatpush1.xpose.msra.mxu0 0.0
    %455 = vmatprep.subr.mxu0 0.0
    %456 = vmatpush1.xpose.msra.mxu0 0.0
    %457 = vmatprep.subr.mxu0 0.0
    %458 = vmatpush1.xpose.msra.mxu0 0.0
    %459 = vmatprep.subr.mxu0 0.0
    %460 = vmatpush1.xpose.msra.mxu0 0.0
    %461 = vmatprep.subr.mxu0 0.0
    %462 = vmatpush1.xpose.msra.mxu0 0.0
    %463 = vmatprep.subr.mxu0 0.0
    %464 = vmatpush1.xpose.msra.mxu0 0.0
    %465 = vmatprep.subr.mxu0 0.0
    %466 = vmatpush1.xpose.msra.mxu0 0.0
    %467 = vmatprep.subr.mxu0 0.0
    %468 = vmatpush1.xpose.msra.mxu0 0.0
    %469 = vmatprep.subr.mxu0 0.0
    %470 = vmatpush1.xpose.msra.mxu0 0.0
    %471 = vmatprep.subr.mxu0 0.0
    %472 = vmatpush1.xpose.msra.mxu0 0.0
    %473 = vmatprep.mubr.f32.mxu0 0.0
    %474 = vmatmul.mubr.f32.gmra.mrb[0].mxu0 %v405
    %v475 = vpop.f32.mrb[0].mxu0
    %v476 = vadd.f32 0.0, %v475
    %v477 = vpop.f32.mrb[0].mxu0
    %478 = vdwg.mxu0
    %479 = vrot.lane.b32.xlu0 %v168, 96
    %v480 = vpop.permute.xlu0 %479
    %v481 = vsel %vm38, %v168, 0
    %v483 = vsel %vm38, %v480, 0
    %485 = vmatprep.subr.mxu0 0.0
    %486 = vmatpush1.xpose.msra.mxu0 %v483
    %487 = vmatprep.subr.mxu0 0.0
    %488 = vmatpush1.xpose.msra.mxu0 0.0
    %489 = vmatprep.subr.mxu0 0.0
    %490 = vmatpush1.xpose.msra.mxu0 0.0
    %491 = vmatprep.subr.mxu0 0.0
    %492 = vmatpush1.xpose.msra.mxu0 0.0
    %493 = vmatprep.subr.mxu0 0.0
    %494 = vmatpush1.xpose.msra.mxu0 0.0
    %495 = vmatprep.subr.mxu0 0.0
    %496 = vmatpush1.xpose.msra.mxu0 0.0
    %497 = vmatprep.subr.mxu0 0.0
    %498 = vmatpush1.xpose.msra.mxu0 0.0
    %499 = vmatprep.subr.mxu0 0.0
    %500 = vmatpush1.xpose.msra.mxu0 0.0
    %501 = vmatprep.subr.mxu0 0.0
    %502 = vmatpush1.xpose.msra.mxu0 0.0
    %503 = vmatprep.subr.mxu0 0.0
    %504 = vmatpush1.xpose.msra.mxu0 0.0
    %505 = vmatprep.subr.mxu0 0.0
    %506 = vmatpush1.xpose.msra.mxu0 0.0
    %507 = vmatprep.subr.mxu0 0.0
    %508 = vmatpush1.xpose.msra.mxu0 0.0
    %509 = vmatprep.subr.mxu0 0.0
    %510 = vmatpush1.xpose.msra.mxu0 0.0
    %511 = vmatprep.subr.mxu0 0.0
    %512 = vmatpush1.xpose.msra.mxu0 0.0
    %513 = vmatprep.subr.mxu0 0.0
    %514 = vmatpush1.xpose.msra.mxu0 0.0
    %515 = vmatprep.subr.mxu0 0.0
    %516 = vmatpush1.xpose.msra.mxu0 0.0
    %517 = vmatprep.subr.mxu0 0.0
    %518 = vmatpush1.xpose.msra.mxu0 0.0
    %519 = vmatprep.subr.mxu0 0.0
    %520 = vmatpush1.xpose.msra.mxu0 0.0
    %521 = vmatprep.subr.mxu0 0.0
    %522 = vmatpush1.xpose.msra.mxu0 0.0
    %523 = vmatprep.subr.mxu0 0.0
    %524 = vmatpush1.xpose.msra.mxu0 0.0
    %525 = vmatprep.subr.mxu0 0.0
    %526 = vmatpush1.xpose.msra.mxu0 0.0
    %527 = vmatprep.subr.mxu0 0.0
    %528 = vmatpush1.xpose.msra.mxu0 0.0
    %529 = vmatprep.subr.mxu0 0.0
    %530 = vmatpush1.xpose.msra.mxu0 0.0
    %531 = vmatprep.subr.mxu0 0.0
    %532 = vmatpush1.xpose.msra.mxu0 0.0
    %533 = vmatprep.subr.mxu0 0.0
    %534 = vmatpush1.xpose.msra.mxu0 0.0
    %535 = vmatprep.subr.mxu0 0.0
    %536 = vmatpush1.xpose.msra.mxu0 0.0
    %537 = vmatprep.subr.mxu0 0.0
    %538 = vmatpush1.xpose.msra.mxu0 0.0
    %539 = vmatprep.subr.mxu0 0.0
    %540 = vmatpush1.xpose.msra.mxu0 0.0
    %541 = vmatprep.subr.mxu0 0.0
    %542 = vmatpush1.xpose.msra.mxu0 0.0
    %543 = vmatprep.subr.mxu0 0.0
    %544 = vmatpush1.xpose.msra.mxu0 0.0
    %545 = vmatprep.subr.mxu0 0.0
    %546 = vmatpush1.xpose.msra.mxu0 0.0
    %547 = vmatprep.subr.mxu0 0.0
    %548 = vmatpush1.xpose.msra.mxu0 0.0
    %549 = vmatprep.mubr.f32.mxu0 0.0
    %550 = vmatmul.mubr.f32.gmra.mrb[0].mxu0 %v481
    %v551 = vpop.f32.mrb[0].mxu0
    %v552 = vadd.f32 0.0, %v551
    %v553 = vpop.f32.mrb[0].mxu0
    %554 = vdwg.mxu0
    %555 = vrot.lane.b32.xlu0 %v170, 96
    %v556 = vpop.permute.xlu0 %555
    %v557 = vsel %vm38, %v170, 0
    %v559 = vsel %vm38, %v556, 0
    %561 = vmatprep.subr.mxu0 0.0
    %562 = vmatpush1.xpose.msra.mxu0 %v559
    %563 = vmatprep.subr.mxu0 0.0
    %564 = vmatpush1.xpose.msra.mxu0 0.0
    %565 = vmatprep.subr.mxu0 0.0
    %566 = vmatpush1.xpose.msra.mxu0 0.0
    %567 = vmatprep.subr.mxu0 0.0
    %568 = vmatpush1.xpose.msra.mxu0 0.0
    %569 = vmatprep.subr.mxu0 0.0
    %570 = vmatpush1.xpose.msra.mxu0 0.0
    %571 = vmatprep.subr.mxu0 0.0
    %572 = vmatpush1.xpose.msra.mxu0 0.0
    %573 = vmatprep.subr.mxu0 0.0
    %574 = vmatpush1.xpose.msra.mxu0 0.0
    %575 = vmatprep.subr.mxu0 0.0
    %576 = vmatpush1.xpose.msra.mxu0 0.0
    %577 = vmatprep.subr.mxu0 0.0
    %578 = vmatpush1.xpose.msra.mxu0 0.0
    %579 = vmatprep.subr.mxu0 0.0
    %580 = vmatpush1.xpose.msra.mxu0 0.0
    %581 = vmatprep.subr.mxu0 0.0
    %582 = vmatpush1.xpose.msra.mxu0 0.0
    %583 = vmatprep.subr.mxu0 0.0
    %584 = vmatpush1.xpose.msra.mxu0 0.0
    %585 = vmatprep.subr.mxu0 0.0
    %586 = vmatpush1.xpose.msra.mxu0 0.0
    %587 = vmatprep.subr.mxu0 0.0
    %588 = vmatpush1.xpose.msra.mxu0 0.0
    %589 = vmatprep.subr.mxu0 0.0
    %590 = vmatpush1.xpose.msra.mxu0 0.0
    %591 = vmatprep.subr.mxu0 0.0
    %592 = vmatpush1.xpose.msra.mxu0 0.0
    %593 = vmatprep.subr.mxu0 0.0
    %594 = vmatpush1.xpose.msra.mxu0 0.0
    %595 = vmatprep.subr.mxu0 0.0
    %596 = vmatpush1.xpose.msra.mxu0 0.0
    %597 = vmatprep.subr.mxu0 0.0
    %598 = vmatpush1.xpose.msra.mxu0 0.0
    %599 = vmatprep.subr.mxu0 0.0
    %600 = vmatpush1.xpose.msra.mxu0 0.0
    %601 = vmatprep.subr.mxu0 0.0
    %602 = vmatpush1.xpose.msra.mxu0 0.0
    %603 = vmatprep.subr.mxu0 0.0
    %604 = vmatpush1.xpose.msra.mxu0 0.0
    %605 = vmatprep.subr.mxu0 0.0
    %606 = vmatpush1.xpose.msra.mxu0 0.0
    %607 = vmatprep.subr.mxu0 0.0
    %608 = vmatpush1.xpose.msra.mxu0 0.0
    %609 = vmatprep.subr.mxu0 0.0
    %610 = vmatpush1.xpose.msra.mxu0 0.0
    %611 = vmatprep.subr.mxu0 0.0
    %612 = vmatpush1.xpose.msra.mxu0 0.0
    %613 = vmatprep.subr.mxu0 0.0
    %614 = vmatpush1.xpose.msra.mxu0 0.0
    %615 = vmatprep.subr.mxu0 0.0
    %616 = vmatpush1.xpose.msra.mxu0 0.0
    %617 = vmatprep.subr.mxu0 0.0
    %618 = vmatpush1.xpose.msra.mxu0 0.0
    %619 = vmatprep.subr.mxu0 0.0
    %620 = vmatpush1.xpose.msra.mxu0 0.0
    %621 = vmatprep.subr.mxu0 0.0
    %622 = vmatpush1.xpose.msra.mxu0 0.0
    %623 = vmatprep.subr.mxu0 0.0
    %624 = vmatpush1.xpose.msra.mxu0 0.0
    %625 = vmatprep.mubr.f32.mxu0 0.0
    %626 = vmatmul.mubr.f32.gmra.mrb[0].mxu0 %v557
    %v627 = vpop.f32.mrb[0].mxu0
    %v628 = vadd.f32 0.0, %v627
    %v629 = vpop.f32.mrb[0].mxu0
    %630 = vdwg.mxu0
    %631 = vrot.lane.b32.xlu0 %v172, 96
    %v632 = vpop.permute.xlu0 %631
    %v633 = vsel %vm38, %v172, 0
    %v635 = vsel %vm38, %v632, 0
    %637 = vmatprep.subr.mxu0 0.0
    %638 = vmatpush1.xpose.msra.mxu0 %v635
    %639 = vmatprep.subr.mxu0 0.0
    %640 = vmatpush1.xpose.msra.mxu0 0.0
    %641 = vmatprep.subr.mxu0 0.0
    %642 = vmatpush1.xpose.msra.mxu0 0.0
    %643 = vmatprep.subr.mxu0 0.0
    %644 = vmatpush1.xpose.msra.mxu0 0.0
    %645 = vmatprep.subr.mxu0 0.0
    %646 = vmatpush1.xpose.msra.mxu0 0.0
    %647 = vmatprep.subr.mxu0 0.0
    %648 = vmatpush1.xpose.msra.mxu0 0.0
    %649 = vmatprep.subr.mxu0 0.0
    %650 = vmatpush1.xpose.msra.mxu0 0.0
    %651 = vmatprep.subr.mxu0 0.0
    %652 = vmatpush1.xpose.msra.mxu0 0.0
    %653 = vmatprep.subr.mxu0 0.0
    %654 = vmatpush1.xpose.msra.mxu0 0.0
    %655 = vmatprep.subr.mxu0 0.0
    %656 = vmatpush1.xpose.msra.mxu0 0.0
    %657 = vmatprep.subr.mxu0 0.0
    %658 = vmatpush1.xpose.msra.mxu0 0.0
    %659 = vmatprep.subr.mxu0 0.0
    %660 = vmatpush1.xpose.msra.mxu0 0.0
    %661 = vmatprep.subr.mxu0 0.0
    %662 = vmatpush1.xpose.msra.mxu0 0.0
    %663 = vmatprep.subr.mxu0 0.0
    %664 = vmatpush1.xpose.msra.mxu0 0.0
    %665 = vmatprep.subr.mxu0 0.0
    %666 = vmatpush1.xpose.msra.mxu0 0.0
    %667 = vmatprep.subr.mxu0 0.0
    %668 = vmatpush1.xpose.msra.mxu0 0.0
    %669 = vmatprep.subr.mxu0 0.0
    %670 = vmatpush1.xpose.msra.mxu0 0.0
    %671 = vmatprep.subr.mxu0 0.0
    %672 = vmatpush1.xpose.msra.mxu0 0.0
    %673 = vmatprep.subr.mxu0 0.0
    %674 = vmatpush1.xpose.msra.mxu0 0.0
    %675 = vmatprep.subr.mxu0 0.0
    %676 = vmatpush1.xpose.msra.mxu0 0.0
    %677 = vmatprep.subr.mxu0 0.0
    %678 = vmatpush1.xpose.msra.mxu0 0.0
    %679 = vmatprep.subr.mxu0 0.0
    %680 = vmatpush1.xpose.msra.mxu0 0.0
    %681 = vmatprep.subr.mxu0 0.0
    %682 = vmatpush1.xpose.msra.mxu0 0.0
    %683 = vmatprep.subr.mxu0 0.0
    %684 = vmatpush1.xpose.msra.mxu0 0.0
    %685 = vmatprep.subr.mxu0 0.0
    %686 = vmatpush1.xpose.msra.mxu0 0.0
    %687 = vmatprep.subr.mxu0 0.0
    %688 = vmatpush1.xpose.msra.mxu0 0.0
    %689 = vmatprep.subr.mxu0 0.0
    %690 = vmatpush1.xpose.msra.mxu0 0.0
    %691 = vmatprep.subr.mxu0 0.0
    %692 = vmatpush1.xpose.msra.mxu0 0.0
    %693 = vmatprep.subr.mxu0 0.0
    %694 = vmatpush1.xpose.msra.mxu0 0.0
    %695 = vmatprep.subr.mxu0 0.0
    %696 = vmatpush1.xpose.msra.mxu0 0.0
    %697 = vmatprep.subr.mxu0 0.0
    %698 = vmatpush1.xpose.msra.mxu0 0.0
    %699 = vmatprep.subr.mxu0 0.0
    %700 = vmatpush1.xpose.msra.mxu0 0.0
    %701 = vmatprep.mubr.f32.mxu0 0.0
    %702 = vmatmul.mubr.f32.gmra.mrb[0].mxu0 %v633
    %v703 = vpop.f32.mrb[0].mxu0
    %v704 = vadd.f32 0.0, %v703
    %v705 = vpop.f32.mrb[0].mxu0
    %706 = vdwg.mxu0
    %707 = vrot.lane.b32.xlu0 %v174, 96
    %v708 = vpop.permute.xlu0 %707
    %v709 = vsel %vm38, %v174, 0
    %v711 = vsel %vm38, %v708, 0
    %713 = vmatprep.subr.mxu0 0.0
    %714 = vmatpush1.xpose.msra.mxu0 %v711
    %715 = vmatprep.subr.mxu0 0.0
    %716 = vmatpush1.xpose.msra.mxu0 0.0
    %717 = vmatprep.subr.mxu0 0.0
    %718 = vmatpush1.xpose.msra.mxu0 0.0
    %719 = vmatprep.subr.mxu0 0.0
    %720 = vmatpush1.xpose.msra.mxu0 0.0
    %721 = vmatprep.subr.mxu0 0.0
    %722 = vmatpush1.xpose.msra.mxu0 0.0
    %723 = vmatprep.subr.mxu0 0.0
    %724 = vmatpush1.xpose.msra.mxu0 0.0
    %725 = vmatprep.subr.mxu0 0.0
    %726 = vmatpush1.xpose.msra.mxu0 0.0
    %727 = vmatprep.subr.mxu0 0.0
    %728 = vmatpush1.xpose.msra.mxu0 0.0
    %729 = vmatprep.subr.mxu0 0.0
    %730 = vmatpush1.xpose.msra.mxu0 0.0
    %731 = vmatprep.subr.mxu0 0.0
    %732 = vmatpush1.xpose.msra.mxu0 0.0
    %733 = vmatprep.subr.mxu0 0.0
    %734 = vmatpush1.xpose.msra.mxu0 0.0
    %735 = vmatprep.subr.mxu0 0.0
    %736 = vmatpush1.xpose.msra.mxu0 0.0
    %737 = vmatprep.subr.mxu0 0.0
    %738 = vmatpush1.xpose.msra.mxu0 0.0
    %739 = vmatprep.subr.mxu0 0.0
    %740 = vmatpush1.xpose.msra.mxu0 0.0
    %741 = vmatprep.subr.mxu0 0.0
    %742 = vmatpush1.xpose.msra.mxu0 0.0
    %743 = vmatprep.subr.mxu0 0.0
    %744 = vmatpush1.xpose.msra.mxu0 0.0
    %745 = vmatprep.subr.mxu0 0.0
    %746 = vmatpush1.xpose.msra.mxu0 0.0
    %747 = vmatprep.subr.mxu0 0.0
    %748 = vmatpush1.xpose.msra.mxu0 0.0
    %749 = vmatprep.subr.mxu0 0.0
    %750 = vmatpush1.xpose.msra.mxu0 0.0
    %751 = vmatprep.subr.mxu0 0.0
    %752 = vmatpush1.xpose.msra.mxu0 0.0
    %753 = vmatprep.subr.mxu0 0.0
    %754 = vmatpush1.xpose.msra.mxu0 0.0
    %755 = vmatprep.subr.mxu0 0.0
    %756 = vmatpush1.xpose.msra.mxu0 0.0
    %757 = vmatprep.subr.mxu0 0.0
    %758 = vmatpush1.xpose.msra.mxu0 0.0
    %759 = vmatprep.subr.mxu0 0.0
    %760 = vmatpush1.xpose.msra.mxu0 0.0
    %761 = vmatprep.subr.mxu0 0.0
    %762 = vmatpush1.xpose.msra.mxu0 0.0
    %763 = vmatprep.subr.mxu0 0.0
    %764 = vmatpush1.xpose.msra.mxu0 0.0
    %765 = vmatprep.subr.mxu0 0.0
    %766 = vmatpush1.xpose.msra.mxu0 0.0
    %767 = vmatprep.subr.mxu0 0.0
    %768 = vmatpush1.xpose.msra.mxu0 0.0
    %769 = vmatprep.subr.mxu0 0.0
    %770 = vmatpush1.xpose.msra.mxu0 0.0
    %771 = vmatprep.subr.mxu0 0.0
    %772 = vmatpush1.xpose.msra.mxu0 0.0
    %773 = vmatprep.subr.mxu0 0.0
    %774 = vmatpush1.xpose.msra.mxu0 0.0
    %775 = vmatprep.subr.mxu0 0.0
    %776 = vmatpush1.xpose.msra.mxu0 0.0
    %777 = vmatprep.mubr.f32.mxu0 0.0
    %778 = vmatmul.mubr.f32.gmra.mrb[0].mxu0 %v709
    %v779 = vpop.f32.mrb[0].mxu0
    %v780 = vadd.f32 0.0, %v779
    %v781 = vpop.f32.mrb[0].mxu0
    %782 = vdwg.mxu0
    %v783 = vmul.f32 %v248, 0.35355338
    %v784 = vmul.f32 %v324, 0.35355338
    %v785 = vmul.f32 %v400, 0.35355338
    %v786 = vmul.f32 %v476, 0.35355338
    %v787 = vmul.f32 %v552, 0.35355338
    %v788 = vmul.f32 %v628, 0.35355338
    %v789 = vmul.f32 %v704, 0.35355338
    %v790 = vmul.f32 %v780, 0.35355338
    %v791 = vsel %vm38, %v783, -inf
    %792 = vmax.xlane.f32.xlu0 %v791
    %v793 = vpop.xlane.xlu0 %792
    %v794 = vsel %vm38, %v784, -inf
    %795 = vmax.xlane.f32.xlu0 %v794
    %v796 = vpop.xlane.xlu0 %795
    %v797 = vsel %vm38, %v785, -inf
    %798 = vmax.xlane.f32.xlu0 %v797
    %v799 = vpop.xlane.xlu0 %798
    %v800 = vsel %vm38, %v786, -inf
    %801 = vmax.xlane.f32.xlu0 %v800
    %v802 = vpop.xlane.xlu0 %801
    %v803 = vsel %vm38, %v787, -inf
    %804 = vmax.xlane.f32.xlu0 %v803
    %v805 = vpop.xlane.xlu0 %804
    %v806 = vsel %vm38, %v788, -inf
    %807 = vmax.xlane.f32.xlu0 %v806
    %v808 = vpop.xlane.xlu0 %807
    %v809 = vsel %vm38, %v789, -inf
    %810 = vmax.xlane.f32.xlu0 %v809
    %v811 = vpop.xlane.xlu0 %810
    %v812 = vsel %vm38, %v790, -inf
    %813 = vmax.xlane.f32.xlu0 %v812
    %v814 = vpop.xlane.xlu0 %813
    %v815 = vsub.f32 %v783, %v793
    %v816 = vsub.f32 %v784, %v796
    %v817 = vsub.f32 %v785, %v799
    %v818 = vsub.f32 %v786, %v802
    %v819 = vsub.f32 %v787, %v805
    %v820 = vsub.f32 %v788, %v808
    %v821 = vsub.f32 %v789, %v811
    %v822 = vsub.f32 %v790, %v814
    %v823 = vmul.f32 %v815, 1.442695
    %v824 = vpow.pop %v823
    %v825 = vmul.f32 %v816, 1.442695
    %v826 = vpow.pop %v825
    %v827 = vmul.f32 %v817, 1.442695
    %v828 = vpow.pop %v827
    %v829 = vmul.f32 %v818, 1.442695
    %v830 = vpow.pop %v829
    %v831 = vmul.f32 %v819, 1.442695
    %v832 = vpow.pop %v831
    %v833 = vmul.f32 %v820, 1.442695
    %v834 = vpow.pop %v833
    %v835 = vmul.f32 %v821, 1.442695
    %v836 = vpow.pop %v835
    %v837 = vmul.f32 %v822, 1.442695
    %v838 = vpow.pop %v837
    %v839 = vsel %vm38, %v824, 0.0
    %840 = vadd.xlane.f32.xlu0 %v839
    %v841 = vpop.xlane.xlu0 %840
    %v842 = vsel %vm38, %v826, 0.0
    %843 = vadd.xlane.f32.xlu0 %v842
    %v844 = vpop.xlane.xlu0 %843
    %v845 = vsel %vm38, %v828, 0.0
    %846 = vadd.xlane.f32.xlu0 %v845
    %v847 = vpop.xlane.xlu0 %846
    %v848 = vsel %vm38, %v830, 0.0
    %849 = vadd.xlane.f32.xlu0 %v848
    %v850 = vpop.xlane.xlu0 %849
    %v851 = vsel %vm38, %v832, 0.0
    %852 = vadd.xlane.f32.xlu0 %v851
    %v853 = vpop.xlane.xlu0 %852
    %v854 = vsel %vm38, %v834, 0.0
    %855 = vadd.xlane.f32.xlu0 %v854
    %v856 = vpop.xlane.xlu0 %855
    %v857 = vsel %vm38, %v836, 0.0
    %858 = vadd.xlane.f32.xlu0 %v857
    %v859 = vpop.xlane.xlu0 %858
    %v860 = vsel %vm38, %v838, 0.0
    %861 = vadd.xlane.f32.xlu0 %v860
    %v862 = vpop.xlane.xlu0 %861
    %v863 = vrcp.pop %v841
    %v864 = vrcp.pop %v844
    %v865 = vrcp.pop %v847
    %v866 = vrcp.pop %v850
    %v867 = vrcp.pop %v853
    %v868 = vrcp.pop %v856
    %v869 = vrcp.pop %v859
    %v870 = vrcp.pop %v862
    %v871 = vmul.f32 %v824, %v863
    %v872 = vmul.f32 %v826, %v864
    %v873 = vmul.f32 %v828, %v865
    %v874 = vmul.f32 %v830, %v866
    %v875 = vmul.f32 %v832, %v867
    %v876 = vmul.f32 %v834, %v868
    %v877 = vmul.f32 %v836, %v869
    %v878 = vmul.f32 %v838, %v870
    %879 = vrot.lane.b32.xlu0 %v155, 64
    %v880 = vpop.permute.xlu0 %879
    %v883 = vsel %vm38, %v871, 0
    %885 = vmatprep.subr.mxu0 0.0
    %886 = vmatpush1.msra.mxu0 %v880
    %887 = vmatprep.subr.mxu0 0.0
    %888 = vmatpush1.msra.mxu0 0.0
    %889 = vmatprep.subr.mxu0 0.0
    %890 = vmatpush1.msra.mxu0 0.0
    %891 = vmatprep.subr.mxu0 0.0
    %892 = vmatpush1.msra.mxu0 0.0
    %893 = vmatprep.subr.mxu0 0.0
    %894 = vmatpush1.msra.mxu0 0.0
    %895 = vmatprep.subr.mxu0 0.0
    %896 = vmatpush1.msra.mxu0 0.0
    %897 = vmatprep.subr.mxu0 0.0
    %898 = vmatpush1.msra.mxu0 0.0
    %899 = vmatprep.subr.mxu0 0.0
    %900 = vmatpush1.msra.mxu0 0.0
    %901 = vmatprep.subr.mxu0 0.0
    %902 = vmatpush1.msra.mxu0 0.0
    %903 = vmatprep.subr.mxu0 0.0
    %904 = vmatpush1.msra.mxu0 0.0
    %905 = vmatprep.subr.mxu0 0.0
    %906 = vmatpush1.msra.mxu0 0.0
    %907 = vmatprep.subr.mxu0 0.0
    %908 = vmatpush1.msra.mxu0 0.0
    %909 = vmatprep.subr.mxu0 0.0
    %910 = vmatpush1.msra.mxu0 0.0
    %911 = vmatprep.subr.mxu0 0.0
    %912 = vmatpush1.msra.mxu0 0.0
    %913 = vmatprep.subr.mxu0 0.0
    %914 = vmatpush1.msra.mxu0 0.0
    %915 = vmatprep.subr.mxu0 0.0
    %916 = vmatpush1.msra.mxu0 0.0
    %917 = vmatprep.subr.mxu0 0.0
    %918 = vmatpush1.msra.mxu0 0.0
    %919 = vmatprep.subr.mxu0 0.0
    %920 = vmatpush1.msra.mxu0 0.0
    %921 = vmatprep.subr.mxu0 0.0
    %922 = vmatpush1.msra.mxu0 0.0
    %923 = vmatprep.subr.mxu0 0.0
    %924 = vmatpush1.msra.mxu0 0.0
    %925 = vmatprep.subr.mxu0 0.0
    %926 = vmatpush1.msra.mxu0 0.0
    %927 = vmatprep.subr.mxu0 0.0
    %928 = vmatpush1.msra.mxu0 0.0
    %929 = vmatprep.subr.mxu0 0.0
    %930 = vmatpush1.msra.mxu0 0.0
    %931 = vmatprep.subr.mxu0 0.0
    %932 = vmatpush1.msra.mxu0 0.0
    %933 = vmatprep.subr.mxu0 0.0
    %934 = vmatpush1.msra.mxu0 0.0
    %935 = vmatprep.subr.mxu0 0.0
    %936 = vmatpush1.msra.mxu0 0.0
    %937 = vmatprep.subr.mxu0 0.0
    %938 = vmatpush1.msra.mxu0 0.0
    %939 = vmatprep.subr.mxu0 0.0
    %940 = vmatpush1.msra.mxu0 0.0
    %941 = vmatprep.subr.mxu0 0.0
    %942 = vmatpush1.msra.mxu0 0.0
    %943 = vmatprep.subr.mxu0 0.0
    %944 = vmatpush1.msra.mxu0 0.0
    %945 = vmatprep.subr.mxu0 0.0
    %946 = vmatpush1.msra.mxu0 0.0
    %947 = vmatprep.subr.mxu0 0.0
    %948 = vmatpush1.msra.mxu0 0.0
    %949 = vmatprep.mubr.f32.mxu0 0.0
    %950 = vmatmul.mubr.f32.gmra.mrb[0].mxu0 %v883
    %v951 = vpop.f32.mrb[0].mxu0
    %v952 = vadd.f32 0.0, %v951
    %v953 = vpop.f32.mrb[0].mxu0
    %954 = vdwg.mxu0
    %955 = vrot.lane.b32.xlu0 %v158, 64
    %v956 = vpop.permute.xlu0 %955
    %v959 = vsel %vm38, %v872, 0
    %961 = vmatprep.subr.mxu0 0.0
    %962 = vmatpush1.msra.mxu0 %v956
    %963 = vmatprep.subr.mxu0 0.0
    %964 = vmatpush1.msra.mxu0 0.0
    %965 = vmatprep.subr.mxu0 0.0
    %966 = vmatpush1.msra.mxu0 0.0
    %967 = vmatprep.subr.mxu0 0.0
    %968 = vmatpush1.msra.mxu0 0.0
    %969 = vmatprep.subr.mxu0 0.0
    %970 = vmatpush1.msra.mxu0 0.0
    %971 = vmatprep.subr.mxu0 0.0
    %972 = vmatpush1.msra.mxu0 0.0
    %973 = vmatprep.subr.mxu0 0.0
    %974 = vmatpush1.msra.mxu0 0.0
    %975 = vmatprep.subr.mxu0 0.0
    %976 = vmatpush1.msra.mxu0 0.0
    %977 = vmatprep.subr.mxu0 0.0
    %978 = vmatpush1.msra.mxu0 0.0
    %979 = vmatprep.subr.mxu0 0.0
    %980 = vmatpush1.msra.mxu0 0.0
    %981 = vmatprep.subr.mxu0 0.0
    %982 = vmatpush1.msra.mxu0 0.0
    %983 = vmatprep.subr.mxu0 0.0
    %984 = vmatpush1.msra.mxu0 0.0
    %985 = vmatprep.subr.mxu0 0.0
    %986 = vmatpush1.msra.mxu0 0.0
    %987 = vmatprep.subr.mxu0 0.0
    %988 = vmatpush1.msra.mxu0 0.0
    %989 = vmatprep.subr.mxu0 0.0
    %990 = vmatpush1.msra.mxu0 0.0
    %991 = vmatprep.subr.mxu0 0.0
    %992 = vmatpush1.msra.mxu0 0.0
    %993 = vmatprep.subr.mxu0 0.0
    %994 = vmatpush1.msra.mxu0 0.0
    %995 = vmatprep.subr.mxu0 0.0
    %996 = vmatpush1.msra.mxu0 0.0
    %997 = vmatprep.subr.mxu0 0.0
    %998 = vmatpush1.msra.mxu0 0.0
    %999 = vmatprep.subr.mxu0 0.0
    %1000 = vmatpush1.msra.mxu0 0.0
    %1001 = vmatprep.subr.mxu0 0.0
    %1002 = vmatpush1.msra.mxu0 0.0
    %1003 = vmatprep.subr.mxu0 0.0
    %1004 = vmatpush1.msra.mxu0 0.0
    %1005 = vmatprep.subr.mxu0 0.0
    %1006 = vmatpush1.msra.mxu0 0.0
    %1007 = vmatprep.subr.mxu0 0.0
    %1008 = vmatpush1.msra.mxu0 0.0
    %1009 = vmatprep.subr.mxu0 0.0
    %1010 = vmatpush1.msra.mxu0 0.0
    %1011 = vmatprep.subr.mxu0 0.0
    %1012 = vmatpush1.msra.mxu0 0.0
    %1013 = vmatprep.subr.mxu0 0.0
    %1014 = vmatpush1.msra.mxu0 0.0
    %1015 = vmatprep.subr.mxu0 0.0
    %1016 = vmatpush1.msra.mxu0 0.0
    %1017 = vmatprep.subr.mxu0 0.0
    %1018 = vmatpush1.msra.mxu0 0.0
    %1019 = vmatprep.subr.mxu0 0.0
    %1020 = vmatpush1.msra.mxu0 0.0
    %1021 = vmatprep.subr.mxu0 0.0
    %1022 = vmatpush1.msra.mxu0 0.0
    %1023 = vmatprep.subr.mxu0 0.0
    %1024 = vmatpush1.msra.mxu0 0.0
    %1025 = vmatprep.mubr.f32.mxu0 0.0
    %1026 = vmatmul.mubr.f32.gmra.mrb[0].mxu0 %v959
    %v1027 = vpop.f32.mrb[0].mxu0
    %v1028 = vadd.f32 0.0, %v1027
    %v1029 = vpop.f32.mrb[0].mxu0
    %1030 = vdwg.mxu0
    %1031 = vrot.lane.b32.xlu0 %v164, 64
    %v1032 = vpop.permute.xlu0 %1031
    %v1035 = vsel %vm38, %v873, 0
    %1037 = vmatprep.subr.mxu0 0.0
    %1038 = vmatpush1.msra.mxu0 %v1032
    %1039 = vmatprep.subr.mxu0 0.0
    %1040 = vmatpush1.msra.mxu0 0.0
    %1041 = vmatprep.subr.mxu0 0.0
    %1042 = vmatpush1.msra.mxu0 0.0
    %1043 = vmatprep.subr.mxu0 0.0
    %1044 = vmatpush1.msra.mxu0 0.0
    %1045 = vmatprep.subr.mxu0 0.0
    %1046 = vmatpush1.msra.mxu0 0.0
    %1047 = vmatprep.subr.mxu0 0.0
    %1048 = vmatpush1.msra.mxu0 0.0
    %1049 = vmatprep.subr.mxu0 0.0
    %1050 = vmatpush1.msra.mxu0 0.0
    %1051 = vmatprep.subr.mxu0 0.0
    %1052 = vmatpush1.msra.mxu0 0.0
    %1053 = vmatprep.subr.mxu0 0.0
    %1054 = vmatpush1.msra.mxu0 0.0
    %1055 = vmatprep.subr.mxu0 0.0
    %1056 = vmatpush1.msra.mxu0 0.0
    %1057 = vmatprep.subr.mxu0 0.0
    %1058 = vmatpush1.msra.mxu0 0.0
    %1059 = vmatprep.subr.mxu0 0.0
    %1060 = vmatpush1.msra.mxu0 0.0
    %1061 = vmatprep.subr.mxu0 0.0
    %1062 = vmatpush1.msra.mxu0 0.0
    %1063 = vmatprep.subr.mxu0 0.0
    %1064 = vmatpush1.msra.mxu0 0.0
    %1065 = vmatprep.subr.mxu0 0.0
    %1066 = vmatpush1.msra.mxu0 0.0
    %1067 = vmatprep.subr.mxu0 0.0
    %1068 = vmatpush1.msra.mxu0 0.0
    %1069 = vmatprep.subr.mxu0 0.0
    %1070 = vmatpush1.msra.mxu0 0.0
    %1071 = vmatprep.subr.mxu0 0.0
    %1072 = vmatpush1.msra.mxu0 0.0
    %1073 = vmatprep.subr.mxu0 0.0
    %1074 = vmatpush1.msra.mxu0 0.0
    %1075 = vmatprep.subr.mxu0 0.0
    %1076 = vmatpush1.msra.mxu0 0.0
    %1077 = vmatprep.subr.mxu0 0.0
    %1078 = vmatpush1.msra.mxu0 0.0
    %1079 = vmatprep.subr.mxu0 0.0
    %1080 = vmatpush1.msra.mxu0 0.0
    %1081 = vmatprep.subr.mxu0 0.0
    %1082 = vmatpush1.msra.mxu0 0.0
    %1083 = vmatprep.subr.mxu0 0.0
    %1084 = vmatpush1.msra.mxu0 0.0
    %1085 = vmatprep.subr.mxu0 0.0
    %1086 = vmatpush1.msra.mxu0 0.0
    %1087 = vmatprep.subr.mxu0 0.0
    %1088 = vmatpush1.msra.mxu0 0.0
    %1089 = vmatprep.subr.mxu0 0.0
    %1090 = vmatpush1.msra.mxu0 0.0
    %1091 = vmatprep.subr.mxu0 0.0
    %1092 = vmatpush1.msra.mxu0 0.0
    %1093 = vmatprep.subr.mxu0 0.0
    %1094 = vmatpush1.msra.mxu0 0.0
    %1095 = vmatprep.subr.mxu0 0.0
    %1096 = vmatpush1.msra.mxu0 0.0
    %1097 = vmatprep.subr.mxu0 0.0
    %1098 = vmatpush1.msra.mxu0 0.0
    %1099 = vmatprep.subr.mxu0 0.0
    %1100 = vmatpush1.msra.mxu0 0.0
    %1101 = vmatprep.mubr.f32.mxu0 0.0
    %1102 = vmatmul.mubr.f32.gmra.mrb[0].mxu0 %v1035
    %v1103 = vpop.f32.mrb[0].mxu0
    %v1104 = vadd.f32 0.0, %v1103
    %v1105 = vpop.f32.mrb[0].mxu0
    %1106 = vdwg.mxu0
    %1107 = vrot.lane.b32.xlu0 %v166, 64
    %v1108 = vpop.permute.xlu0 %1107
    %v1111 = vsel %vm38, %v874, 0
    %1113 = vmatprep.subr.mxu0 0.0
    %1114 = vmatpush1.msra.mxu0 %v1108
    %1115 = vmatprep.subr.mxu0 0.0
    %1116 = vmatpush1.msra.mxu0 0.0
    %1117 = vmatprep.subr.mxu0 0.0
    %1118 = vmatpush1.msra.mxu0 0.0
    %1119 = vmatprep.subr.mxu0 0.0
    %1120 = vmatpush1.msra.mxu0 0.0
    %1121 = vmatprep.subr.mxu0 0.0
    %1122 = vmatpush1.msra.mxu0 0.0
    %1123 = vmatprep.subr.mxu0 0.0
    %1124 = vmatpush1.msra.mxu0 0.0
    %1125 = vmatprep.subr.mxu0 0.0
    %1126 = vmatpush1.msra.mxu0 0.0
    %1127 = vmatprep.subr.mxu0 0.0
    %1128 = vmatpush1.msra.mxu0 0.0
    %1129 = vmatprep.subr.mxu0 0.0
    %1130 = vmatpush1.msra.mxu0 0.0
    %1131 = vmatprep.subr.mxu0 0.0
    %1132 = vmatpush1.msra.mxu0 0.0
    %1133 = vmatprep.subr.mxu0 0.0
    %1134 = vmatpush1.msra.mxu0 0.0
    %1135 = vmatprep.subr.mxu0 0.0
    %1136 = vmatpush1.msra.mxu0 0.0
    %1137 = vmatprep.subr.mxu0 0.0
    %1138 = vmatpush1.msra.mxu0 0.0
    %1139 = vmatprep.subr.mxu0 0.0
    %1140 = vmatpush1.msra.mxu0 0.0
    %1141 = vmatprep.subr.mxu0 0.0
    %1142 = vmatpush1.msra.mxu0 0.0
    %1143 = vmatprep.subr.mxu0 0.0
    %1144 = vmatpush1.msra.mxu0 0.0
    %1145 = vmatprep.subr.mxu0 0.0
    %1146 = vmatpush1.msra.mxu0 0.0
    %1147 = vmatprep.subr.mxu0 0.0
    %1148 = vmatpush1.msra.mxu0 0.0
    %1149 = vmatprep.subr.mxu0 0.0
    %1150 = vmatpush1.msra.mxu0 0.0
    %1151 = vmatprep.subr.mxu0 0.0
    %1152 = vmatpush1.msra.mxu0 0.0
    %1153 = vmatprep.subr.mxu0 0.0
    %1154 = vmatpush1.msra.mxu0 0.0
    %1155 = vmatprep.subr.mxu0 0.0
    %1156 = vmatpush1.msra.mxu0 0.0
    %1157 = vmatprep.subr.mxu0 0.0
    %1158 = vmatpush1.msra.mxu0 0.0
    %1159 = vmatprep.subr.mxu0 0.0
    %1160 = vmatpush1.msra.mxu0 0.0
    %1161 = vmatprep.subr.mxu0 0.0
    %1162 = vmatpush1.msra.mxu0 0.0
    %1163 = vmatprep.subr.mxu0 0.0
    %1164 = vmatpush1.msra.mxu0 0.0
    %1165 = vmatprep.subr.mxu0 0.0
    %1166 = vmatpush1.msra.mxu0 0.0
    %1167 = vmatprep.subr.mxu0 0.0
    %1168 = vmatpush1.msra.mxu0 0.0
    %1169 = vmatprep.subr.mxu0 0.0
    %1170 = vmatpush1.msra.mxu0 0.0
    %1171 = vmatprep.subr.mxu0 0.0
    %1172 = vmatpush1.msra.mxu0 0.0
    %1173 = vmatprep.subr.mxu0 0.0
    %1174 = vmatpush1.msra.mxu0 0.0
    %1175 = vmatprep.subr.mxu0 0.0
    %1176 = vmatpush1.msra.mxu0 0.0
    %1177 = vmatprep.mubr.f32.mxu0 0.0
    %1178 = vmatmul.mubr.f32.gmra.mrb[0].mxu0 %v1111
    %v1179 = vpop.f32.mrb[0].mxu0
    %v1180 = vadd.f32 0.0, %v1179
    %v1181 = vpop.f32.mrb[0].mxu0
    %1182 = vdwg.mxu0
    %1183 = vrot.lane.b32.xlu0 %v168, 64
    %v1184 = vpop.permute.xlu0 %1183
    %v1187 = vsel %vm38, %v875, 0
    %1189 = vmatprep.subr.mxu0 0.0
    %1190 = vmatpush1.msra.mxu0 %v1184
    %1191 = vmatprep.subr.mxu0 0.0
    %1192 = vmatpush1.msra.mxu0 0.0
    %1193 = vmatprep.subr.mxu0 0.0
    %1194 = vmatpush1.msra.mxu0 0.0
    %1195 = vmatprep.subr.mxu0 0.0
    %1196 = vmatpush1.msra.mxu0 0.0
    %1197 = vmatprep.subr.mxu0 0.0
    %1198 = vmatpush1.msra.mxu0 0.0
    %1199 = vmatprep.subr.mxu0 0.0
    %1200 = vmatpush1.msra.mxu0 0.0
    %1201 = vmatprep.subr.mxu0 0.0
    %1202 = vmatpush1.msra.mxu0 0.0
    %1203 = vmatprep.subr.mxu0 0.0
    %1204 = vmatpush1.msra.mxu0 0.0
    %1205 = vmatprep.subr.mxu0 0.0
    %1206 = vmatpush1.msra.mxu0 0.0
    %1207 = vmatprep.subr.mxu0 0.0
    %1208 = vmatpush1.msra.mxu0 0.0
    %1209 = vmatprep.subr.mxu0 0.0
    %1210 = vmatpush1.msra.mxu0 0.0
    %1211 = vmatprep.subr.mxu0 0.0
    %1212 = vmatpush1.msra.mxu0 0.0
    %1213 = vmatprep.subr.mxu0 0.0
    %1214 = vmatpush1.msra.mxu0 0.0
    %1215 = vmatprep.subr.mxu0 0.0
    %1216 = vmatpush1.msra.mxu0 0.0
    %1217 = vmatprep.subr.mxu0 0.0
    %1218 = vmatpush1.msra.mxu0 0.0
    %1219 = vmatprep.subr.mxu0 0.0
    %1220 = vmatpush1.msra.mxu0 0.0
    %1221 = vmatprep.subr.mxu0 0.0
    %1222 = vmatpush1.msra.mxu0 0.0
    %1223 = vmatprep.subr.mxu0 0.0
    %1224 = vmatpush1.msra.mxu0 0.0
    %1225 = vmatprep.subr.mxu0 0.0
    %1226 = vmatpush1.msra.mxu0 0.0
    %1227 = vmatprep.subr.mxu0 0.0
    %1228 = vmatpush1.msra.mxu0 0.0
    %1229 = vmatprep.subr.mxu0 0.0
    %1230 = vmatpush1.msra.mxu0 0.0
    %1231 = vmatprep.subr.mxu0 0.0
    %1232 = vmatpush1.msra.mxu0 0.0
    %1233 = vmatprep.subr.mxu0 0.0
    %1234 = vmatpush1.msra.mxu0 0.0
    %1235 = vmatprep.subr.mxu0 0.0
    %1236 = vmatpush1.msra.mxu0 0.0
    %1237 = vmatprep.subr.mxu0 0.0
    %1238 = vmatpush1.msra.mxu0 0.0
    %1239 = vmatprep.subr.mxu0 0.0
    %1240 = vmatpush1.msra.mxu0 0.0
    %1241 = vmatprep.subr.mxu0 0.0
    %1242 = vmatpush1.msra.mxu0 0.0
    %1243 = vmatprep.subr.mxu0 0.0
    %1244 = vmatpush1.msra.mxu0 0.0
    %1245 = vmatprep.subr.mxu0 0.0
    %1246 = vmatpush1.msra.mxu0 0.0
    %1247 = vmatprep.subr.mxu0 0.0
    %1248 = vmatpush1.msra.mxu0 0.0
    %1249 = vmatprep.subr.mxu0 0.0
    %1250 = vmatpush1.msra.mxu0 0.0
    %1251 = vmatprep.subr.mxu0 0.0
    %1252 = vmatpush1.msra.mxu0 0.0
    %1253 = vmatprep.mubr.f32.mxu0 0.0
    %1254 = vmatmul.mubr.f32.gmra.mrb[0].mxu0 %v1187
    %v1255 = vpop.f32.mrb[0].mxu0
    %v1256 = vadd.f32 0.0, %v1255
    %v1257 = vpop.f32.mrb[0].mxu0
    %1258 = vdwg.mxu0
    %1259 = vrot.lane.b32.xlu0 %v170, 64
    %v1260 = vpop.permute.xlu0 %1259
    %v1263 = vsel %vm38, %v876, 0
    %1265 = vmatprep.subr.mxu0 0.0
    %1266 = vmatpush1.msra.mxu0 %v1260
    %1267 = vmatprep.subr.mxu0 0.0
    %1268 = vmatpush1.msra.mxu0 0.0
    %1269 = vmatprep.subr.mxu0 0.0
    %1270 = vmatpush1.msra.mxu0 0.0
    %1271 = vmatprep.subr.mxu0 0.0
    %1272 = vmatpush1.msra.mxu0 0.0
    %1273 = vmatprep.subr.mxu0 0.0
    %1274 = vmatpush1.msra.mxu0 0.0
    %1275 = vmatprep.subr.mxu0 0.0
    %1276 = vmatpush1.msra.mxu0 0.0
    %1277 = vmatprep.subr.mxu0 0.0
    %1278 = vmatpush1.msra.mxu0 0.0
    %1279 = vmatprep.subr.mxu0 0.0
    %1280 = vmatpush1.msra.mxu0 0.0
    %1281 = vmatprep.subr.mxu0 0.0
    %1282 = vmatpush1.msra.mxu0 0.0
    %1283 = vmatprep.subr.mxu0 0.0
    %1284 = vmatpush1.msra.mxu0 0.0
    %1285 = vmatprep.subr.mxu0 0.0
    %1286 = vmatpush1.msra.mxu0 0.0
    %1287 = vmatprep.subr.mxu0 0.0
    %1288 = vmatpush1.msra.mxu0 0.0
    %1289 = vmatprep.subr.mxu0 0.0
    %1290 = vmatpush1.msra.mxu0 0.0
    %1291 = vmatprep.subr.mxu0 0.0
    %1292 = vmatpush1.msra.mxu0 0.0
    %1293 = vmatprep.subr.mxu0 0.0
    %1294 = vmatpush1.msra.mxu0 0.0
    %1295 = vmatprep.subr.mxu0 0.0
    %1296 = vmatpush1.msra.mxu0 0.0
    %1297 = vmatprep.subr.mxu0 0.0
    %1298 = vmatpush1.msra.mxu0 0.0
    %1299 = vmatprep.subr.mxu0 0.0
    %1300 = vmatpush1.msra.mxu0 0.0
    %1301 = vmatprep.subr.mxu0 0.0
    %1302 = vmatpush1.msra.mxu0 0.0
    %1303 = vmatprep.subr.mxu0 0.0
    %1304 = vmatpush1.msra.mxu0 0.0
    %1305 = vmatprep.subr.mxu0 0.0
    %1306 = vmatpush1.msra.mxu0 0.0
    %1307 = vmatprep.subr.mxu0 0.0
    %1308 = vmatpush1.msra.mxu0 0.0
    %1309 = vmatprep.subr.mxu0 0.0
    %1310 = vmatpush1.msra.mxu0 0.0
    %1311 = vmatprep.subr.mxu0 0.0
    %1312 = vmatpush1.msra.mxu0 0.0
    %1313 = vmatprep.subr.mxu0 0.0
    %1314 = vmatpush1.msra.mxu0 0.0
    %1315 = vmatprep.subr.mxu0 0.0
    %1316 = vmatpush1.msra.mxu0 0.0
    %1317 = vmatprep.subr.mxu0 0.0
    %1318 = vmatpush1.msra.mxu0 0.0
    %1319 = vmatprep.subr.mxu0 0.0
    %1320 = vmatpush1.msra.mxu0 0.0
    %1321 = vmatprep.subr.mxu0 0.0
    %1322 = vmatpush1.msra.mxu0 0.0
    %1323 = vmatprep.subr.mxu0 0.0
    %1324 = vmatpush1.msra.mxu0 0.0
    %1325 = vmatprep.subr.mxu0 0.0
    %1326 = vmatpush1.msra.mxu0 0.0
    %1327 = vmatprep.subr.mxu0 0.0
    %1328 = vmatpush1.msra.mxu0 0.0
    %1329 = vmatprep.mubr.f32.mxu0 0.0
    %1330 = vmatmul.mubr.f32.gmra.mrb[0].mxu0 %v1263
    %v1331 = vpop.f32.mrb[0].mxu0
    %v1332 = vadd.f32 0.0, %v1331
    %v1333 = vpop.f32.mrb[0].mxu0
    %1334 = vdwg.mxu0
    %1335 = vrot.lane.b32.xlu0 %v172, 64
    %v1336 = vpop.permute.xlu0 %1335
    %v1339 = vsel %vm38, %v877, 0
    %1341 = vmatprep.subr.mxu0 0.0
    %1342 = vmatpush1.msra.mxu0 %v1336
    %1343 = vmatprep.subr.mxu0 0.0
    %1344 = vmatpush1.msra.mxu0 0.0
    %1345 = vmatprep.subr.mxu0 0.0
    %1346 = vmatpush1.msra.mxu0 0.0
    %1347 = vmatprep.subr.mxu0 0.0
    %1348 = vmatpush1.msra.mxu0 0.0
    %1349 = vmatprep.subr.mxu0 0.0
    %1350 = vmatpush1.msra.mxu0 0.0
    %1351 = vmatprep.subr.mxu0 0.0
    %1352 = vmatpush1.msra.mxu0 0.0
    %1353 = vmatprep.subr.mxu0 0.0
    %1354 = vmatpush1.msra.mxu0 0.0
    %1355 = vmatprep.subr.mxu0 0.0
    %1356 = vmatpush1.msra.mxu0 0.0
    %1357 = vmatprep.subr.mxu0 0.0
    %1358 = vmatpush1.msra.mxu0 0.0
    %1359 = vmatprep.subr.mxu0 0.0
    %1360 = vmatpush1.msra.mxu0 0.0
    %1361 = vmatprep.subr.mxu0 0.0
    %1362 = vmatpush1.msra.mxu0 0.0
    %1363 = vmatprep.subr.mxu0 0.0
    %1364 = vmatpush1.msra.mxu0 0.0
    %1365 = vmatprep.subr.mxu0 0.0
    %1366 = vmatpush1.msra.mxu0 0.0
    %1367 = vmatprep.subr.mxu0 0.0
    %1368 = vmatpush1.msra.mxu0 0.0
    %1369 = vmatprep.subr.mxu0 0.0
    %1370 = vmatpush1.msra.mxu0 0.0
    %1371 = vmatprep.subr.mxu0 0.0
    %1372 = vmatpush1.msra.mxu0 0.0
    %1373 = vmatprep.subr.mxu0 0.0
    %1374 = vmatpush1.msra.mxu0 0.0
    %1375 = vmatprep.subr.mxu0 0.0
    %1376 = vmatpush1.msra.mxu0 0.0
    %1377 = vmatprep.subr.mxu0 0.0
    %1378 = vmatpush1.msra.mxu0 0.0
    %1379 = vmatprep.subr.mxu0 0.0
    %1380 = vmatpush1.msra.mxu0 0.0
    %1381 = vmatprep.subr.mxu0 0.0
    %1382 = vmatpush1.msra.mxu0 0.0
    %1383 = vmatprep.subr.mxu0 0.0
    %1384 = vmatpush1.msra.mxu0 0.0
    %1385 = vmatprep.subr.mxu0 0.0
    %1386 = vmatpush1.msra.mxu0 0.0
    %1387 = vmatprep.subr.mxu0 0.0
    %1388 = vmatpush1.msra.mxu0 0.0
    %1389 = vmatprep.subr.mxu0 0.0
    %1390 = vmatpush1.msra.mxu0 0.0
    %1391 = vmatprep.subr.mxu0 0.0
    %1392 = vmatpush1.msra.mxu0 0.0
    %1393 = vmatprep.subr.mxu0 0.0
    %1394 = vmatpush1.msra.mxu0 0.0
    %1395 = vmatprep.subr.mxu0 0.0
    %1396 = vmatpush1.msra.mxu0 0.0
    %1397 = vmatprep.subr.mxu0 0.0
    %1398 = vmatpush1.msra.mxu0 0.0
    %1399 = vmatprep.subr.mxu0 0.0
    %1400 = vmatpush1.msra.mxu0 0.0
    %1401 = vmatprep.subr.mxu0 0.0
    %1402 = vmatpush1.msra.mxu0 0.0
    %1403 = vmatprep.subr.mxu0 0.0
    %1404 = vmatpush1.msra.mxu0 0.0
    %1405 = vmatprep.mubr.f32.mxu0 0.0
    %1406 = vmatmul.mubr.f32.gmra.mrb[0].mxu0 %v1339
    %v1407 = vpop.f32.mrb[0].mxu0
    %v1408 = vadd.f32 0.0, %v1407
    %v1409 = vpop.f32.mrb[0].mxu0
    %1410 = vdwg.mxu0
    %1411 = vrot.lane.b32.xlu0 %v174, 64
    %v1412 = vpop.permute.xlu0 %1411
    %v1415 = vsel %vm38, %v878, 0
    %1417 = vmatprep.subr.mxu0 0.0
    %1418 = vmatpush1.msra.mxu0 %v1412
    %1419 = vmatprep.subr.mxu0 0.0
    %1420 = vmatpush1.msra.mxu0 0.0
    %1421 = vmatprep.subr.mxu0 0.0
    %1422 = vmatpush1.msra.mxu0 0.0
    %1423 = vmatprep.subr.mxu0 0.0
    %1424 = vmatpush1.msra.mxu0 0.0
    %1425 = vmatprep.subr.mxu0 0.0
    %1426 = vmatpush1.msra.mxu0 0.0
    %1427 = vmatprep.subr.mxu0 0.0
    %1428 = vmatpush1.msra.mxu0 0.0
    %1429 = vmatprep.subr.mxu0 0.0
    %1430 = vmatpush1.msra.mxu0 0.0
    %1431 = vmatprep.subr.mxu0 0.0
    %1432 = vmatpush1.msra.mxu0 0.0
    %1433 = vmatprep.subr.mxu0 0.0
    %1434 = vmatpush1.msra.mxu0 0.0
    %1435 = vmatprep.subr.mxu0 0.0
    %1436 = vmatpush1.msra.mxu0 0.0
    %1437 = vmatprep.subr.mxu0 0.0
    %1438 = vmatpush1.msra.mxu0 0.0
    %1439 = vmatprep.subr.mxu0 0.0
    %1440 = vmatpush1.msra.mxu0 0.0
    %1441 = vmatprep.subr.mxu0 0.0
    %1442 = vmatpush1.msra.mxu0 0.0
    %1443 = vmatprep.subr.mxu0 0.0
    %1444 = vmatpush1.msra.mxu0 0.0
    %1445 = vmatprep.subr.mxu0 0.0
    %1446 = vmatpush1.msra.mxu0 0.0
    %1447 = vmatprep.subr.mxu0 0.0
    %1448 = vmatpush1.msra.mxu0 0.0
    %1449 = vmatprep.subr.mxu0 0.0
    %1450 = vmatpush1.msra.mxu0 0.0
    %1451 = vmatprep.subr.mxu0 0.0
    %1452 = vmatpush1.msra.mxu0 0.0
    %1453 = vmatprep.subr.mxu0 0.0
    %1454 = vmatpush1.msra.mxu0 0.0
    %1455 = vmatprep.subr.mxu0 0.0
    %1456 = vmatpush1.msra.mxu0 0.0
    %1457 = vmatprep.subr.mxu0 0.0
    %1458 = vmatpush1.msra.mxu0 0.0
    %1459 = vmatprep.subr.mxu0 0.0
    %1460 = vmatpush1.msra.mxu0 0.0
    %1461 = vmatprep.subr.mxu0 0.0
    %1462 = vmatpush1.msra.mxu0 0.0
    %1463 = vmatprep.subr.mxu0 0.0
    %1464 = vmatpush1.msra.mxu0 0.0
    %1465 = vmatprep.subr.mxu0 0.0
    %1466 = vmatpush1.msra.mxu0 0.0
    %1467 = vmatprep.subr.mxu0 0.0
    %1468 = vmatpush1.msra.mxu0 0.0
    %1469 = vmatprep.subr.mxu0 0.0
    %1470 = vmatpush1.msra.mxu0 0.0
    %1471 = vmatprep.subr.mxu0 0.0
    %1472 = vmatpush1.msra.mxu0 0.0
    %1473 = vmatprep.subr.mxu0 0.0
    %1474 = vmatpush1.msra.mxu0 0.0
    %1475 = vmatprep.subr.mxu0 0.0
    %1476 = vmatpush1.msra.mxu0 0.0
    %1477 = vmatprep.subr.mxu0 0.0
    %1478 = vmatpush1.msra.mxu0 0.0
    %1479 = vmatprep.subr.mxu0 0.0
    %1480 = vmatpush1.msra.mxu0 0.0
    %1481 = vmatprep.mubr.f32.mxu0 0.0
    %1482 = vmatmul.mubr.f32.gmra.mrb[0].mxu0 %v1415
    %v1483 = vpop.f32.mrb[0].mxu0
    %v1484 = vadd.f32 0.0, %v1483
    %v1485 = vpop.f32.mrb[0].mxu0
    %1486 = vdwg.mxu0
    %1489 = vrot.lane.b32.xlu0 %v1104, 8
    %v1490 = vpop.permute.xlu0 %1489
    %1491 = vrot.lane.b32.xlu0 %v1180, 8
    %v1492 = vpop.permute.xlu0 %1491
    %1497 = vrot.lane.b32.xlu0 %v1256, 16
    %v1498 = vpop.permute.xlu0 %1497
    %1499 = vrot.lane.b32.xlu0 %v1332, 16
    %v1500 = vpop.permute.xlu0 %1499
    %1505 = vrot.lane.b32.xlu0 %v1408, 24
    %v1506 = vpop.permute.xlu0 %1505
    %1507 = vrot.lane.b32.xlu0 %v1484, 24
    %v1508 = vpop.permute.xlu0 %1507
    %v1511 = vsel %vm38, %v952, %v1490
    %v1512 = vsel %vm38, %v1028, %v1492
    %vm1513 = vcmask 130048
    %v1514 = vsel %vm1513, %v1511, %v1498
    %v1515 = vsel %vm1513, %v1512, %v1500
    %vm1516 = vcmask 195584
    %v1517 = vsel %vm1516, %v1514, %v1506
    %v1518 = vsel %vm1516, %v1515, %v1508
    %v1519 = vpack.c.bf16 %v1518, %v1517
    %v1520 = vld [vmem:[#allocation2 + $0x8] sm:$0xf]
    %v1521 = vld [vmem:[#allocation2 + $0xc] sm:$0xf]
    %v1522 = vld [vmem:[#allocation2 + $0x10] sm:$0xf]
    %v1523 = vld [vmem:[#allocation2 + $0x14] sm:$0xf]
    %v1524 = vld [vmem:[%s2 + $0x3] sm:$0x1]
    %v1525 = vlaneseq
    %v1526 = vshrl.u32 %v1525, 7
    %v1527 = vsub.s32 0, %v1526
    %v1528 = vrot.slane %v1524, %v1527
    %v1533 = vunpack.c.l.b16 %v1520
    %v1534 = vunpack.c.l.b16 %v1521
    %v1535 = vunpack.c.l.b16 %v1522
    %v1536 = vunpack.c.l.b16 %v1523
    %v1537 = vpack.c.b16 %v1534, %v1533
    %v1538 = vpack.c.b16 %v1536, %v1535
    %1539 = vrot.lane.b32.xlu0 %v1537, 32
    %v1540 = vpop.permute.xlu0 %1539
    %1541 = vrot.lane.b32.xlu0 %v1538, 32
    %v1542 = vpop.permute.xlu0 %1541
    %v1546 = vsel %vm116, %v1519, 0
    %1548 = vmatprep.subr.bf16.mxu0 0
    %1549 = vmatpush1.bf16.msra.mxu0 %v1540
    %1550 = vmatprep.subr.bf16.mxu0 0
    %1551 = vmatpush1.bf16.msra.mxu0 %v1542
    %1552 = vmatprep.subr.bf16.mxu0 0
    %1553 = vmatpush1.bf16.msra.mxu0 0
    %1554 = vmatprep.subr.bf16.mxu0 0
    %1555 = vmatpush1.bf16.msra.mxu0 0
    %1556 = vmatprep.subr.bf16.mxu0 0
    %1557 = vmatpush1.bf16.msra.mxu0 0
    %1558 = vmatprep.subr.bf16.mxu0 0
    %1559 = vmatpush1.bf16.msra.mxu0 0
    %1560 = vmatprep.subr.bf16.mxu0 0
    %1561 = vmatpush1.bf16.msra.mxu0 0
    %1562 = vmatprep.subr.bf16.mxu0 0
    %1563 = vmatpush1.bf16.msra.mxu0 0
    %1564 = vmatprep.subr.bf16.mxu0 0
    %1565 = vmatpush1.bf16.msra.mxu0 0
    %1566 = vmatprep.subr.bf16.mxu0 0
    %1567 = vmatpush1.bf16.msra.mxu0 0
    %1568 = vmatprep.subr.bf16.mxu0 0
    %1569 = vmatpush1.bf16.msra.mxu0 0
    %1570 = vmatprep.subr.bf16.mxu0 0
    %1571 = vmatpush1.bf16.msra.mxu0 0
    %1572 = vmatprep.subr.bf16.mxu0 0
    %1573 = vmatpush1.bf16.msra.mxu0 0
    %1574 = vmatprep.subr.bf16.mxu0 0
    %1575 = vmatpush1.bf16.msra.mxu0 0
    %1576 = vmatprep.subr.bf16.mxu0 0
    %1577 = vmatpush1.bf16.msra.mxu0 0
    %1578 = vmatprep.subr.bf16.mxu0 0
    %1579 = vmatpush1.bf16.msra.mxu0 0
    %1580 = vmatprep.mubr.bf16.mxu0 0
    %1581 = vmatmul.mubr.bf16.gmra.mrb[0].mxu0 %v1546
    %v1582 = vpop.f32.mrb[0].mxu0
    %v1583 = vadd.f32 %v1528, %v1582
    %v1584 = vpop.f32.mrb[0].mxu0
    %v1585 = vpop.f32.mrb[0].mxu0
    %v1586 = vadd.f32 %v1528, %v1585
    %v1587 = vpop.f32.mrb[0].mxu0
    %1588 = vdwg.mxu0
    %v1589 = vadd.f32 %v92, %v1583
    %v1590 = vadd.f32 %v93, %v1586
    %v1591 = vld [vmem:[%s2 + $0x4] sm:$0x1]
    %v1592 = vld [vmem:[%s2 + $0x5] sm:$0x1]
    %v1593 = vsel %vm116, %v1589, 0.0
    %1594 = vadd.xlane.f32.xlu0 %v1593
    %v1595 = vpop.xlane.xlu0 %1594
    %v1596 = vsel %vm116, %v1590, 0.0
    %1597 = vadd.xlane.f32.xlu0 %v1596
    %v1598 = vpop.xlane.xlu0 %1597
    %v1599 = vrcp.pop 32.0
    %v1600 = vmul.f32 %v1595, %v1599
    %v1601 = vmul.f32 %v1598, %v1599
    %v1602 = vmul.f32 %v1589, %v1589
    %v1603 = vmul.f32 %v1590, %v1590
    %v1604 = vsel %vm116, %v1602, 0.0
    %1605 = vadd.xlane.f32.xlu0 %v1604
    %v1606 = vpop.xlane.xlu0 %1605
    %v1607 = vsel %vm116, %v1603, 0.0
    %1608 = vadd.xlane.f32.xlu0 %v1607
    %v1609 = vpop.xlane.xlu0 %1608
    %v1610 = vmul.f32 %v1606, %v1599
    %v1611 = vmul.f32 %v1609, %v1599
    %v1612 = vmul.f32 %v1600, %v1600
    %v1613 = vmul.f32 %v1601, %v1601
    %v1614 = vsub.f32 %v1610, %v1612
    %v1615 = vsub.f32 %v1611, %v1613
    %v1616 = vsub.f32 %v1589, %v1600
    %v1617 = vsub.f32 %v1590, %v1601
    %v1618 = vadd.f32 %v1614, 1e-05
    %v1619 = vadd.f32 %v1615, 1e-05
    %v1620 = vrsqrt.pop %v1618
    %v1621 = vrsqrt.pop %v1619
    %v1622 = vmul.f32 %v1616, %v1620
    %v1623 = vmul.f32 %v1617, %v1621
    %v1624 = vlaneseq
    %v1625 = vshrl.u32 %v1624, 7
    %v1626 = vsub.s32 0, %v1625
    %v1627 = vrot.slane %v1591, %v1626
    %v1628 = vmul.f32 %v1622, %v1627
    %v1629 = vmul.f32 %v1623, %v1627
    %v1630 = vlaneseq
    %v1631 = vshrl.u32 %v1630, 7
    %v1632 = vsub.s32 0, %v1631
    %v1633 = vrot.slane %v1592, %v1632
    %v1634 = vadd.f32 %v1628, %v1633
    %v1635 = vadd.f32 %v1629, %v1633
    %v1636 = vpack.c.bf16 %v1635, %v1634
    %v1637 = vld [vmem:[#allocation2 + $0x28] sm:$0xf]
    %v1638 = vld [vmem:[#allocation2 + $0x2c] sm:$0xf]
    %v1639 = vld [vmem:[#allocation2 + $0x30] sm:$0xf]
    %v1640 = vld [vmem:[#allocation2 + $0x34] sm:$0xf]
    %v1641 = vld [vmem:[%s2 + $0x6] sm:$0x1]
    %v1642 = vlaneseq
    %v1643 = vshrl.u32 %v1642, 7
    %v1644 = vsub.s32 0, %v1643
    %v1645 = vrot.slane %v1641, %v1644
    %v1650 = vunpack.c.l.b16 %v1637
    %v1651 = vunpack.c.l.b16 %v1638
    %v1652 = vunpack.c.l.b16 %v1639
    %v1653 = vunpack.c.l.b16 %v1640
    %v1654 = vpack.c.b16 %v1651, %v1650
    %v1655 = vpack.c.b16 %v1653, %v1652
    %v1659 = vsel %vm116, %v1636, 0
    %1661 = vmatprep.subr.bf16.mxu0 0
    %1662 = vmatpush1.bf16.msra.mxu0 %v1654
    %1663 = vmatprep.subr.bf16.mxu0 0
    %1664 = vmatpush1.bf16.msra.mxu0 %v1655
    %1665 = vmatprep.subr.bf16.mxu0 0
    %1666 = vmatpush1.bf16.msra.mxu0 0
    %1667 = vmatprep.subr.bf16.mxu0 0
    %1668 = vmatpush1.bf16.msra.mxu0 0
    %1669 = vmatprep.subr.bf16.mxu0 0
    %1670 = vmatpush1.bf16.msra.mxu0 0
    %1671 = vmatprep.subr.bf16.mxu0 0
    %1672 = vmatpush1.bf16.msra.mxu0 0
    %1673 = vmatprep.subr.bf16.mxu0 0
    %1674 = vmatpush1.bf16.msra.mxu0 0
    %1675 = vmatprep.subr.bf16.mxu0 0
    %1676 = vmatpush1.bf16.msra.mxu0 0
    %1677 = vmatprep.subr.bf16.mxu0 0
    %1678 = vmatpush1.bf16.msra.mxu0 0
    %1679 = vmatprep.subr.bf16.mxu0 0
    %1680 = vmatpush1.bf16.msra.mxu0 0
    %1681 = vmatprep.subr.bf16.mxu0 0
    %1682 = vmatpush1.bf16.msra.mxu0 0
    %1683 = vmatprep.subr.bf16.mxu0 0
    %1684 = vmatpush1.bf16.msra.mxu0 0
    %1685 = vmatprep.subr.bf16.mxu0 0
    %1686 = vmatpush1.bf16.msra.mxu0 0
    %1687 = vmatprep.subr.bf16.mxu0 0
    %1688 = vmatpush1.bf16.msra.mxu0 0
    %1689 = vmatprep.subr.bf16.mxu0 0
    %1690 = vmatpush1.bf16.msra.mxu0 0
    %1691 = vmatprep.subr.bf16.mxu0 0
    %1692 = vmatpush1.bf16.msra.mxu0 0
    %1693 = vmatprep.mubr.bf16.mxu0 0
    %1694 = vmatmul.mubr.bf16.gmra.mrb[0].mxu0 %v1659
    %v1695 = vpop.f32.mrb[0].mxu0
    %v1696 = vadd.f32 %v1645, %v1695
    %v1697 = vpop.f32.mrb[0].mxu0
    %v1698 = vpop.f32.mrb[0].mxu0
    %v1699 = vadd.f32 %v1645, %v1698
    %v1700 = vpop.f32.mrb[0].mxu0
    %1701 = vdwg.mxu0
    %v1702 = vmax.f32 %v1696, 0.0
    %v1703 = vmax.f32 %v1699, 0.0
    %v1704 = vpack.c.bf16 %v1703, %v1702
    %v1705 = vld [vmem:[#allocation2 + $0x58] sm:$0xf]
    %v1706 = vld [vmem:[#allocation2 + $0x5c] sm:$0xf]
    %v1707 = vld [vmem:[#allocation2 + $0x60] sm:$0xf]
    %v1708 = vld [vmem:[#allocation2 + $0x64] sm:$0xf]
    %v1709 = vld [vmem:[#allocation2 + $0x68] sm:$0xf]
    %v1710 = vld [vmem:[#allocation2 + $0x6c] sm:$0xf]
    %v1711 = vld [vmem:[#allocation2 + $0x70] sm:$0xf]
    %v1712 = vld [vmem:[#allocation2 + $0x74] sm:$0xf]
    %v1713 = vld [vmem:[#allocation2 + $0x78] sm:$0xf]
    %v1714 = vld [vmem:[#allocation2 + $0x7c] sm:$0xf]
    %v1715 = vld [vmem:[#allocation2 + $0x80] sm:$0xf]
    %v1716 = vld [vmem:[#allocation2 + $0x84] sm:$0xf]
    %v1717 = vld [vmem:[#allocation2 + $0x88] sm:$0xf]
    %v1718 = vld [vmem:[#allocation2 + $0x8c] sm:$0xf]
    %v1719 = vld [vmem:[#allocation2 + $0x90] sm:$0xf]
    %v1720 = vld [vmem:[#allocation2 + $0x94] sm:$0xf]
    %v1721 = vld [vmem:[%s2 + $0x7] sm:$0x1]
    %v1722 = vlaneseq
    %v1723 = vshrl.u32 %v1722, 7
    %v1724 = vsub.s32 0, %v1723
    %v1725 = vrot.slane %v1721, %v1724
    %v1742 = vunpack.c.l.b16 %v1705
    %v1743 = vunpack.c.l.b16 %v1706
    %v1744 = vunpack.c.l.b16 %v1707
    %v1745 = vunpack.c.l.b16 %v1708
    %v1746 = vunpack.c.l.b16 %v1709
    %v1747 = vunpack.c.l.b16 %v1710
    %v1748 = vunpack.c.l.b16 %v1711
    %v1749 = vunpack.c.l.b16 %v1712
    %v1750 = vunpack.c.l.b16 %v1713
    %v1751 = vunpack.c.l.b16 %v1714
    %v1752 = vunpack.c.l.b16 %v1715
    %v1753 = vunpack.c.l.b16 %v1716
    %v1754 = vunpack.c.l.b16 %v1717
    %v1755 = vunpack.c.l.b16 %v1718
    %v1756 = vunpack.c.l.b16 %v1719
    %v1757 = vunpack.c.l.b16 %v1720
    %v1758 = vpack.c.b16 %v1743, %v1742
    %v1759 = vpack.c.b16 %v1745, %v1744
    %v1760 = vpack.c.b16 %v1747, %v1746
    %v1761 = vpack.c.b16 %v1749, %v1748
    %v1762 = vpack.c.b16 %v1751, %v1750
    %v1763 = vpack.c.b16 %v1753, %v1752
    %v1764 = vpack.c.b16 %v1755, %v1754
    %v1765 = vpack.c.b16 %v1757, %v1756
    %1774 = vmatprep.subr.bf16.mxu0 0
    %1775 = vmatpush1.bf16.msra.mxu0 %v1758
    %1776 = vmatprep.subr.bf16.mxu0 0
    %1777 = vmatpush1.bf16.msra.mxu0 %v1759
    %1778 = vmatprep.subr.bf16.mxu0 0
    %1779 = vmatpush1.bf16.msra.mxu0 %v1760
    %1780 = vmatprep.subr.bf16.mxu0 0
    %1781 = vmatpush1.bf16.msra.mxu0 %v1761
    %1782 = vmatprep.subr.bf16.mxu0 0
    %1783 = vmatpush1.bf16.msra.mxu0 %v1762
    %1784 = vmatprep.subr.bf16.mxu0 0
    %1785 = vmatpush1.bf16.msra.mxu0 %v1763
    %1786 = vmatprep.subr.bf16.mxu0 0
    %1787 = vmatpush1.bf16.msra.mxu0 %v1764
    %1788 = vmatprep.subr.bf16.mxu0 0
    %1789 = vmatpush1.bf16.msra.mxu0 %v1765
    %1790 = vmatprep.subr.bf16.mxu0 0
    %1791 = vmatpush1.bf16.msra.mxu0 0
    %1792 = vmatprep.subr.bf16.mxu0 0
    %1793 = vmatpush1.bf16.msra.mxu0 0
    %1794 = vmatprep.subr.bf16.mxu0 0
    %1795 = vmatpush1.bf16.msra.mxu0 0
    %1796 = vmatprep.subr.bf16.mxu0 0
    %1797 = vmatpush1.bf16.msra.mxu0 0
    %1798 = vmatprep.subr.bf16.mxu0 0
    %1799 = vmatpush1.bf16.msra.mxu0 0
    %1800 = vmatprep.subr.bf16.mxu0 0
    %1801 = vmatpush1.bf16.msra.mxu0 0
    %1802 = vmatprep.subr.bf16.mxu0 0
    %1803 = vmatpush1.bf16.msra.mxu0 0
    %1804 = vmatprep.subr.bf16.mxu0 0
    %1805 = vmatpush1.bf16.msra.mxu0 0
    %1806 = vmatprep.mubr.bf16.mxu0 0
    %1807 = vmatmul.mubr.bf16.gmra.mrb[0].mxu0 %v1704
    %v1808 = vpop.f32.mrb[0].mxu0
    %v1809 = vadd.f32 %v1725, %v1808
    %v1810 = vpop.f32.mrb[0].mxu0
    %v1811 = vpop.f32.mrb[0].mxu0
    %v1812 = vadd.f32 %v1725, %v1811
    %v1813 = vpop.f32.mrb[0].mxu0
    %1814 = vdwg.mxu0
    %v1815 = vadd.f32 %v1634, %v1809
    %v1816 = vadd.f32 %v1635, %v1812
    %v1817 = vld [vmem:[%s2 + $0x8] sm:$0x1]
    %v1818 = vld [vmem:[%s2 + $0x9] sm:$0x1]
    %v1819 = vsel %vm116, %v1815, 0.0
    %1820 = vadd.xlane.f32.xlu0 %v1819
    %v1821 = vpop.xlane.xlu0 %1820
    %v1822 = vsel %vm116, %v1816, 0.0
    %1823 = vadd.xlane.f32.xlu0 %v1822
    %v1824 = vpop.xlane.xlu0 %1823
    %v1825 = vmul.f32 %v1821, %v1599
    %v1826 = vmul.f32 %v1824, %v1599
    %v1827 = vmul.f32 %v1815, %v1815
    %v1828 = vmul.f32 %v1816, %v1816
    %v1829 = vsel %vm116, %v1827, 0.0
    %1830 = vadd.xlane.f32.xlu0 %v1829
    %v1831 = vpop.xlane.xlu0 %1830
    %v1832 = vsel %vm116, %v1828, 0.0
    %1833 = vadd.xlane.f32.xlu0 %v1832
    %v1834 = vpop.xlane.xlu0 %1833
    %v1835 = vmul.f32 %v1831, %v1599
    %v1836 = vmul.f32 %v1834, %v1599
    %v1837 = vmul.f32 %v1825, %v1825
    %v1838 = vmul.f32 %v1826, %v1826
    %v1839 = vsub.f32 %v1835, %v1837
    %v1840 = vsub.f32 %v1836, %v1838
    %v1841 = vsub.f32 %v1815, %v1825
    %v1842 = vsub.f32 %v1816, %v1826
    %v1843 = vadd.f32 %v1839, 1e-05
    %v1844 = vadd.f32 %v1840, 1e-05
    %v1845 = vrsqrt.pop %v1843
    %v1846 = vrsqrt.pop %v1844
    %v1847 = vmul.f32 %v1841, %v1845
    %v1848 = vmul.f32 %v1842, %v1846
    %v1849 = vlaneseq
    %v1850 = vshrl.u32 %v1849, 7
    %v1851 = vsub.s32 0, %v1850
    %v1852 = vrot.slane %v1817, %v1851
    %v1853 = vmul.f32 %v1847, %v1852
    %v1854 = vmul.f32 %v1848, %v1852
    %v1855 = vlaneseq
    %v1856 = vshrl.u32 %v1855, 7
    %v1857 = vsub.s32 0, %v1856
    %v1858 = vrot.slane %v1818, %v1857
    %v1859 = vadd.f32 %v1853, %v1858
    %v1860 = vadd.f32 %v1854, %v1858
    %v1861 = vpack.c.bf16 %v1860, %v1859
    %v1862 = vld [vmem:[#allocation2 + $0x18] sm:$0xf]
    %v1863 = vld [vmem:[#allocation2 + $0x1c] sm:$0xf]
    %v1864 = vld [vmem:[#allocation2 + $0x20] sm:$0xf]
    %v1865 = vld [vmem:[#allocation2 + $0x24] sm:$0xf]
    %v1866 = vld [vmem:[%s2 + $0xa] sm:$0x1]
    %v1867 = vlaneseq
    %v1868 = vshrl.u32 %v1867, 7
    %v1869 = vsub.s32 0, %v1868
    %v1870 = vrot.slane %v1866, %v1869
    %v1875 = vunpack.c.l.b16 %v1862
    %v1876 = vunpack.c.l.b16 %v1863
    %v1877 = vunpack.c.l.b16 %v1864
    %v1878 = vunpack.c.l.b16 %v1865
    %v1879 = vpack.c.b16 %v1876, %v1875
    %v1880 = vpack.c.b16 %v1878, %v1877
    %v1884 = vsel %vm116, %v1861, 0
    %1886 = vmatprep.subr.bf16.mxu0 0
    %1887 = vmatpush1.bf16.msra.mxu0 %v1879
    %1888 = vmatprep.subr.bf16.mxu0 0
    %1889 = vmatpush1.bf16.msra.mxu0 %v1880
    %1890 = vmatprep.subr.bf16.mxu0 0
    %1891 = vmatpush1.bf16.msra.mxu0 0
    %1892 = vmatprep.subr.bf16.mxu0 0
    %1893 = vmatpush1.bf16.msra.mxu0 0
    %1894 = vmatprep.subr.bf16.mxu0 0
    %1895 = vmatpush1.bf16.msra.mxu0 0
    %1896 = vmatprep.subr.bf16.mxu0 0
    %1897 = vmatpush1.bf16.msra.mxu0 0
    %1898 = vmatprep.subr.bf16.mxu0 0
    %1899 = vmatpush1.bf16.msra.mxu0 0
    %1900 = vmatprep.subr.bf16.mxu0 0
    %1901 = vmatpush1.bf16.msra.mxu0 0
    %1902 = vmatprep.subr.bf16.mxu0 0
    %1903 = vmatpush1.bf16.msra.mxu0 0
    %1904 = vmatprep.subr.bf16.mxu0 0
    %1905 = vmatpush1.bf16.msra.mxu0 0
    %1906 = vmatprep.subr.bf16.mxu0 0
    %1907 = vmatpush1.bf16.msra.mxu0 0
    %1908 = vmatprep.subr.bf16.mxu0 0
    %1909 = vmatpush1.bf16.msra.mxu0 0
    %1910 = vmatprep.subr.bf16.mxu0 0
    %1911 = vmatpush1.bf16.msra.mxu0 0
    %1912 = vmatprep.subr.bf16.mxu0 0
    %1913 = vmatpush1.bf16.msra.mxu0 0
    %1914 = vmatprep.subr.bf16.mxu0 0
    %1915 = vmatpush1.bf16.msra.mxu0 0
    %1916 = vmatprep.subr.bf16.mxu0 0
    %1917 = vmatpush1.bf16.msra.mxu0 0
    %1918 = vmatprep.mubr.bf16.mxu0 0
    %1919 = vmatmul.mubr.bf16.gmra.mrb[0].mxu0 %v1884
    %v1920 = vpop.f32.mrb[0].mxu0
    %v1921 = vadd.f32 %v1870, %v1920
    %v1922 = vpop.f32.mrb[0].mxu0
    %v1923 = vpop.f32.mrb[0].mxu0
    %v1924 = vadd.f32 %v1870, %v1923
    %v1925 = vpop.f32.mrb[0].mxu0
    %1926 = vdwg.mxu0
    %1929 = vrot.lane.b32.xlu0 %v1921, 120
    %v1930 = vpop.permute.xlu0 %1929
    %1931 = vrot.lane.b32.xlu0 %v1924, 120
    %v1932 = vpop.permute.xlu0 %1931
    %1933 = vrot.lane.b32.xlu0 %v1921, 112
    %v1934 = vpop.permute.xlu0 %1933
    %1935 = vrot.lane.b32.xlu0 %v1924, 112
    %v1936 = vpop.permute.xlu0 %1935
    %1937 = vrot.lane.b32.xlu0 %v1921, 104
    %v1938 = vpop.permute.xlu0 %1937
    %1939 = vrot.lane.b32.xlu0 %v1924, 104
    %v1940 = vpop.permute.xlu0 %1939
    %1941 = vrot.lane.b32.xlu0 %v1921, 96
    %v1942 = vpop.permute.xlu0 %1941
    %v1943 = vsel %vm38, %v1921, 0
    %v1945 = vsel %vm38, %v1942, 0
    %1947 = vmatprep.subr.mxu0 0.0
    %1948 = vmatpush1.xpose.msra.mxu0 %v1945
    %1949 = vmatprep.subr.mxu0 0.0
    %1950 = vmatpush1.xpose.msra.mxu0 0.0
    %1951 = vmatprep.subr.mxu0 0.0
    %1952 = vmatpush1.xpose.msra.mxu0 0.0
    %1953 = vmatprep.subr.mxu0 0.0
    %1954 = vmatpush1.xpose.msra.mxu0 0.0
    %1955 = vmatprep.subr.mxu0 0.0
    %1956 = vmatpush1.xpose.msra.mxu0 0.0
    %1957 = vmatprep.subr.mxu0 0.0
    %1958 = vmatpush1.xpose.msra.mxu0 0.0
    %1959 = vmatprep.subr.mxu0 0.0
    %1960 = vmatpush1.xpose.msra.mxu0 0.0
    %1961 = vmatprep.subr.mxu0 0.0
    %1962 = vmatpush1.xpose.msra.mxu0 0.0
    %1963 = vmatprep.subr.mxu0 0.0
    %1964 = vmatpush1.xpose.msra.mxu0 0.0
    %1965 = vmatprep.subr.mxu0 0.0
    %1966 = vmatpush1.xpose.msra.mxu0 0.0
    %1967 = vmatprep.subr.mxu0 0.0
    %1968 = vmatpush1.xpose.msra.mxu0 0.0
    %1969 = vmatprep.subr.mxu0 0.0
    %1970 = vmatpush1.xpose.msra.mxu0 0.0
    %1971 = vmatprep.subr.mxu0 0.0
    %1972 = vmatpush1.xpose.msra.mxu0 0.0
    %1973 = vmatprep.subr.mxu0 0.0
    %1974 = vmatpush1.xpose.msra.mxu0 0.0
    %1975 = vmatprep.subr.mxu0 0.0
    %1976 = vmatpush1.xpose.msra.mxu0 0.0
    %1977 = vmatprep.subr.mxu0 0.0
    %1978 = vmatpush1.xpose.msra.mxu0 0.0
    %1979 = vmatprep.subr.mxu0 0.0
    %1980 = vmatpush1.xpose.msra.mxu0 0.0
    %1981 = vmatprep.subr.mxu0 0.0
    %1982 = vmatpush1.xpose.msra.mxu0 0.0
    %1983 = vmatprep.subr.mxu0 0.0
    %1984 = vmatpush1.xpose.msra.mxu0 0.0
    %1985 = vmatprep.subr.mxu0 0.0
    %1986 = vmatpush1.xpose.msra.mxu0 0.0
    %1987 = vmatprep.subr.mxu0 0.0
    %1988 = vmatpush1.xpose.msra.mxu0 0.0
    %1989 = vmatprep.subr.mxu0 0.0
    %1990 = vmatpush1.xpose.msra.mxu0 0.0
    %1991 = vmatprep.subr.mxu0 0.0
    %1992 = vmatpush1.xpose.msra.mxu0 0.0
    %1993 = vmatprep.subr.mxu0 0.0
    %1994 = vmatpush1.xpose.msra.mxu0 0.0
    %1995 = vmatprep.subr.mxu0 0.0
    %1996 = vmatpush1.xpose.msra.mxu0 0.0
    %1997 = vmatprep.subr.mxu0 0.0
    %1998 = vmatpush1.xpose.msra.mxu0 0.0
    %1999 = vmatprep.subr.mxu0 0.0
    %2000 = vmatpush1.xpose.msra.mxu0 0.0
    %2001 = vmatprep.subr.mxu0 0.0
    %2002 = vmatpush1.xpose.msra.mxu0 0.0
    %2003 = vmatprep.subr.mxu0 0.0
    %2004 = vmatpush1.xpose.msra.mxu0 0.0
    %2005 = vmatprep.subr.mxu0 0.0
    %2006 = vmatpush1.xpose.msra.mxu0 0.0
    %2007 = vmatprep.subr.mxu0 0.0
    %2008 = vmatpush1.xpose.msra.mxu0 0.0
    %2009 = vmatprep.subr.mxu0 0.0
    %2010 = vmatpush1.xpose.msra.mxu0 0.0
    %2011 = vmatprep.mubr.f32.mxu0 0.0
    %2012 = vmatmul.mubr.f32.gmra.mrb[0].mxu0 %v1943
    %v2013 = vpop.f32.mrb[0].mxu0
    %v2014 = vadd.f32 0.0, %v2013
    %v2015 = vpop.f32.mrb[0].mxu0
    %2016 = vdwg.mxu0
    %2017 = vrot.lane.b32.xlu0 %v1924, 96
    %v2018 = vpop.permute.xlu0 %2017
    %v2019 = vsel %vm38, %v1924, 0
    %v2021 = vsel %vm38, %v2018, 0
    %2023 = vmatprep.subr.mxu0 0.0
    %2024 = vmatpush1.xpose.msra.mxu0 %v2021
    %2025 = vmatprep.subr.mxu0 0.0
    %2026 = vmatpush1.xpose.msra.mxu0 0.0
    %2027 = vmatprep.subr.mxu0 0.0
    %2028 = vmatpush1.xpose.msra.mxu0 0.0
    %2029 = vmatprep.subr.mxu0 0.0
    %2030 = vmatpush1.xpose.msra.mxu0 0.0
    %2031 = vmatprep.subr.mxu0 0.0
    %2032 = vmatpush1.xpose.msra.mxu0 0.0
    %2033 = vmatprep.subr.mxu0 0.0
    %2034 = vmatpush1.xpose.msra.mxu0 0.0
    %2035 = vmatprep.subr.mxu0 0.0
    %2036 = vmatpush1.xpose.msra.mxu0 0.0
    %2037 = vmatprep.subr.mxu0 0.0
    %2038 = vmatpush1.xpose.msra.mxu0 0.0
    %2039 = vmatprep.subr.mxu0 0.0
    %2040 = vmatpush1.xpose.msra.mxu0 0.0
    %2041 = vmatprep.subr.mxu0 0.0
    %2042 = vmatpush1.xpose.msra.mxu0 0.0
    %2043 = vmatprep.subr.mxu0 0.0
    %2044 = vmatpush1.xpose.msra.mxu0 0.0
    %2045 = vmatprep.subr.mxu0 0.0
    %2046 = vmatpush1.xpose.msra.mxu0 0.0
    %2047 = vmatprep.subr.mxu0 0.0
    %2048 = vmatpush1.xpose.msra.mxu0 0.0
    %2049 = vmatprep.subr.mxu0 0.0
    %2050 = vmatpush1.xpose.msra.mxu0 0.0
    %2051 = vmatprep.subr.mxu0 0.0
    %2052 = vmatpush1.xpose.msra.mxu0 0.0
    %2053 = vmatprep.subr.mxu0 0.0
    %2054 = vmatpush1.xpose.msra.mxu0 0.0
    %2055 = vmatprep.subr.mxu0 0.0
    %2056 = vmatpush1.xpose.msra.mxu0 0.0
    %2057 = vmatprep.subr.mxu0 0.0
    %2058 = vmatpush1.xpose.msra.mxu0 0.0
    %2059 = vmatprep.subr.mxu0 0.0
    %2060 = vmatpush1.xpose.msra.mxu0 0.0
    %2061 = vmatprep.subr.mxu0 0.0
    %2062 = vmatpush1.xpose.msra.mxu0 0.0
    %2063 = vmatprep.subr.mxu0 0.0
    %2064 = vmatpush1.xpose.msra.mxu0 0.0
    %2065 = vmatprep.subr.mxu0 0.0
    %2066 = vmatpush1.xpose.msra.mxu0 0.0
    %2067 = vmatprep.subr.mxu0 0.0
    %2068 = vmatpush1.xpose.msra.mxu0 0.0
    %2069 = vmatprep.subr.mxu0 0.0
    %2070 = vmatpush1.xpose.msra.mxu0 0.0
    %2071 = vmatprep.subr.mxu0 0.0
    %2072 = vmatpush1.xpose.msra.mxu0 0.0
    %2073 = vmatprep.subr.mxu0 0.0
    %2074 = vmatpush1.xpose.msra.mxu0 0.0
    %2075 = vmatprep.subr.mxu0 0.0
    %2076 = vmatpush1.xpose.msra.mxu0 0.0
    %2077 = vmatprep.subr.mxu0 0.0
    %2078 = vmatpush1.xpose.msra.mxu0 0.0
    %2079 = vmatprep.subr.mxu0 0.0
    %2080 = vmatpush1.xpose.msra.mxu0 0.0
    %2081 = vmatprep.subr.mxu0 0.0
    %2082 = vmatpush1.xpose.msra.mxu0 0.0
    %2083 = vmatprep.subr.mxu0 0.0
    %2084 = vmatpush1.xpose.msra.mxu0 0.0
    %2085 = vmatprep.subr.mxu0 0.0
    %2086 = vmatpush1.xpose.msra.mxu0 0.0
    %2087 = vmatprep.mubr.f32.mxu0 0.0
    %2088 = vmatmul.mubr.f32.gmra.mrb[0].mxu0 %v2019
    %v2089 = vpop.f32.mrb[0].mxu0
    %v2090 = vadd.f32 0.0, %v2089
    %v2091 = vpop.f32.mrb[0].mxu0
    %2092 = vdwg.mxu0
    %2093 = vrot.lane.b32.xlu0 %v1930, 96
    %v2094 = vpop.permute.xlu0 %2093
    %v2095 = vsel %vm38, %v1930, 0
    %v2097 = vsel %vm38, %v2094, 0
    %2099 = vmatprep.subr.mxu0 0.0
    %2100 = vmatpush1.xpose.msra.mxu0 %v2097
    %2101 = vmatprep.subr.mxu0 0.0
    %2102 = vmatpush1.xpose.msra.mxu0 0.0
    %2103 = vmatprep.subr.mxu0 0.0
    %2104 = vmatpush1.xpose.msra.mxu0 0.0
    %2105 = vmatprep.subr.mxu0 0.0
    %2106 = vmatpush1.xpose.msra.mxu0 0.0
    %2107 = vmatprep.subr.mxu0 0.0
    %2108 = vmatpush1.xpose.msra.mxu0 0.0
    %2109 = vmatprep.subr.mxu0 0.0
    %2110 = vmatpush1.xpose.msra.mxu0 0.0
    %2111 = vmatprep.subr.mxu0 0.0
    %2112 = vmatpush1.xpose.msra.mxu0 0.0
    %2113 = vmatprep.subr.mxu0 0.0
    %2114 = vmatpush1.xpose.msra.mxu0 0.0
    %2115 = vmatprep.subr.mxu0 0.0
    %2116 = vmatpush1.xpose.msra.mxu0 0.0
    %2117 = vmatprep.subr.mxu0 0.0
    %2118 = vmatpush1.xpose.msra.mxu0 0.0
    %2119 = vmatprep.subr.mxu0 0.0
    %2120 = vmatpush1.xpose.msra.mxu0 0.0
    %2121 = vmatprep.subr.mxu0 0.0
    %2122 = vmatpush1.xpose.msra.mxu0 0.0
    %2123 = vmatprep.subr.mxu0 0.0
    %2124 = vmatpush1.xpose.msra.mxu0 0.0
    %2125 = vmatprep.subr.mxu0 0.0
    %2126 = vmatpush1.xpose.msra.mxu0 0.0
    %2127 = vmatprep.subr.mxu0 0.0
    %2128 = vmatpush1.xpose.msra.mxu0 0.0
    %2129 = vmatprep.subr.mxu0 0.0
    %2130 = vmatpush1.xpose.msra.mxu0 0.0
    %2131 = vmatprep.subr.mxu0 0.0
    %2132 = vmatpush1.xpose.msra.mxu0 0.0
    %2133 = vmatprep.subr.mxu0 0.0
    %2134 = vmatpush1.xpose.msra.mxu0 0.0
    %2135 = vmatprep.subr.mxu0 0.0
    %2136 = vmatpush1.xpose.msra.mxu0 0.0
    %2137 = vmatprep.subr.mxu0 0.0
    %2138 = vmatpush1.xpose.msra.mxu0 0.0
    %2139 = vmatprep.subr.mxu0 0.0
    %2140 = vmatpush1.xpose.msra.mxu0 0.0
    %2141 = vmatprep.subr.mxu0 0.0
    %2142 = vmatpush1.xpose.msra.mxu0 0.0
    %2143 = vmatprep.subr.mxu0 0.0
    %2144 = vmatpush1.xpose.msra.mxu0 0.0
    %2145 = vmatprep.subr.mxu0 0.0
    %2146 = vmatpush1.xpose.msra.mxu0 0.0
    %2147 = vmatprep.subr.mxu0 0.0
    %2148 = vmatpush1.xpose.msra.mxu0 0.0
    %2149 = vmatprep.subr.mxu0 0.0
    %2150 = vmatpush1.xpose.msra.mxu0 0.0
    %2151 = vmatprep.subr.mxu0 0.0
    %2152 = vmatpush1.xpose.msra.mxu0 0.0
    %2153 = vmatprep.subr.mxu0 0.0
    %2154 = vmatpush1.xpose.msra.mxu0 0.0
    %2155 = vmatprep.subr.mxu0 0.0
    %2156 = vmatpush1.xpose.msra.mxu0 0.0
    %2157 = vmatprep.subr.mxu0 0.0
    %2158 = vmatpush1.xpose.msra.mxu0 0.0
    %2159 = vmatprep.subr.mxu0 0.0
    %2160 = vmatpush1.xpose.msra.mxu0 0.0
    %2161 = vmatprep.subr.mxu0 0.0
    %2162 = vmatpush1.xpose.msra.mxu0 0.0
    %2163 = vmatprep.mubr.f32.mxu0 0.0
    %2164 = vmatmul.mubr.f32.gmra.mrb[0].mxu0 %v2095
    %v2165 = vpop.f32.mrb[0].mxu0
    %v2166 = vadd.f32 0.0, %v2165
    %v2167 = vpop.f32.mrb[0].mxu0
    %2168 = vdwg.mxu0
    %2169 = vrot.lane.b32.xlu0 %v1932, 96
    %v2170 = vpop.permute.xlu0 %2169
    %v2171 = vsel %vm38, %v1932, 0
    %v2173 = vsel %vm38, %v2170, 0
    %2175 = vmatprep.subr.mxu0 0.0
    %2176 = vmatpush1.xpose.msra.mxu0 %v2173
    %2177 = vmatprep.subr.mxu0 0.0
    %2178 = vmatpush1.xpose.msra.mxu0 0.0
    %2179 = vmatprep.subr.mxu0 0.0
    %2180 = vmatpush1.xpose.msra.mxu0 0.0
    %2181 = vmatprep.subr.mxu0 0.0
    %2182 = vmatpush1.xpose.msra.mxu0 0.0
    %2183 = vmatprep.subr.mxu0 0.0
    %2184 = vmatpush1.xpose.msra.mxu0 0.0
    %2185 = vmatprep.subr.mxu0 0.0
    %2186 = vmatpush1.xpose.msra.mxu0 0.0
    %2187 = vmatprep.subr.mxu0 0.0
    %2188 = vmatpush1.xpose.msra.mxu0 0.0
    %2189 = vmatprep.subr.mxu0 0.0
    %2190 = vmatpush1.xpose.msra.mxu0 0.0
    %2191 = vmatprep.subr.mxu0 0.0
    %2192 = vmatpush1.xpose.msra.mxu0 0.0
    %2193 = vmatprep.subr.mxu0 0.0
    %2194 = vmatpush1.xpose.msra.mxu0 0.0
    %2195 = vmatprep.subr.mxu0 0.0
    %2196 = vmatpush1.xpose.msra.mxu0 0.0
    %2197 = vmatprep.subr.mxu0 0.0
    %2198 = vmatpush1.xpose.msra.mxu0 0.0
    %2199 = vmatprep.subr.mxu0 0.0
    %2200 = vmatpush1.xpose.msra.mxu0 0.0
    %2201 = vmatprep.subr.mxu0 0.0
    %2202 = vmatpush1.xpose.msra.mxu0 0.0
    %2203 = vmatprep.subr.mxu0 0.0
    %2204 = vmatpush1.xpose.msra.mxu0 0.0
    %2205 = vmatprep.subr.mxu0 0.0
    %2206 = vmatpush1.xpose.msra.mxu0 0.0
    %2207 = vmatprep.subr.mxu0 0.0
    %2208 = vmatpush1.xpose.msra.mxu0 0.0
    %2209 = vmatprep.subr.mxu0 0.0
    %2210 = vmatpush1.xpose.msra.mxu0 0.0
    %2211 = vmatprep.subr.mxu0 0.0
    %2212 = vmatpush1.xpose.msra.mxu0 0.0
    %2213 = vmatprep.subr.mxu0 0.0
    %2214 = vmatpush1.xpose.msra.mxu0 0.0
    %2215 = vmatprep.subr.mxu0 0.0
    %2216 = vmatpush1.xpose.msra.mxu0 0.0
    %2217 = vmatprep.subr.mxu0 0.0
    %2218 = vmatpush1.xpose.msra.mxu0 0.0
    %2219 = vmatprep.subr.mxu0 0.0
    %2220 = vmatpush1.xpose.msra.mxu0 0.0
    %2221 = vmatprep.subr.mxu0 0.0
    %2222 = vmatpush1.xpose.msra.mxu0 0.0
    %2223 = vmatprep.subr.mxu0 0.0
    %2224 = vmatpush1.xpose.msra.mxu0 0.0
    %2225 = vmatprep.subr.mxu0 0.0
    %2226 = vmatpush1.xpose.msra.mxu0 0.0
    %2227 = vmatprep.subr.mxu0 0.0
    %2228 = vmatpush1.xpose.msra.mxu0 0.0
    %2229 = vmatprep.subr.mxu0 0.0
    %2230 = vmatpush1.xpose.msra.mxu0 0.0
    %2231 = vmatprep.subr.mxu0 0.0
    %2232 = vmatpush1.xpose.msra.mxu0 0.0
    %2233 = vmatprep.subr.mxu0 0.0
    %2234 = vmatpush1.xpose.msra.mxu0 0.0
    %2235 = vmatprep.subr.mxu0 0.0
    %2236 = vmatpush1.xpose.msra.mxu0 0.0
    %2237 = vmatprep.subr.mxu0 0.0
    %2238 = vmatpush1.xpose.msra.mxu0 0.0
    %2239 = vmatprep.mubr.f32.mxu0 0.0
    %2240 = vmatmul.mubr.f32.gmra.mrb[0].mxu0 %v2171
    %v2241 = vpop.f32.mrb[0].mxu0
    %v2242 = vadd.f32 0.0, %v2241
    %v2243 = vpop.f32.mrb[0].mxu0
    %2244 = vdwg.mxu0
    %2245 = vrot.lane.b32.xlu0 %v1934, 96
    %v2246 = vpop.permute.xlu0 %2245
    %v2247 = vsel %vm38, %v1934, 0
    %v2249 = vsel %vm38, %v2246, 0
    %2251 = vmatprep.subr.mxu0 0.0
    %2252 = vmatpush1.xpose.msra.mxu0 %v2249
    %2253 = vmatprep.subr.mxu0 0.0
    %2254 = vmatpush1.xpose.msra.mxu0 0.0
    %2255 = vmatprep.subr.mxu0 0.0
    %2256 = vmatpush1.xpose.msra.mxu0 0.0
    %2257 = vmatprep.subr.mxu0 0.0
    %2258 = vmatpush1.xpose.msra.mxu0 0.0
    %2259 = vmatprep.subr.mxu0 0.0
    %2260 = vmatpush1.xpose.msra.mxu0 0.0
    %2261 = vmatprep.subr.mxu0 0.0
    %2262 = vmatpush1.xpose.msra.mxu0 0.0
    %2263 = vmatprep.subr.mxu0 0.0
    %2264 = vmatpush1.xpose.msra.mxu0 0.0
    %2265 = vmatprep.subr.mxu0 0.0
    %2266 = vmatpush1.xpose.msra.mxu0 0.0
    %2267 = vmatprep.subr.mxu0 0.0
    %2268 = vmatpush1.xpose.msra.mxu0 0.0
    %2269 = vmatprep.subr.mxu0 0.0
    %2270 = vmatpush1.xpose.msra.mxu0 0.0
    %2271 = vmatprep.subr.mxu0 0.0
    %2272 = vmatpush1.xpose.msra.mxu0 0.0
    %2273 = vmatprep.subr.mxu0 0.0
    %2274 = vmatpush1.xpose.msra.mxu0 0.0
    %2275 = vmatprep.subr.mxu0 0.0
    %2276 = vmatpush1.xpose.msra.mxu0 0.0
    %2277 = vmatprep.subr.mxu0 0.0
    %2278 = vmatpush1.xpose.msra.mxu0 0.0
    %2279 = vmatprep.subr.mxu0 0.0
    %2280 = vmatpush1.xpose.msra.mxu0 0.0
    %2281 = vmatprep.subr.mxu0 0.0
    %2282 = vmatpush1.xpose.msra.mxu0 0.0
    %2283 = vmatprep.subr.mxu0 0.0
    %2284 = vmatpush1.xpose.msra.mxu0 0.0
    %2285 = vmatprep.subr.mxu0 0.0
    %2286 = vmatpush1.xpose.msra.mxu0 0.0
    %2287 = vmatprep.subr.mxu0 0.0
    %2288 = vmatpush1.xpose.msra.mxu0 0.0
    %2289 = vmatprep.subr.mxu0 0.0
    %2290 = vmatpush1.xpose.msra.mxu0 0.0
    %2291 = vmatprep.subr.mxu0 0.0
    %2292 = vmatpush1.xpose.msra.mxu0 0.0
    %2293 = vmatprep.subr.mxu0 0.0
    %2294 = vmatpush1.xpose.msra.mxu0 0.0
    %2295 = vmatprep.subr.mxu0 0.0
    %2296 = vmatpush1.xpose.msra.mxu0 0.0
    %2297 = vmatprep.subr.mxu0 0.0
    %2298 = vmatpush1.xpose.msra.mxu0 0.0
    %2299 = vmatprep.subr.mxu0 0.0
    %2300 = vmatpush1.xpose.msra.mxu0 0.0
    %2301 = vmatprep.subr.mxu0 0.0
    %2302 = vmatpush1.xpose.msra.mxu0 0.0
    %2303 = vmatprep.subr.mxu0 0.0
    %2304 = vmatpush1.xpose.msra.mxu0 0.0
    %2305 = vmatprep.subr.mxu0 0.0
    %2306 = vmatpush1.xpose.msra.mxu0 0.0
    %2307 = vmatprep.subr.mxu0 0.0
    %2308 = vmatpush1.xpose.msra.mxu0 0.0
    %2309 = vmatprep.subr.mxu0 0.0
    %2310 = vmatpush1.xpose.msra.mxu0 0.0
    %2311 = vmatprep.subr.mxu0 0.0
    %2312 = vmatpush1.xpose.msra.mxu0 0.0
    %2313 = vmatprep.subr.mxu0 0.0
    %2314 = vmatpush1.xpose.msra.mxu0 0.0
    %2315 = vmatprep.mubr.f32.mxu0 0.0
    %2316 = vmatmul.mubr.f32.gmra.mrb[0].mxu0 %v2247
    %v2317 = vpop.f32.mrb[0].mxu0
    %v2318 = vadd.f32 0.0, %v2317
    %v2319 = vpop.f32.mrb[0].mxu0
    %2320 = vdwg.mxu0
    %2321 = vrot.lane.b32.xlu0 %v1936, 96
    %v2322 = vpop.permute.xlu0 %2321
    %v2323 = vsel %vm38, %v1936, 0
    %v2325 = vsel %vm38, %v2322, 0
    %2327 = vmatprep.subr.mxu0 0.0
    %2328 = vmatpush1.xpose.msra.mxu0 %v2325
    %2329 = vmatprep.subr.mxu0 0.0
    %2330 = vmatpush1.xpose.msra.mxu0 0.0
    %2331 = vmatprep.subr.mxu0 0.0
    %2332 = vmatpush1.xpose.msra.mxu0 0.0
    %2333 = vmatprep.subr.mxu0 0.0
    %2334 = vmatpush1.xpose.msra.mxu0 0.0
    %2335 = vmatprep.subr.mxu0 0.0
    %2336 = vmatpush1.xpose.msra.mxu0 0.0
    %2337 = vmatprep.subr.mxu0 0.0
    %2338 = vmatpush1.xpose.msra.mxu0 0.0
    %2339 = vmatprep.subr.mxu0 0.0
    %2340 = vmatpush1.xpose.msra.mxu0 0.0
    %2341 = vmatprep.subr.mxu0 0.0
    %2342 = vmatpush1.xpose.msra.mxu0 0.0
    %2343 = vmatprep.subr.mxu0 0.0
    %2344 = vmatpush1.xpose.msra.mxu0 0.0
    %2345 = vmatprep.subr.mxu0 0.0
    %2346 = vmatpush1.xpose.msra.mxu0 0.0
    %2347 = vmatprep.subr.mxu0 0.0
    %2348 = vmatpush1.xpose.msra.mxu0 0.0
    %2349 = vmatprep.subr.mxu0 0.0
    %2350 = vmatpush1.xpose.msra.mxu0 0.0
    %2351 = vmatprep.subr.mxu0 0.0
    %2352 = vmatpush1.xpose.msra.mxu0 0.0
    %2353 = vmatprep.subr.mxu0 0.0
    %2354 = vmatpush1.xpose.msra.mxu0 0.0
    %2355 = vmatprep.subr.mxu0 0.0
    %2356 = vmatpush1.xpose.msra.mxu0 0.0
    %2357 = vmatprep.subr.mxu0 0.0
    %2358 = vmatpush1.xpose.msra.mxu0 0.0
    %2359 = vmatprep.subr.mxu0 0.0
    %2360 = vmatpush1.xpose.msra.mxu0 0.0
    %2361 = vmatprep.subr.mxu0 0.0
    %2362 = vmatpush1.xpose.msra.mxu0 0.0
    %2363 = vmatprep.subr.mxu0 0.0
    %2364 = vmatpush1.xpose.msra.mxu0 0.0
    %2365 = vmatprep.subr.mxu0 0.0
    %2366 = vmatpush1.xpose.msra.mxu0 0.0
    %2367 = vmatprep.subr.mxu0 0.0
    %2368 = vmatpush1.xpose.msra.mxu0 0.0
    %2369 = vmatprep.subr.mxu0 0.0
    %2370 = vmatpush1.xpose.msra.mxu0 0.0
    %2371 = vmatprep.subr.mxu0 0.0
    %2372 = vmatpush1.xpose.msra.mxu0 0.0
    %2373 = vmatprep.subr.mxu0 0.0
    %2374 = vmatpush1.xpose.msra.mxu0 0.0
    %2375 = vmatprep.subr.mxu0 0.0
    %2376 = vmatpush1.xpose.msra.mxu0 0.0
    %2377 = vmatprep.subr.mxu0 0.0
    %2378 = vmatpush1.xpose.msra.mxu0 0.0
    %2379 = vmatprep.subr.mxu0 0.0
    %2380 = vmatpush1.xpose.msra.mxu0 0.0
    %2381 = vmatprep.subr.mxu0 0.0
    %2382 = vmatpush1.xpose.msra.mxu0 0.0
    %2383 = vmatprep.subr.mxu0 0.0
    %2384 = vmatpush1.xpose.msra.mxu0 0.0
    %2385 = vmatprep.subr.mxu0 0.0
    %2386 = vmatpush1.xpose.msra.mxu0 0.0
    %2387 = vmatprep.subr.mxu0 0.0
    %2388 = vmatpush1.xpose.msra.mxu0 0.0
    %2389 = vmatprep.subr.mxu0 0.0
    %2390 = vmatpush1.xpose.msra.mxu0 0.0
    %2391 = vmatprep.mubr.f32.mxu0 0.0
    %2392 = vmatmul.mubr.f32.gmra.mrb[0].mxu0 %v2323
    %v2393 = vpop.f32.mrb[0].mxu0
    %v2394 = vadd.f32 0.0, %v2393
    %v2395 = vpop.f32.mrb[0].mxu0
    %2396 = vdwg.mxu0
    %2397 = vrot.lane.b32.xlu0 %v1938, 96
    %v2398 = vpop.permute.xlu0 %2397
    %v2399 = vsel %vm38, %v1938, 0
    %v2401 = vsel %vm38, %v2398, 0
    %2403 = vmatprep.subr.mxu0 0.0
    %2404 = vmatpush1.xpose.msra.mxu0 %v2401
    %2405 = vmatprep.subr.mxu0 0.0
    %2406 = vmatpush1.xpose.msra.mxu0 0.0
    %2407 = vmatprep.subr.mxu0 0.0
    %2408 = vmatpush1.xpose.msra.mxu0 0.0
    %2409 = vmatprep.subr.mxu0 0.0
    %2410 = vmatpush1.xpose.msra.mxu0 0.0
    %2411 = vmatprep.subr.mxu0 0.0
    %2412 = vmatpush1.xpose.msra.mxu0 0.0
    %2413 = vmatprep.subr.mxu0 0.0
    %2414 = vmatpush1.xpose.msra.mxu0 0.0
    %2415 = vmatprep.subr.mxu0 0.0
    %2416 = vmatpush1.xpose.msra.mxu0 0.0
    %2417 = vmatprep.subr.mxu0 0.0
    %2418 = vmatpush1.xpose.msra.mxu0 0.0
    %2419 = vmatprep.subr.mxu0 0.0
    %2420 = vmatpush1.xpose.msra.mxu0 0.0
    %2421 = vmatprep.subr.mxu0 0.0
    %2422 = vmatpush1.xpose.msra.mxu0 0.0
    %2423 = vmatprep.subr.mxu0 0.0
    %2424 = vmatpush1.xpose.msra.mxu0 0.0
    %2425 = vmatprep.subr.mxu0 0.0
    %2426 = vmatpush1.xpose.msra.mxu0 0.0
    %2427 = vmatprep.subr.mxu0 0.0
    %2428 = vmatpush1.xpose.msra.mxu0 0.0
    %2429 = vmatprep.subr.mxu0 0.0
    %2430 = vmatpush1.xpose.msra.mxu0 0.0
    %2431 = vmatprep.subr.mxu0 0.0
    %2432 = vmatpush1.xpose.msra.mxu0 0.0
    %2433 = vmatprep.subr.mxu0 0.0
    %2434 = vmatpush1.xpose.msra.mxu0 0.0
    %2435 = vmatprep.subr.mxu0 0.0
    %2436 = vmatpush1.xpose.msra.mxu0 0.0
    %2437 = vmatprep.subr.mxu0 0.0
    %2438 = vmatpush1.xpose.msra.mxu0 0.0
    %2439 = vmatprep.subr.mxu0 0.0
    %2440 = vmatpush1.xpose.msra.mxu0 0.0
    %2441 = vmatprep.subr.mxu0 0.0
    %2442 = vmatpush1.xpose.msra.mxu0 0.0
    %2443 = vmatprep.subr.mxu0 0.0
    %2444 = vmatpush1.xpose.msra.mxu0 0.0
    %2445 = vmatprep.subr.mxu0 0.0
    %2446 = vmatpush1.xpose.msra.mxu0 0.0
    %2447 = vmatprep.subr.mxu0 0.0
    %2448 = vmatpush1.xpose.msra.mxu0 0.0
    %2449 = vmatprep.subr.mxu0 0.0
    %2450 = vmatpush1.xpose.msra.mxu0 0.0
    %2451 = vmatprep.subr.mxu0 0.0
    %2452 = vmatpush1.xpose.msra.mxu0 0.0
    %2453 = vmatprep.subr.mxu0 0.0
    %2454 = vmatpush1.xpose.msra.mxu0 0.0
    %2455 = vmatprep.subr.mxu0 0.0
    %2456 = vmatpush1.xpose.msra.mxu0 0.0
    %2457 = vmatprep.subr.mxu0 0.0
    %2458 = vmatpush1.xpose.msra.mxu0 0.0
    %2459 = vmatprep.subr.mxu0 0.0
    %2460 = vmatpush1.xpose.msra.mxu0 0.0
    %2461 = vmatprep.subr.mxu0 0.0
    %2462 = vmatpush1.xpose.msra.mxu0 0.0
    %2463 = vmatprep.subr.mxu0 0.0
    %2464 = vmatpush1.xpose.msra.mxu0 0.0
    %2465 = vmatprep.subr.mxu0 0.0
    %2466 = vmatpush1.xpose.msra.mxu0 0.0
    %2467 = vmatprep.mubr.f32.mxu0 0.0
    %2468 = vmatmul.mubr.f32.gmra.mrb[0].mxu0 %v2399
    %v2469 = vpop.f32.mrb[0].mxu0
    %v2470 = vadd.f32 0.0, %v2469
    %v2471 = vpop.f32.mrb[0].mxu0
    %2472 = vdwg.mxu0
    %2473 = vrot.lane.b32.xlu0 %v1940, 96
    %v2474 = vpop.permute.xlu0 %2473
    %v2475 = vsel %vm38, %v1940, 0
    %v2477 = vsel %vm38, %v2474, 0
    %2479 = vmatprep.subr.mxu0 0.0
    %2480 = vmatpush1.xpose.msra.mxu0 %v2477
    %2481 = vmatprep.subr.mxu0 0.0
    %2482 = vmatpush1.xpose.msra.mxu0 0.0
    %2483 = vmatprep.subr.mxu0 0.0
    %2484 = vmatpush1.xpose.msra.mxu0 0.0
    %2485 = vmatprep.subr.mxu0 0.0
    %2486 = vmatpush1.xpose.msra.mxu0 0.0
    %2487 = vmatprep.subr.mxu0 0.0
    %2488 = vmatpush1.xpose.msra.mxu0 0.0
    %2489 = vmatprep.subr.mxu0 0.0
    %2490 = vmatpush1.xpose.msra.mxu0 0.0
    %2491 = vmatprep.subr.mxu0 0.0
    %2492 = vmatpush1.xpose.msra.mxu0 0.0
    %2493 = vmatprep.subr.mxu0 0.0
    %2494 = vmatpush1.xpose.msra.mxu0 0.0
    %2495 = vmatprep.subr.mxu0 0.0
    %2496 = vmatpush1.xpose.msra.mxu0 0.0
    %2497 = vmatprep.subr.mxu0 0.0
    %2498 = vmatpush1.xpose.msra.mxu0 0.0
    %2499 = vmatprep.subr.mxu0 0.0
    %2500 = vmatpush1.xpose.msra.mxu0 0.0
    %2501 = vmatprep.subr.mxu0 0.0
    %2502 = vmatpush1.xpose.msra.mxu0 0.0
    %2503 = vmatprep.subr.mxu0 0.0
    %2504 = vmatpush1.xpose.msra.mxu0 0.0
    %2505 = vmatprep.subr.mxu0 0.0
    %2506 = vmatpush1.xpose.msra.mxu0 0.0
    %2507 = vmatprep.subr.mxu0 0.0
    %2508 = vmatpush1.xpose.msra.mxu0 0.0
    %2509 = vmatprep.subr.mxu0 0.0
    %2510 = vmatpush1.xpose.msra.mxu0 0.0
    %2511 = vmatprep.subr.mxu0 0.0
    %2512 = vmatpush1.xpose.msra.mxu0 0.0
    %2513 = vmatprep.subr.mxu0 0.0
    %2514 = vmatpush1.xpose.msra.mxu0 0.0
    %2515 = vmatprep.subr.mxu0 0.0
    %2516 = vmatpush1.xpose.msra.mxu0 0.0
    %2517 = vmatprep.subr.mxu0 0.0
    %2518 = vmatpush1.xpose.msra.mxu0 0.0
    %2519 = vmatprep.subr.mxu0 0.0
    %2520 = vmatpush1.xpose.msra.mxu0 0.0
    %2521 = vmatprep.subr.mxu0 0.0
    %2522 = vmatpush1.xpose.msra.mxu0 0.0
    %2523 = vmatprep.subr.mxu0 0.0
    %2524 = vmatpush1.xpose.msra.mxu0 0.0
    %2525 = vmatprep.subr.mxu0 0.0
    %2526 = vmatpush1.xpose.msra.mxu0 0.0
    %2527 = vmatprep.subr.mxu0 0.0
    %2528 = vmatpush1.xpose.msra.mxu0 0.0
    %2529 = vmatprep.subr.mxu0 0.0
    %2530 = vmatpush1.xpose.msra.mxu0 0.0
    %2531 = vmatprep.subr.mxu0 0.0
    %2532 = vmatpush1.xpose.msra.mxu0 0.0
    %2533 = vmatprep.subr.mxu0 0.0
    %2534 = vmatpush1.xpose.msra.mxu0 0.0
    %2535 = vmatprep.subr.mxu0 0.0
    %2536 = vmatpush1.xpose.msra.mxu0 0.0
    %2537 = vmatprep.subr.mxu0 0.0
    %2538 = vmatpush1.xpose.msra.mxu0 0.0
    %2539 = vmatprep.subr.mxu0 0.0
    %2540 = vmatpush1.xpose.msra.mxu0 0.0
    %2541 = vmatprep.subr.mxu0 0.0
    %2542 = vmatpush1.xpose.msra.mxu0 0.0
    %2543 = vmatprep.mubr.f32.mxu0 0.0
    %2544 = vmatmul.mubr.f32.gmra.mrb[0].mxu0 %v2475
    %v2545 = vpop.f32.mrb[0].mxu0
    %v2546 = vadd.f32 0.0, %v2545
    %v2547 = vpop.f32.mrb[0].mxu0
    %2548 = vdwg.mxu0
    %v2549 = vmul.f32 %v2014, 0.35355338
    %v2550 = vmul.f32 %v2090, 0.35355338
    %v2551 = vmul.f32 %v2166, 0.35355338
    %v2552 = vmul.f32 %v2242, 0.35355338
    %v2553 = vmul.f32 %v2318, 0.35355338
    %v2554 = vmul.f32 %v2394, 0.35355338
    %v2555 = vmul.f32 %v2470, 0.35355338
    %v2556 = vmul.f32 %v2546, 0.35355338
    %v2557 = vsel %vm38, %v2549, -inf
    %2558 = vmax.xlane.f32.xlu0 %v2557
    %v2559 = vpop.xlane.xlu0 %2558
    %v2560 = vsel %vm38, %v2550, -inf
    %2561 = vmax.xlane.f32.xlu0 %v2560
    %v2562 = vpop.xlane.xlu0 %2561
    %v2563 = vsel %vm38, %v2551, -inf
    %2564 = vmax.xlane.f32.xlu0 %v2563
    %v2565 = vpop.xlane.xlu0 %2564
    %v2566 = vsel %vm38, %v2552, -inf
    %2567 = vmax.xlane.f32.xlu0 %v2566
    %v2568 = vpop.xlane.xlu0 %2567
    %v2569 = vsel %vm38, %v2553, -inf
    %2570 = vmax.xlane.f32.xlu0 %v2569
    %v2571 = vpop.xlane.xlu0 %2570
    %v2572 = vsel %vm38, %v2554, -inf
    %2573 = vmax.xlane.f32.xlu0 %v2572
    %v2574 = vpop.xlane.xlu0 %2573
    %v2575 = vsel %vm38, %v2555, -inf
    %2576 = vmax.xlane.f32.xlu0 %v2575
    %v2577 = vpop.xlane.xlu0 %2576
    %v2578 = vsel %vm38, %v2556, -inf
    %2579 = vmax.xlane.f32.xlu0 %v2578
    %v2580 = vpop.xlane.xlu0 %2579
    %v2581 = vsub.f32 %v2549, %v2559
    %v2582 = vsub.f32 %v2550, %v2562
    %v2583 = vsub.f32 %v2551, %v2565
    %v2584 = vsub.f32 %v2552, %v2568
    %v2585 = vsub.f32 %v2553, %v2571
    %v2586 = vsub.f32 %v2554, %v2574
    %v2587 = vsub.f32 %v2555, %v2577
    %v2588 = vsub.f32 %v2556, %v2580
    %v2589 = vmul.f32 %v2581, 1.442695
    %v2590 = vpow.pop %v2589
    %v2591 = vmul.f32 %v2582, 1.442695
    %v2592 = vpow.pop %v2591
    %v2593 = vmul.f32 %v2583, 1.442695
    %v2594 = vpow.pop %v2593
    %v2595 = vmul.f32 %v2584, 1.442695
    %v2596 = vpow.pop %v2595
    %v2597 = vmul.f32 %v2585, 1.442695
    %v2598 = vpow.pop %v2597
    %v2599 = vmul.f32 %v2586, 1.442695
    %v2600 = vpow.pop %v2599
    %v2601 = vmul.f32 %v2587, 1.442695
    %v2602 = vpow.pop %v2601
    %v2603 = vmul.f32 %v2588, 1.442695
    %v2604 = vpow.pop %v2603
    %v2605 = vsel %vm38, %v2590, 0.0
    %2606 = vadd.xlane.f32.xlu0 %v2605
    %v2607 = vpop.xlane.xlu0 %2606
    %v2608 = vsel %vm38, %v2592, 0.0
    %2609 = vadd.xlane.f32.xlu0 %v2608
    %v2610 = vpop.xlane.xlu0 %2609
    %v2611 = vsel %vm38, %v2594, 0.0
    %2612 = vadd.xlane.f32.xlu0 %v2611
    %v2613 = vpop.xlane.xlu0 %2612
    %v2614 = vsel %vm38, %v2596, 0.0
    %2615 = vadd.xlane.f32.xlu0 %v2614
    %v2616 = vpop.xlane.xlu0 %2615
    %v2617 = vsel %vm38, %v2598, 0.0
    %2618 = vadd.xlane.f32.xlu0 %v2617
    %v2619 = vpop.xlane.xlu0 %2618
    %v2620 = vsel %vm38, %v2600, 0.0
    %2621 = vadd.xlane.f32.xlu0 %v2620
    %v2622 = vpop.xlane.xlu0 %2621
    %v2623 = vsel %vm38, %v2602, 0.0
    %2624 = vadd.xlane.f32.xlu0 %v2623
    %v2625 = vpop.xlane.xlu0 %2624
    %v2626 = vsel %vm38, %v2604, 0.0
    %2627 = vadd.xlane.f32.xlu0 %v2626
    %v2628 = vpop.xlane.xlu0 %2627
    %v2629 = vrcp.pop %v2607
    %v2630 = vrcp.pop %v2610
    %v2631 = vrcp.pop %v2613
    %v2632 = vrcp.pop %v2616
    %v2633 = vrcp.pop %v2619
    %v2634 = vrcp.pop %v2622
    %v2635 = vrcp.pop %v2625
    %v2636 = vrcp.pop %v2628
    %v2637 = vmul.f32 %v2590, %v2629
    %v2638 = vmul.f32 %v2592, %v2630
    %v2639 = vmul.f32 %v2594, %v2631
    %v2640 = vmul.f32 %v2596, %v2632
    %v2641 = vmul.f32 %v2598, %v2633
    %v2642 = vmul.f32 %v2600, %v2634
    %v2643 = vmul.f32 %v2602, %v2635
    %v2644 = vmul.f32 %v2604, %v2636
    %2645 = vrot.lane.b32.xlu0 %v1921, 64
    %v2646 = vpop.permute.xlu0 %2645
    %v2649 = vsel %vm38, %v2637, 0
    %2651 = vmatprep.subr.mxu0 0.0
    %2652 = vmatpush1.msra.mxu0 %v2646
    %2653 = vmatprep.subr.mxu0 0.0
    %2654 = vmatpush1.msra.mxu0 0.0
    %2655 = vmatprep.subr.mxu0 0.0
    %2656 = vmatpush1.msra.mxu0 0.0
    %2657 = vmatprep.subr.mxu0 0.0
    %2658 = vmatpush1.msra.mxu0 0.0
    %2659 = vmatprep.subr.mxu0 0.0
    %2660 = vmatpush1.msra.mxu0 0.0
    %2661 = vmatprep.subr.mxu0 0.0
    %2662 = vmatpush1.msra.mxu0 0.0
    %2663 = vmatprep.subr.mxu0 0.0
    %2664 = vmatpush1.msra.mxu0 0.0
    %2665 = vmatprep.subr.mxu0 0.0
    %2666 = vmatpush1.msra.mxu0 0.0
    %2667 = vmatprep.subr.mxu0 0.0
    %2668 = vmatpush1.msra.mxu0 0.0
    %2669 = vmatprep.subr.mxu0 0.0
    %2670 = vmatpush1.msra.mxu0 0.0
    %2671 = vmatprep.subr.mxu0 0.0
    %2672 = vmatpush1.msra.mxu0 0.0
    %2673 = vmatprep.subr.mxu0 0.0
    %2674 = vmatpush1.msra.mxu0 0.0
    %2675 = vmatprep.subr.mxu0 0.0
    %2676 = vmatpush1.msra.mxu0 0.0
    %2677 = vmatprep.subr.mxu0 0.0
    %2678 = vmatpush1.msra.mxu0 0.0
    %2679 = vmatprep.subr.mxu0 0.0
    %2680 = vmatpush1.msra.mxu0 0.0
    %2681 = vmatprep.subr.mxu0 0.0
    %2682 = vmatpush1.msra.mxu0 0.0
    %2683 = vmatprep.subr.mxu0 0.0
    %2684 = vmatpush1.msra.mxu0 0.0
    %2685 = vmatprep.subr.mxu0 0.0
    %2686 = vmatpush1.msra.mxu0 0.0
    %2687 = vmatprep.subr.mxu0 0.0
    %2688 = vmatpush1.msra.mxu0 0.0
    %2689 = vmatprep.subr.mxu0 0.0
    %2690 = vmatpush1.msra.mxu0 0.0
    %2691 = vmatprep.subr.mxu0 0.0
    %2692 = vmatpush1.msra.mxu0 0.0
    %2693 = vmatprep.subr.mxu0 0.0
    %2694 = vmatpush1.msra.mxu0 0.0
    %2695 = vmatprep.subr.mxu0 0.0
    %2696 = vmatpush1.msra.mxu0 0.0
    %2697 = vmatprep.subr.mxu0 0.0
    %2698 = vmatpush1.msra.mxu0 0.0
    %2699 = vmatprep.subr.mxu0 0.0
    %2700 = vmatpush1.msra.mxu0 0.0
    %2701 = vmatprep.subr.mxu0 0.0
    %2702 = vmatpush1.msra.mxu0 0.0
    %2703 = vmatprep.subr.mxu0 0.0
    %2704 = vmatpush1.msra.mxu0 0.0
    %2705 = vmatprep.subr.mxu0 0.0
    %2706 = vmatpush1.msra.mxu0 0.0
    %2707 = vmatprep.subr.mxu0 0.0
    %2708 = vmatpush1.msra.mxu0 0.0
    %2709 = vmatprep.subr.mxu0 0.0
    %2710 = vmatpush1.msra.mxu0 0.0
    %2711 = vmatprep.subr.mxu0 0.0
    %2712 = vmatpush1.msra.mxu0 0.0
    %2713 = vmatprep.subr.mxu0 0.0
    %2714 = vmatpush1.msra.mxu0 0.0
    %2715 = vmatprep.mubr.f32.mxu0 0.0
    %2716 = vmatmul.mubr.f32.gmra.mrb[0].mxu0 %v2649
    %v2717 = vpop.f32.mrb[0].mxu0
    %v2718 = vadd.f32 0.0, %v2717
    %v2719 = vpop.f32.mrb[0].mxu0
    %2720 = vdwg.mxu0
    %2721 = vrot.lane.b32.xlu0 %v1924, 64
    %v2722 = vpop.permute.xlu0 %2721
    %v2725 = vsel %vm38, %v2638, 0
    %2727 = vmatprep.subr.mxu0 0.0
    %2728 = vmatpush1.msra.mxu0 %v2722
    %2729 = vmatprep.subr.mxu0 0.0
    %2730 = vmatpush1.msra.mxu0 0.0
    %2731 = vmatprep.subr.mxu0 0.0
    %2732 = vmatpush1.msra.mxu0 0.0
    %2733 = vmatprep.subr.mxu0 0.0
    %2734 = vmatpush1.msra.mxu0 0.0
    %2735 = vmatprep.subr.mxu0 0.0
    %2736 = vmatpush1.msra.mxu0 0.0
    %2737 = vmatprep.subr.mxu0 0.0
    %2738 = vmatpush1.msra.mxu0 0.0
    %2739 = vmatprep.subr.mxu0 0.0
    %2740 = vmatpush1.msra.mxu0 0.0
    %2741 = vmatprep.subr.mxu0 0.0
    %2742 = vmatpush1.msra.mxu0 0.0
    %2743 = vmatprep.subr.mxu0 0.0
    %2744 = vmatpush1.msra.mxu0 0.0
    %2745 = vmatprep.subr.mxu0 0.0
    %2746 = vmatpush1.msra.mxu0 0.0
    %2747 = vmatprep.subr.mxu0 0.0
    %2748 = vmatpush1.msra.mxu0 0.0
    %2749 = vmatprep.subr.mxu0 0.0
    %2750 = vmatpush1.msra.mxu0 0.0
    %2751 = vmatprep.subr.mxu0 0.0
    %2752 = vmatpush1.msra.mxu0 0.0
    %2753 = vmatprep.subr.mxu0 0.0
    %2754 = vmatpush1.msra.mxu0 0.0
    %2755 = vmatprep.subr.mxu0 0.0
    %2756 = vmatpush1.msra.mxu0 0.0
    %2757 = vmatprep.subr.mxu0 0.0
    %2758 = vmatpush1.msra.mxu0 0.0
    %2759 = vmatprep.subr.mxu0 0.0
    %2760 = vmatpush1.msra.mxu0 0.0
    %2761 = vmatprep.subr.mxu0 0.0
    %2762 = vmatpush1.msra.mxu0 0.0
    %2763 = vmatprep.subr.mxu0 0.0
    %2764 = vmatpush1.msra.mxu0 0.0
    %2765 = vmatprep.subr.mxu0 0.0
    %2766 = vmatpush1.msra.mxu0 0.0
    %2767 = vmatprep.subr.mxu0 0.0
    %2768 = vmatpush1.msra.mxu0 0.0
    %2769 = vmatprep.subr.mxu0 0.0
    %2770 = vmatpush1.msra.mxu0 0.0
    %2771 = vmatprep.subr.mxu0 0.0
    %2772 = vmatpush1.msra.mxu0 0.0
    %2773 = vmatprep.subr.mxu0 0.0
    %2774 = vmatpush1.msra.mxu0 0.0
    %2775 = vmatprep.subr.mxu0 0.0
    %2776 = vmatpush1.msra.mxu0 0.0
    %2777 = vmatprep.subr.mxu0 0.0
    %2778 = vmatpush1.msra.mxu0 0.0
    %2779 = vmatprep.subr.mxu0 0.0
    %2780 = vmatpush1.msra.mxu0 0.0
    %2781 = vmatprep.subr.mxu0 0.0
    %2782 = vmatpush1.msra.mxu0 0.0
    %2783 = vmatprep.subr.mxu0 0.0
    %2784 = vmatpush1.msra.mxu0 0.0
    %2785 = vmatprep.subr.mxu0 0.0
    %2786 = vmatpush1.msra.mxu0 0.0
    %2787 = vmatprep.subr.mxu0 0.0
    %2788 = vmatpush1.msra.mxu0 0.0
    %2789 = vmatprep.subr.mxu0 0.0
    %2790 = vmatpush1.msra.mxu0 0.0
    %2791 = vmatprep.mubr.f32.mxu0 0.0
    %2792 = vmatmul.mubr.f32.gmra.mrb[0].mxu0 %v2725
    %v2793 = vpop.f32.mrb[0].mxu0
    %v2794 = vadd.f32 0.0, %v2793
    %v2795 = vpop.f32.mrb[0].mxu0
    %2796 = vdwg.mxu0
    %2797 = vrot.lane.b32.xlu0 %v1930, 64
    %v2798 = vpop.permute.xlu0 %2797
    %v2801 = vsel %vm38, %v2639, 0
    %2803 = vmatprep.subr.mxu0 0.0
    %2804 = vmatpush1.msra.mxu0 %v2798
    %2805 = vmatprep.subr.mxu0 0.0
    %2806 = vmatpush1.msra.mxu0 0.0
    %2807 = vmatprep.subr.mxu0 0.0
    %2808 = vmatpush1.msra.mxu0 0.0
    %2809 = vmatprep.subr.mxu0 0.0
    %2810 = vmatpush1.msra.mxu0 0.0
    %2811 = vmatprep.subr.mxu0 0.0
    %2812 = vmatpush1.msra.mxu0 0.0
    %2813 = vmatprep.subr.mxu0 0.0
    %2814 = vmatpush1.msra.mxu0 0.0
    %2815 = vmatprep.subr.mxu0 0.0
    %2816 = vmatpush1.msra.mxu0 0.0
    %2817 = vmatprep.subr.mxu0 0.0
    %2818 = vmatpush1.msra.mxu0 0.0
    %2819 = vmatprep.subr.mxu0 0.0
    %2820 = vmatpush1.msra.mxu0 0.0
    %2821 = vmatprep.subr.mxu0 0.0
    %2822 = vmatpush1.msra.mxu0 0.0
    %2823 = vmatprep.subr.mxu0 0.0
    %2824 = vmatpush1.msra.mxu0 0.0
    %2825 = vmatprep.subr.mxu0 0.0
    %2826 = vmatpush1.msra.mxu0 0.0
    %2827 = vmatprep.subr.mxu0 0.0
    %2828 = vmatpush1.msra.mxu0 0.0
    %2829 = vmatprep.subr.mxu0 0.0
    %2830 = vmatpush1.msra.mxu0 0.0
    %2831 = vmatprep.subr.mxu0 0.0
    %2832 = vmatpush1.msra.mxu0 0.0
    %2833 = vmatprep.subr.mxu0 0.0
    %2834 = vmatpush1.msra.mxu0 0.0
    %2835 = vmatprep.subr.mxu0 0.0
    %2836 = vmatpush1.msra.mxu0 0.0
    %2837 = vmatprep.subr.mxu0 0.0
    %2838 = vmatpush1.msra.mxu0 0.0
    %2839 = vmatprep.subr.mxu0 0.0
    %2840 = vmatpush1.msra.mxu0 0.0
    %2841 = vmatprep.subr.mxu0 0.0
    %2842 = vmatpush1.msra.mxu0 0.0
    %2843 = vmatprep.subr.mxu0 0.0
    %2844 = vmatpush1.msra.mxu0 0.0
    %2845 = vmatprep.subr.mxu0 0.0
    %2846 = vmatpush1.msra.mxu0 0.0
    %2847 = vmatprep.subr.mxu0 0.0
    %2848 = vmatpush1.msra.mxu0 0.0
    %2849 = vmatprep.subr.mxu0 0.0
    %2850 = vmatpush1.msra.mxu0 0.0
    %2851 = vmatprep.subr.mxu0 0.0
    %2852 = vmatpush1.msra.mxu0 0.0
    %2853 = vmatprep.subr.mxu0 0.0
    %2854 = vmatpush1.msra.mxu0 0.0
    %2855 = vmatprep.subr.mxu0 0.0
    %2856 = vmatpush1.msra.mxu0 0.0
    %2857 = vmatprep.subr.mxu0 0.0
    %2858 = vmatpush1.msra.mxu0 0.0
    %2859 = vmatprep.subr.mxu0 0.0
    %2860 = vmatpush1.msra.mxu0 0.0
    %2861 = vmatprep.subr.mxu0 0.0
    %2862 = vmatpush1.msra.mxu0 0.0
    %2863 = vmatprep.subr.mxu0 0.0
    %2864 = vmatpush1.msra.mxu0 0.0
    %2865 = vmatprep.subr.mxu0 0.0
    %2866 = vmatpush1.msra.mxu0 0.0
    %2867 = vmatprep.mubr.f32.mxu0 0.0
    %2868 = vmatmul.mubr.f32.gmra.mrb[0].mxu0 %v2801
    %v2869 = vpop.f32.mrb[0].mxu0
    %v2870 = vadd.f32 0.0, %v2869
    %v2871 = vpop.f32.mrb[0].mxu0
    %2872 = vdwg.mxu0
    %2873 = vrot.lane.b32.xlu0 %v1932, 64
    %v2874 = vpop.permute.xlu0 %2873
    %v2877 = vsel %vm38, %v2640, 0
    %2879 = vmatprep.subr.mxu0 0.0
    %2880 = vmatpush1.msra.mxu0 %v2874
    %2881 = vmatprep.subr.mxu0 0.0
    %2882 = vmatpush1.msra.mxu0 0.0
    %2883 = vmatprep.subr.mxu0 0.0
    %2884 = vmatpush1.msra.mxu0 0.0
    %2885 = vmatprep.subr.mxu0 0.0
    %2886 = vmatpush1.msra.mxu0 0.0
    %2887 = vmatprep.subr.mxu0 0.0
    %2888 = vmatpush1.msra.mxu0 0.0
    %2889 = vmatprep.subr.mxu0 0.0
    %2890 = vmatpush1.msra.mxu0 0.0
    %2891 = vmatprep.subr.mxu0 0.0
    %2892 = vmatpush1.msra.mxu0 0.0
    %2893 = vmatprep.subr.mxu0 0.0
    %2894 = vmatpush1.msra.mxu0 0.0
    %2895 = vmatprep.subr.mxu0 0.0
    %2896 = vmatpush1.msra.mxu0 0.0
    %2897 = vmatprep.subr.mxu0 0.0
    %2898 = vmatpush1.msra.mxu0 0.0
    %2899 = vmatprep.subr.mxu0 0.0
    %2900 = vmatpush1.msra.mxu0 0.0
    %2901 = vmatprep.subr.mxu0 0.0
    %2902 = vmatpush1.msra.mxu0 0.0
    %2903 = vmatprep.subr.mxu0 0.0
    %2904 = vmatpush1.msra.mxu0 0.0
    %2905 = vmatprep.subr.mxu0 0.0
    %2906 = vmatpush1.msra.mxu0 0.0
    %2907 = vmatprep.subr.mxu0 0.0
    %2908 = vmatpush1.msra.mxu0 0.0
    %2909 = vmatprep.subr.mxu0 0.0
    %2910 = vmatpush1.msra.mxu0 0.0
    %2911 = vmatprep.subr.mxu0 0.0
    %2912 = vmatpush1.msra.mxu0 0.0
    %2913 = vmatprep.subr.mxu0 0.0
    %2914 = vmatpush1.msra.mxu0 0.0
    %2915 = vmatprep.subr.mxu0 0.0
    %2916 = vmatpush1.msra.mxu0 0.0
    %2917 = vmatprep.subr.mxu0 0.0
    %2918 = vmatpush1.msra.mxu0 0.0
    %2919 = vmatprep.subr.mxu0 0.0
    %2920 = vmatpush1.msra.mxu0 0.0
    %2921 = vmatprep.subr.mxu0 0.0
    %2922 = vmatpush1.msra.mxu0 0.0
    %2923 = vmatprep.subr.mxu0 0.0
    %2924 = vmatpush1.msra.mxu0 0.0
    %2925 = vmatprep.subr.mxu0 0.0
    %2926 = vmatpush1.msra.mxu0 0.0
    %2927 = vmatprep.subr.mxu0 0.0
    %2928 = vmatpush1.msra.mxu0 0.0
    %2929 = vmatprep.subr.mxu0 0.0
    %2930 = vmatpush1.msra.mxu0 0.0
    %2931 = vmatprep.subr.mxu0 0.0
    %2932 = vmatpush1.msra.mxu0 0.0
    %2933 = vmatprep.subr.mxu0 0.0
    %2934 = vmatpush1.msra.mxu0 0.0
    %2935 = vmatprep.subr.mxu0 0.0
    %2936 = vmatpush1.msra.mxu0 0.0
    %2937 = vmatprep.subr.mxu0 0.0
    %2938 = vmatpush1.msra.mxu0 0.0
    %2939 = vmatprep.subr.mxu0 0.0
    %2940 = vmatpush1.msra.mxu0 0.0
    %2941 = vmatprep.subr.mxu0 0.0
    %2942 = vmatpush1.msra.mxu0 0.0
    %2943 = vmatprep.mubr.f32.mxu0 0.0
    %2944 = vmatmul.mubr.f32.gmra.mrb[0].mxu0 %v2877
    %v2945 = vpop.f32.mrb[0].mxu0
    %v2946 = vadd.f32 0.0, %v2945
    %v2947 = vpop.f32.mrb[0].mxu0
    %2948 = vdwg.mxu0
    %2949 = vrot.lane.b32.xlu0 %v1934, 64
    %v2950 = vpop.permute.xlu0 %2949
    %v2953 = vsel %vm38, %v2641, 0
    %2955 = vmatprep.subr.mxu0 0.0
    %2956 = vmatpush1.msra.mxu0 %v2950
    %2957 = vmatprep.subr.mxu0 0.0
    %2958 = vmatpush1.msra.mxu0 0.0
    %2959 = vmatprep.subr.mxu0 0.0
    %2960 = vmatpush1.msra.mxu0 0.0
    %2961 = vmatprep.subr.mxu0 0.0
    %2962 = vmatpush1.msra.mxu0 0.0
    %2963 = vmatprep.subr.mxu0 0.0
    %2964 = vmatpush1.msra.mxu0 0.0
    %2965 = vmatprep.subr.mxu0 0.0
    %2966 = vmatpush1.msra.mxu0 0.0
    %2967 = vmatprep.subr.mxu0 0.0
    %2968 = vmatpush1.msra.mxu0 0.0
    %2969 = vmatprep.subr.mxu0 0.0
    %2970 = vmatpush1.msra.mxu0 0.0
    %2971 = vmatprep.subr.mxu0 0.0
    %2972 = vmatpush1.msra.mxu0 0.0
    %2973 = vmatprep.subr.mxu0 0.0
    %2974 = vmatpush1.msra.mxu0 0.0
    %2975 = vmatprep.subr.mxu0 0.0
    %2976 = vmatpush1.msra.mxu0 0.0
    %2977 = vmatprep.subr.mxu0 0.0
    %2978 = vmatpush1.msra.mxu0 0.0
    %2979 = vmatprep.subr.mxu0 0.0
    %2980 = vmatpush1.msra.mxu0 0.0
    %2981 = vmatprep.subr.mxu0 0.0
    %2982 = vmatpush1.msra.mxu0 0.0
    %2983 = vmatprep.subr.mxu0 0.0
    %2984 = vmatpush1.msra.mxu0 0.0
    %2985 = vmatprep.subr.mxu0 0.0
    %2986 = vmatpush1.msra.mxu0 0.0
    %2987 = vmatprep.subr.mxu0 0.0
    %2988 = vmatpush1.msra.mxu0 0.0
    %2989 = vmatprep.subr.mxu0 0.0
    %2990 = vmatpush1.msra.mxu0 0.0
    %2991 = vmatprep.subr.mxu0 0.0
    %2992 = vmatpush1.msra.mxu0 0.0
    %2993 = vmatprep.subr.mxu0 0.0
    %2994 = vmatpush1.msra.mxu0 0.0
    %2995 = vmatprep.subr.mxu0 0.0
    %2996 = vmatpush1.msra.mxu0 0.0
    %2997 = vmatprep.subr.mxu0 0.0
    %2998 = vmatpush1.msra.mxu0 0.0
    %2999 = vmatprep.subr.mxu0 0.0
    %3000 = vmatpush1.msra.mxu0 0.0
    %3001 = vmatprep.subr.mxu0 0.0
    %3002 = vmatpush1.msra.mxu0 0.0
    %3003 = vmatprep.subr.mxu0 0.0
    %3004 = vmatpush1.msra.mxu0 0.0
    %3005 = vmatprep.subr.mxu0 0.0
    %3006 = vmatpush1.msra.mxu0 0.0
    %3007 = vmatprep.subr.mxu0 0.0
    %3008 = vmatpush1.msra.mxu0 0.0
    %3009 = vmatprep.subr.mxu0 0.0
    %3010 = vmatpush1.msra.mxu0 0.0
    %3011 = vmatprep.subr.mxu0 0.0
    %3012 = vmatpush1.msra.mxu0 0.0
    %3013 = vmatprep.subr.mxu0 0.0
    %3014 = vmatpush1.msra.mxu0 0.0
    %3015 = vmatprep.subr.mxu0 0.0
    %3016 = vmatpush1.msra.mxu0 0.0
    %3017 = vmatprep.subr.mxu0 0.0
    %3018 = vmatpush1.msra.mxu0 0.0
    %3019 = vmatprep.mubr.f32.mxu0 0.0
    %3020 = vmatmul.mubr.f32.gmra.mrb[0].mxu0 %v2953
    %v3021 = vpop.f32.mrb[0].mxu0
    %v3022 = vadd.f32 0.0, %v3021
    %v3023 = vpop.f32.mrb[0].mxu0
    %3024 = vdwg.mxu0
    %3025 = vrot.lane.b32.xlu0 %v1936, 64
    %v3026 = vpop.permute.xlu0 %3025
    %v3029 = vsel %vm38, %v2642, 0
    %3031 = vmatprep.subr.mxu0 0.0
    %3032 = vmatpush1.msra.mxu0 %v3026
    %3033 = vmatprep.subr.mxu0 0.0
    %3034 = vmatpush1.msra.mxu0 0.0
    %3035 = vmatprep.subr.mxu0 0.0
    %3036 = vmatpush1.msra.mxu0 0.0
    %3037 = vmatprep.subr.mxu0 0.0
    %3038 = vmatpush1.msra.mxu0 0.0
    %3039 = vmatprep.subr.mxu0 0.0
    %3040 = vmatpush1.msra.mxu0 0.0
    %3041 = vmatprep.subr.mxu0 0.0
    %3042 = vmatpush1.msra.mxu0 0.0
    %3043 = vmatprep.subr.mxu0 0.0
    %3044 = vmatpush1.msra.mxu0 0.0
    %3045 = vmatprep.subr.mxu0 0.0
    %3046 = vmatpush1.msra.mxu0 0.0
    %3047 = vmatprep.subr.mxu0 0.0
    %3048 = vmatpush1.msra.mxu0 0.0
    %3049 = vmatprep.subr.mxu0 0.0
    %3050 = vmatpush1.msra.mxu0 0.0
    %3051 = vmatprep.subr.mxu0 0.0
    %3052 = vmatpush1.msra.mxu0 0.0
    %3053 = vmatprep.subr.mxu0 0.0
    %3054 = vmatpush1.msra.mxu0 0.0
    %3055 = vmatprep.subr.mxu0 0.0
    %3056 = vmatpush1.msra.mxu0 0.0
    %3057 = vmatprep.subr.mxu0 0.0
    %3058 = vmatpush1.msra.mxu0 0.0
    %3059 = vmatprep.subr.mxu0 0.0
    %3060 = vmatpush1.msra.mxu0 0.0
    %3061 = vmatprep.subr.mxu0 0.0
    %3062 = vmatpush1.msra.mxu0 0.0
    %3063 = vmatprep.subr.mxu0 0.0
    %3064 = vmatpush1.msra.mxu0 0.0
    %3065 = vmatprep.subr.mxu0 0.0
    %3066 = vmatpush1.msra.mxu0 0.0
    %3067 = vmatprep.subr.mxu0 0.0
    %3068 = vmatpush1.msra.mxu0 0.0
    %3069 = vmatprep.subr.mxu0 0.0
    %3070 = vmatpush1.msra.mxu0 0.0
    %3071 = vmatprep.subr.mxu0 0.0
    %3072 = vmatpush1.msra.mxu0 0.0
    %3073 = vmatprep.subr.mxu0 0.0
    %3074 = vmatpush1.msra.mxu0 0.0
    %3075 = vmatprep.subr.mxu0 0.0
    %3076 = vmatpush1.msra.mxu0 0.0
    %3077 = vmatprep.subr.mxu0 0.0
    %3078 = vmatpush1.msra.mxu0 0.0
    %3079 = vmatprep.subr.mxu0 0.0
    %3080 = vmatpush1.msra.mxu0 0.0
    %3081 = vmatprep.subr.mxu0 0.0
    %3082 = vmatpush1.msra.mxu0 0.0
    %3083 = vmatprep.subr.mxu0 0.0
    %3084 = vmatpush1.msra.mxu0 0.0
    %3085 = vmatprep.subr.mxu0 0.0
    %3086 = vmatpush1.msra.mxu0 0.0
    %3087 = vmatprep.subr.mxu0 0.0
    %3088 = vmatpush1.msra.mxu0 0.0
    %3089 = vmatprep.subr.mxu0 0.0
    %3090 = vmatpush1.msra.mxu0 0.0
    %3091 = vmatprep.subr.mxu0 0.0
    %3092 = vmatpush1.msra.mxu0 0.0
    %3093 = vmatprep.subr.mxu0 0.0
    %3094 = vmatpush1.msra.mxu0 0.0
    %3095 = vmatprep.mubr.f32.mxu0 0.0
    %3096 = vmatmul.mubr.f32.gmra.mrb[0].mxu0 %v3029
    %v3097 = vpop.f32.mrb[0].mxu0
    %v3098 = vadd.f32 0.0, %v3097
    %v3099 = vpop.f32.mrb[0].mxu0
    %3100 = vdwg.mxu0
    %3101 = vrot.lane.b32.xlu0 %v1938, 64
    %v3102 = vpop.permute.xlu0 %3101
    %v3105 = vsel %vm38, %v2643, 0
    %3107 = vmatprep.subr.mxu0 0.0
    %3108 = vmatpush1.msra.mxu0 %v3102
    %3109 = vmatprep.subr.mxu0 0.0
    %3110 = vmatpush1.msra.mxu0 0.0
    %3111 = vmatprep.subr.mxu0 0.0
    %3112 = vmatpush1.msra.mxu0 0.0
    %3113 = vmatprep.subr.mxu0 0.0
    %3114 = vmatpush1.msra.mxu0 0.0
    %3115 = vmatprep.subr.mxu0 0.0
    %3116 = vmatpush1.msra.mxu0 0.0
    %3117 = vmatprep.subr.mxu0 0.0
    %3118 = vmatpush1.msra.mxu0 0.0
    %3119 = vmatprep.subr.mxu0 0.0
    %3120 = vmatpush1.msra.mxu0 0.0
    %3121 = vmatprep.subr.mxu0 0.0
    %3122 = vmatpush1.msra.mxu0 0.0
    %3123 = vmatprep.subr.mxu0 0.0
    %3124 = vmatpush1.msra.mxu0 0.0
    %3125 = vmatprep.subr.mxu0 0.0
    %3126 = vmatpush1.msra.mxu0 0.0
    %3127 = vmatprep.subr.mxu0 0.0
    %3128 = vmatpush1.msra.mxu0 0.0
    %3129 = vmatprep.subr.mxu0 0.0
    %3130 = vmatpush1.msra.mxu0 0.0
    %3131 = vmatprep.subr.mxu0 0.0
    %3132 = vmatpush1.msra.mxu0 0.0
    %3133 = vmatprep.subr.mxu0 0.0
    %3134 = vmatpush1.msra.mxu0 0.0
    %3135 = vmatprep.subr.mxu0 0.0
    %3136 = vmatpush1.msra.mxu0 0.0
    %3137 = vmatprep.subr.mxu0 0.0
    %3138 = vmatpush1.msra.mxu0 0.0
    %3139 = vmatprep.subr.mxu0 0.0
    %3140 = vmatpush1.msra.mxu0 0.0
    %3141 = vmatprep.subr.mxu0 0.0
    %3142 = vmatpush1.msra.mxu0 0.0
    %3143 = vmatprep.subr.mxu0 0.0
    %3144 = vmatpush1.msra.mxu0 0.0
    %3145 = vmatprep.subr.mxu0 0.0
    %3146 = vmatpush1.msra.mxu0 0.0
    %3147 = vmatprep.subr.mxu0 0.0
    %3148 = vmatpush1.msra.mxu0 0.0
    %3149 = vmatprep.subr.mxu0 0.0
    %3150 = vmatpush1.msra.mxu0 0.0
    %3151 = vmatprep.subr.mxu0 0.0
    %3152 = vmatpush1.msra.mxu0 0.0
    %3153 = vmatprep.subr.mxu0 0.0
    %3154 = vmatpush1.msra.mxu0 0.0
    %3155 = vmatprep.subr.mxu0 0.0
    %3156 = vmatpush1.msra.mxu0 0.0
    %3157 = vmatprep.subr.mxu0 0.0
    %3158 = vmatpush1.msra.mxu0 0.0
    %3159 = vmatprep.subr.mxu0 0.0
    %3160 = vmatpush1.msra.mxu0 0.0
    %3161 = vmatprep.subr.mxu0 0.0
    %3162 = vmatpush1.msra.mxu0 0.0
    %3163 = vmatprep.subr.mxu0 0.0
    %3164 = vmatpush1.msra.mxu0 0.0
    %3165 = vmatprep.subr.mxu0 0.0
    %3166 = vmatpush1.msra.mxu0 0.0
    %3167 = vmatprep.subr.mxu0 0.0
    %3168 = vmatpush1.msra.mxu0 0.0
    %3169 = vmatprep.subr.mxu0 0.0
    %3170 = vmatpush1.msra.mxu0 0.0
    %3171 = vmatprep.mubr.f32.mxu0 0.0
    %3172 = vmatmul.mubr.f32.gmra.mrb[0].mxu0 %v3105
    %v3173 = vpop.f32.mrb[0].mxu0
    %v3174 = vadd.f32 0.0, %v3173
    %v3175 = vpop.f32.mrb[0].mxu0
    %3176 = vdwg.mxu0
    %3177 = vrot.lane.b32.xlu0 %v1940, 64
    %v3178 = vpop.permute.xlu0 %3177
    %v3181 = vsel %vm38, %v2644, 0
    %3183 = vmatprep.subr.mxu0 0.0
    %3184 = vmatpush1.msra.mxu0 %v3178
    %3185 = vmatprep.subr.mxu0 0.0
    %3186 = vmatpush1.msra.mxu0 0.0
    %3187 = vmatprep.subr.mxu0 0.0
    %3188 = vmatpush1.msra.mxu0 0.0
    %3189 = vmatprep.subr.mxu0 0.0
    %3190 = vmatpush1.msra.mxu0 0.0
    %3191 = vmatprep.subr.mxu0 0.0
    %3192 = vmatpush1.msra.mxu0 0.0
    %3193 = vmatprep.subr.mxu0 0.0
    %3194 = vmatpush1.msra.mxu0 0.0
    %3195 = vmatprep.subr.mxu0 0.0
    %3196 = vmatpush1.msra.mxu0 0.0
    %3197 = vmatprep.subr.mxu0 0.0
    %3198 = vmatpush1.msra.mxu0 0.0
    %3199 = vmatprep.subr.mxu0 0.0
    %3200 = vmatpush1.msra.mxu0 0.0
    %3201 = vmatprep.subr.mxu0 0.0
    %3202 = vmatpush1.msra.mxu0 0.0
    %3203 = vmatprep.subr.mxu0 0.0
    %3204 = vmatpush1.msra.mxu0 0.0
    %3205 = vmatprep.subr.mxu0 0.0
    %3206 = vmatpush1.msra.mxu0 0.0
    %3207 = vmatprep.subr.mxu0 0.0
    %3208 = vmatpush1.msra.mxu0 0.0
    %3209 = vmatprep.subr.mxu0 0.0
    %3210 = vmatpush1.msra.mxu0 0.0
    %3211 = vmatprep.subr.mxu0 0.0
    %3212 = vmatpush1.msra.mxu0 0.0
    %3213 = vmatprep.subr.mxu0 0.0
    %3214 = vmatpush1.msra.mxu0 0.0
    %3215 = vmatprep.subr.mxu0 0.0
    %3216 = vmatpush1.msra.mxu0 0.0
    %3217 = vmatprep.subr.mxu0 0.0
    %3218 = vmatpush1.msra.mxu0 0.0
    %3219 = vmatprep.subr.mxu0 0.0
    %3220 = vmatpush1.msra.mxu0 0.0
    %3221 = vmatprep.subr.mxu0 0.0
    %3222 = vmatpush1.msra.mxu0 0.0
    %3223 = vmatprep.subr.mxu0 0.0
    %3224 = vmatpush1.msra.mxu0 0.0
    %3225 = vmatprep.subr.mxu0 0.0
    %3226 = vmatpush1.msra.mxu0 0.0
    %3227 = vmatprep.subr.mxu0 0.0
    %3228 = vmatpush1.msra.mxu0 0.0
    %3229 = vmatprep.subr.mxu0 0.0
    %3230 = vmatpush1.msra.mxu0 0.0
    %3231 = vmatprep.subr.mxu0 0.0
    %3232 = vmatpush1.msra.mxu0 0.0
    %3233 = vmatprep.subr.mxu0 0.0
    %3234 = vmatpush1.msra.mxu0 0.0
    %3235 = vmatprep.subr.mxu0 0.0
    %3236 = vmatpush1.msra.mxu0 0.0
    %3237 = vmatprep.subr.mxu0 0.0
    %3238 = vmatpush1.msra.mxu0 0.0
    %3239 = vmatprep.subr.mxu0 0.0
    %3240 = vmatpush1.msra.mxu0 0.0
    %3241 = vmatprep.subr.mxu0 0.0
    %3242 = vmatpush1.msra.mxu0 0.0
    %3243 = vmatprep.subr.mxu0 0.0
    %3244 = vmatpush1.msra.mxu0 0.0
    %3245 = vmatprep.subr.mxu0 0.0
    %3246 = vmatpush1.msra.mxu0 0.0
    %3247 = vmatprep.mubr.f32.mxu0 0.0
    %3248 = vmatmul.mubr.f32.gmra.mrb[0].mxu0 %v3181
    %v3249 = vpop.f32.mrb[0].mxu0
    %v3250 = vadd.f32 0.0, %v3249
    %v3251 = vpop.f32.mrb[0].mxu0
    %3252 = vdwg.mxu0
    %3255 = vrot.lane.b32.xlu0 %v2870, 8
    %v3256 = vpop.permute.xlu0 %3255
    %3257 = vrot.lane.b32.xlu0 %v2946, 8
    %v3258 = vpop.permute.xlu0 %3257
    %3263 = vrot.lane.b32.xlu0 %v3022, 16
    %v3264 = vpop.permute.xlu0 %3263
    %3265 = vrot.lane.b32.xlu0 %v3098, 16
    %v3266 = vpop.permute.xlu0 %3265
    %3271 = vrot.lane.b32.xlu0 %v3174, 24
    %v3272 = vpop.permute.xlu0 %3271
    %3273 = vrot.lane.b32.xlu0 %v3250, 24
    %v3274 = vpop.permute.xlu0 %3273
    %v3277 = vsel %vm38, %v2718, %v3256
    %v3278 = vsel %vm38, %v2794, %v3258
    %v3279 = vsel %vm1513, %v3277, %v3264
    %v3280 = vsel %vm1513, %v3278, %v3266
    %v3281 = vsel %vm1516, %v3279, %v3272
    %v3282 = vsel %vm1516, %v3280, %v3274
    %v3283 = vpack.c.bf16 %v3282, %v3281
    %v3284 = vld [vmem:[#allocation2 + $0x18] sm:$0xf]
    %v3285 = vld [vmem:[#allocation2 + $0x1c] sm:$0xf]
    %v3286 = vld [vmem:[#allocation2 + $0x20] sm:$0xf]
    %v3287 = vld [vmem:[#allocation2 + $0x24] sm:$0xf]
    %v3288 = vld [vmem:[%s2 + $0xb] sm:$0x1]
    %v3289 = vlaneseq
    %v3290 = vshrl.u32 %v3289, 7
    %v3291 = vsub.s32 0, %v3290
    %v3292 = vrot.slane %v3288, %v3291
    %v3297 = vunpack.c.l.b16 %v3284
    %v3298 = vunpack.c.l.b16 %v3285
    %v3299 = vunpack.c.l.b16 %v3286
    %v3300 = vunpack.c.l.b16 %v3287
    %v3301 = vpack.c.b16 %v3298, %v3297
    %v3302 = vpack.c.b16 %v3300, %v3299
    %3303 = vrot.lane.b32.xlu0 %v3301, 32
    %v3304 = vpop.permute.xlu0 %3303
    %3305 = vrot.lane.b32.xlu0 %v3302, 32
    %v3306 = vpop.permute.xlu0 %3305
    %v3310 = vsel %vm116, %v3283, 0
    %3312 = vmatprep.subr.bf16.mxu0 0
    %3313 = vmatpush1.bf16.msra.mxu0 %v3304
    %3314 = vmatprep.subr.bf16.mxu0 0
    %3315 = vmatpush1.bf16.msra.mxu0 %v3306
    %3316 = vmatprep.subr.bf16.mxu0 0
    %3317 = vmatpush1.bf16.msra.mxu0 0
    %3318 = vmatprep.subr.bf16.mxu0 0
    %3319 = vmatpush1.bf16.msra.mxu0 0
    %3320 = vmatprep.subr.bf16.mxu0 0
    %3321 = vmatpush1.bf16.msra.mxu0 0
    %3322 = vmatprep.subr.bf16.mxu0 0
    %3323 = vmatpush1.bf16.msra.mxu0 0
    %3324 = vmatprep.subr.bf16.mxu0 0
    %3325 = vmatpush1.bf16.msra.mxu0 0
    %3326 = vmatprep.subr.bf16.mxu0 0
    %3327 = vmatpush1.bf16.msra.mxu0 0
    %3328 = vmatprep.subr.bf16.mxu0 0
    %3329 = vmatpush1.bf16.msra.mxu0 0
    %3330 = vmatprep.subr.bf16.mxu0 0
    %3331 = vmatpush1.bf16.msra.mxu0 0
    %3332 = vmatprep.subr.bf16.mxu0 0
    %3333 = vmatpush1.bf16.msra.mxu0 0
    %3334 = vmatprep.subr.bf16.mxu0 0
    %3335 = vmatpush1.bf16.msra.mxu0 0
    %3336 = vmatprep.subr.bf16.mxu0 0
    %3337 = vmatpush1.bf16.msra.mxu0 0
    %3338 = vmatprep.subr.bf16.mxu0 0
    %3339 = vmatpush1.bf16.msra.mxu0 0
    %3340 = vmatprep.subr.bf16.mxu0 0
    %3341 = vmatpush1.bf16.msra.mxu0 0
    %3342 = vmatprep.subr.bf16.mxu0 0
    %3343 = vmatpush1.bf16.msra.mxu0 0
    %3344 = vmatprep.mubr.bf16.mxu0 0
    %3345 = vmatmul.mubr.bf16.gmra.mrb[0].mxu0 %v3310
    %v3346 = vpop.f32.mrb[0].mxu0
    %v3347 = vadd.f32 %v3292, %v3346
    %v3348 = vpop.f32.mrb[0].mxu0
    %v3349 = vpop.f32.mrb[0].mxu0
    %v3350 = vadd.f32 %v3292, %v3349
    %v3351 = vpop.f32.mrb[0].mxu0
    %3352 = vdwg.mxu0
    %v3353 = vadd.f32 %v1859, %v3347
    %v3354 = vadd.f32 %v1860, %v3350
    %v3355 = vld [vmem:[%s2 + $0xc] sm:$0x1]
    %v3356 = vld [vmem:[%s2 + $0xd] sm:$0x1]
    %v3357 = vsel %vm116, %v3353, 0.0
    %3358 = vadd.xlane.f32.xlu0 %v3357
    %v3359 = vpop.xlane.xlu0 %3358
    %v3360 = vsel %vm116, %v3354, 0.0
    %3361 = vadd.xlane.f32.xlu0 %v3360
    %v3362 = vpop.xlane.xlu0 %3361
    %v3363 = vmul.f32 %v3359, %v1599
    %v3364 = vmul.f32 %v3362, %v1599
    %v3365 = vmul.f32 %v3353, %v3353
    %v3366 = vmul.f32 %v3354, %v3354
    %v3367 = vsel %vm116, %v3365, 0.0
    %3368 = vadd.xlane.f32.xlu0 %v3367
    %v3369 = vpop.xlane.xlu0 %3368
    %v3370 = vsel %vm116, %v3366, 0.0
    %3371 = vadd.xlane.f32.xlu0 %v3370
    %v3372 = vpop.xlane.xlu0 %3371
    %v3373 = vmul.f32 %v3369, %v1599
    %v3374 = vmul.f32 %v3372, %v1599
    %v3375 = vmul.f32 %v3363, %v3363
    %v3376 = vmul.f32 %v3364, %v3364
    %v3377 = vsub.f32 %v3373, %v3375
    %v3378 = vsub.f32 %v3374, %v3376
    %v3379 = vsub.f32 %v3353, %v3363
    %v3380 = vsub.f32 %v3354, %v3364
    %v3381 = vadd.f32 %v3377, 1e-05
    %v3382 = vadd.f32 %v3378, 1e-05
    %v3383 = vrsqrt.pop %v3381
    %v3384 = vrsqrt.pop %v3382
    %v3385 = vmul.f32 %v3379, %v3383
    %v3386 = vmul.f32 %v3380, %v3384
    %v3387 = vlaneseq
    %v3388 = vshrl.u32 %v3387, 7
    %v3389 = vsub.s32 0, %v3388
    %v3390 = vrot.slane %v3355, %v3389
    %v3391 = vmul.f32 %v3385, %v3390
    %v3392 = vmul.f32 %v3386, %v3390
    %v3393 = vlaneseq
    %v3394 = vshrl.u32 %v3393, 7
    %v3395 = vsub.s32 0, %v3394
    %v3396 = vrot.slane %v3356, %v3395
    %v3397 = vadd.f32 %v3391, %v3396
    %v3398 = vadd.f32 %v3392, %v3396
    %v3399 = vpack.c.bf16 %v3398, %v3397
    %v3400 = vld [vmem:[#allocation2 + $0x38] sm:$0xf]
    %v3401 = vld [vmem:[#allocation2 + $0x3c] sm:$0xf]
    %v3402 = vld [vmem:[#allocation2 + $0x40] sm:$0xf]
    %v3403 = vld [vmem:[#allocation2 + $0x44] sm:$0xf]
    %v3404 = vld [vmem:[%s2 + $0xe] sm:$0x1]
    %v3405 = vlaneseq
    %v3406 = vshrl.u32 %v3405, 7
    %v3407 = vsub.s32 0, %v3406
    %v3408 = vrot.slane %v3404, %v3407
    %v3413 = vunpack.c.l.b16 %v3400
    %v3414 = vunpack.c.l.b16 %v3401
    %v3415 = vunpack.c.l.b16 %v3402
    %v3416 = vunpack.c.l.b16 %v3403
    %v3417 = vpack.c.b16 %v3414, %v3413
    %v3418 = vpack.c.b16 %v3416, %v3415
    %v3422 = vsel %vm116, %v3399, 0
    %3424 = vmatprep.subr.bf16.mxu0 0
    %3425 = vmatpush1.bf16.msra.mxu0 %v3417
    %3426 = vmatprep.subr.bf16.mxu0 0
    %3427 = vmatpush1.bf16.msra.mxu0 %v3418
    %3428 = vmatprep.subr.bf16.mxu0 0
    %3429 = vmatpush1.bf16.msra.mxu0 0
    %3430 = vmatprep.subr.bf16.mxu0 0
    %3431 = vmatpush1.bf16.msra.mxu0 0
    %3432 = vmatprep.subr.bf16.mxu0 0
    %3433 = vmatpush1.bf16.msra.mxu0 0
    %3434 = vmatprep.subr.bf16.mxu0 0
    %3435 = vmatpush1.bf16.msra.mxu0 0
    %3436 = vmatprep.subr.bf16.mxu0 0
    %3437 = vmatpush1.bf16.msra.mxu0 0
    %3438 = vmatprep.subr.bf16.mxu0 0
    %3439 = vmatpush1.bf16.msra.mxu0 0
    %3440 = vmatprep.subr.bf16.mxu0 0
    %3441 = vmatpush1.bf16.msra.mxu0 0
    %3442 = vmatprep.subr.bf16.mxu0 0
    %3443 = vmatpush1.bf16.msra.mxu0 0
    %3444 = vmatprep.subr.bf16.mxu0 0
    %3445 = vmatpush1.bf16.msra.mxu0 0
    %3446 = vmatprep.subr.bf16.mxu0 0
    %3447 = vmatpush1.bf16.msra.mxu0 0
    %3448 = vmatprep.subr.bf16.mxu0 0
    %3449 = vmatpush1.bf16.msra.mxu0 0
    %3450 = vmatprep.subr.bf16.mxu0 0
    %3451 = vmatpush1.bf16.msra.mxu0 0
    %3452 = vmatprep.subr.bf16.mxu0 0
    %3453 = vmatpush1.bf16.msra.mxu0 0
    %3454 = vmatprep.subr.bf16.mxu0 0
    %3455 = vmatpush1.bf16.msra.mxu0 0
    %3456 = vmatprep.mubr.bf16.mxu0 0
    %3457 = vmatmul.mubr.bf16.gmra.mrb[0].mxu0 %v3422
    %v3458 = vpop.f32.mrb[0].mxu0
    %v3459 = vadd.f32 %v3408, %v3458
    %v3460 = vpop.f32.mrb[0].mxu0
    %v3461 = vpop.f32.mrb[0].mxu0
    %v3462 = vadd.f32 %v3408, %v3461
    %v3463 = vpop.f32.mrb[0].mxu0
    %3464 = vdwg.mxu0
    %v3465 = vmax.f32 %v3459, 0.0
    %v3466 = vmax.f32 %v3462, 0.0
    %v3467 = vpack.c.bf16 %v3466, %v3465
    %v3468 = vld [vmem:[#allocation2 + $0x58] sm:$0xf]
    %v3469 = vld [vmem:[#allocation2 + $0x5c] sm:$0xf]
    %v3470 = vld [vmem:[#allocation2 + $0x60] sm:$0xf]
    %v3471 = vld [vmem:[#allocation2 + $0x64] sm:$0xf]
    %v3472 = vld [vmem:[#allocation2 + $0x68] sm:$0xf]
    %v3473 = vld [vmem:[#allocation2 + $0x6c] sm:$0xf]
    %v3474 = vld [vmem:[#allocation2 + $0x70] sm:$0xf]
    %v3475 = vld [vmem:[#allocation2 + $0x74] sm:$0xf]
    %v3476 = vld [vmem:[#allocation2 + $0x78] sm:$0xf]
    %v3477 = vld [vmem:[#allocation2 + $0x7c] sm:$0xf]
    %v3478 = vld [vmem:[#allocation2 + $0x80] sm:$0xf]
    %v3479 = vld [vmem:[#allocation2 + $0x84] sm:$0xf]
    %v3480 = vld [vmem:[#allocation2 + $0x88] sm:$0xf]
    %v3481 = vld [vmem:[#allocation2 + $0x8c] sm:$0xf]
    %v3482 = vld [vmem:[#allocation2 + $0x90] sm:$0xf]
    %v3483 = vld [vmem:[#allocation2 + $0x94] sm:$0xf]
    %v3484 = vld [vmem:[%s2 + $0xf] sm:$0x1]
    %v3485 = vlaneseq
    %v3486 = vshrl.u32 %v3485, 7
    %v3487 = vsub.s32 0, %v3486
    %v3488 = vrot.slane %v3484, %v3487
    %v3505 = vunpack.c.l.b16 %v3468
    %v3506 = vunpack.c.l.b16 %v3469
    %v3507 = vunpack.c.l.b16 %v3470
    %v3508 = vunpack.c.l.b16 %v3471
    %v3509 = vunpack.c.l.b16 %v3472
    %v3510 = vunpack.c.l.b16 %v3473
    %v3511 = vunpack.c.l.b16 %v3474
    %v3512 = vunpack.c.l.b16 %v3475
    %v3513 = vunpack.c.l.b16 %v3476
    %v3514 = vunpack.c.l.b16 %v3477
    %v3515 = vunpack.c.l.b16 %v3478
    %v3516 = vunpack.c.l.b16 %v3479
    %v3517 = vunpack.c.l.b16 %v3480
    %v3518 = vunpack.c.l.b16 %v3481
    %v3519 = vunpack.c.l.b16 %v3482
    %v3520 = vunpack.c.l.b16 %v3483
    %v3521 = vpack.c.b16 %v3506, %v3505
    %v3522 = vpack.c.b16 %v3508, %v3507
    %v3523 = vpack.c.b16 %v3510, %v3509
    %v3524 = vpack.c.b16 %v3512, %v3511
    %v3525 = vpack.c.b16 %v3514, %v3513
    %v3526 = vpack.c.b16 %v3516, %v3515
    %v3527 = vpack.c.b16 %v3518, %v3517
    %v3528 = vpack.c.b16 %v3520, %v3519
    %3529 = vrot.lane.b32.xlu0 %v3521, 96
    %v3530 = vpop.permute.xlu0 %3529
    %3531 = vrot.lane.b32.xlu0 %v3522, 96
    %v3532 = vpop.permute.xlu0 %3531
    %3533 = vrot.lane.b32.xlu0 %v3523, 96
    %v3534 = vpop.permute.xlu0 %3533
    %3535 = vrot.lane.b32.xlu0 %v3524, 96
    %v3536 = vpop.permute.xlu0 %3535
    %3537 = vrot.lane.b32.xlu0 %v3525, 96
    %v3538 = vpop.permute.xlu0 %3537
    %3539 = vrot.lane.b32.xlu0 %v3526, 96
    %v3540 = vpop.permute.xlu0 %3539
    %3541 = vrot.lane.b32.xlu0 %v3527, 96
    %v3542 = vpop.permute.xlu0 %3541
    %3543 = vrot.lane.b32.xlu0 %v3528, 96
    %v3544 = vpop.permute.xlu0 %3543
    %3553 = vmatprep.subr.bf16.mxu0 0
    %3554 = vmatpush1.bf16.msra.mxu0 %v3530
    %3555 = vmatprep.subr.bf16.mxu0 0
    %3556 = vmatpush1.bf16.msra.mxu0 %v3532
    %3557 = vmatprep.subr.bf16.mxu0 0
    %3558 = vmatpush1.bf16.msra.mxu0 %v3534
    %3559 = vmatprep.subr.bf16.mxu0 0
    %3560 = vmatpush1.bf16.msra.mxu0 %v3536
    %3561 = vmatprep.subr.bf16.mxu0 0
    %3562 = vmatpush1.bf16.msra.mxu0 %v3538
    %3563 = vmatprep.subr.bf16.mxu0 0
    %3564 = vmatpush1.bf16.msra.mxu0 %v3540
    %3565 = vmatprep.subr.bf16.mxu0 0
    %3566 = vmatpush1.bf16.msra.mxu0 %v3542
    %3567 = vmatprep.subr.bf16.mxu0 0
    %3568 = vmatpush1.bf16.msra.mxu0 %v3544
    %3569 = vmatprep.subr.bf16.mxu0 0
    %3570 = vmatpush1.bf16.msra.mxu0 0
    %3571 = vmatprep.subr.bf16.mxu0 0
    %3572 = vmatpush1.bf16.msra.mxu0 0
    %3573 = vmatprep.subr.bf16.mxu0 0
    %3574 = vmatpush1.bf16.msra.mxu0 0
    %3575 = vmatprep.subr.bf16.mxu0 0
    %3576 = vmatpush1.bf16.msra.mxu0 0
    %3577 = vmatprep.subr.bf16.mxu0 0
    %3578 = vmatpush1.bf16.msra.mxu0 0
    %3579 = vmatprep.subr.bf16.mxu0 0
    %3580 = vmatpush1.bf16.msra.mxu0 0
    %3581 = vmatprep.subr.bf16.mxu0 0
    %3582 = vmatpush1.bf16.msra.mxu0 0
    %3583 = vmatprep.subr.bf16.mxu0 0
    %3584 = vmatpush1.bf16.msra.mxu0 0
    %3585 = vmatprep.mubr.bf16.mxu0 0
    %3586 = vmatmul.mubr.bf16.gmra.mrb[0].mxu0 %v3467
    %v3587 = vpop.f32.mrb[0].mxu0
    %v3588 = vadd.f32 %v3488, %v3587
    %v3589 = vpop.f32.mrb[0].mxu0
    %v3590 = vpop.f32.mrb[0].mxu0
    %v3591 = vadd.f32 %v3488, %v3590
    %v3592 = vpop.f32.mrb[0].mxu0
    %3593 = vdwg.mxu0
    %v3594 = vadd.f32 %v3397, %v3588
    %v3595 = vadd.f32 %v3398, %v3591
    %v3596 = vld [vmem:[%s2 + $0x10] sm:$0x1]
    %v3597 = vld [vmem:[%s2 + $0x11] sm:$0x1]
    %v3598 = vsel %vm116, %v3594, 0.0
    %3599 = vadd.xlane.f32.xlu0 %v3598
    %v3600 = vpop.xlane.xlu0 %3599
    %v3601 = vsel %vm116, %v3595, 0.0
    %3602 = vadd.xlane.f32.xlu0 %v3601
    %v3603 = vpop.xlane.xlu0 %3602
    %v3604 = vmul.f32 %v3600, %v1599
    %v3605 = vmul.f32 %v3603, %v1599
    %v3606 = vmul.f32 %v3594, %v3594
    %v3607 = vmul.f32 %v3595, %v3595
    %v3608 = vsel %vm116, %v3606, 0.0
    %3609 = vadd.xlane.f32.xlu0 %v3608
    %v3610 = vpop.xlane.xlu0 %3609
    %v3611 = vsel %vm116, %v3607, 0.0
    %3612 = vadd.xlane.f32.xlu0 %v3611
    %v3613 = vpop.xlane.xlu0 %3612
    %v3614 = vmul.f32 %v3610, %v1599
    %v3615 = vmul.f32 %v3613, %v1599
    %v3616 = vmul.f32 %v3604, %v3604
    %v3617 = vmul.f32 %v3605, %v3605
    %v3618 = vsub.f32 %v3614, %v3616
    %v3619 = vsub.f32 %v3615, %v3617
    %v3620 = vsub.f32 %v3594, %v3604
    %v3621 = vsub.f32 %v3595, %v3605
    %v3622 = vadd.f32 %v3618, 1e-05
    %v3623 = vadd.f32 %v3619, 1e-05
    %v3624 = vrsqrt.pop %v3622
    %v3625 = vrsqrt.pop %v3623
    %v3626 = vmul.f32 %v3620, %v3624
    %v3627 = vmul.f32 %v3621, %v3625
    %v3628 = vlaneseq
    %v3629 = vshrl.u32 %v3628, 7
    %v3630 = vsub.s32 0, %v3629
    %v3631 = vrot.slane %v3596, %v3630
    %v3632 = vmul.f32 %v3626, %v3631
    %v3633 = vmul.f32 %v3627, %v3631
    %v3634 = vlaneseq
    %v3635 = vshrl.u32 %v3634, 7
    %v3636 = vsub.s32 0, %v3635
    %v3637 = vrot.slane %v3597, %v3636
    %v3638 = vadd.f32 %v3632, %v3637
    %v3639 = vadd.f32 %v3633, %v3637
    %v3640 = vsel %vm116, %v3638, 0.0
    %v3641 = vrot.slane %v3640, 4
    %v3642 = vadd.f32 %v3640, %v3641
    %v3643 = vrot.slane %v3642, 2
    %v3644 = vadd.f32 %v3642, %v3643
    %v3645 = vrot.slane %v3644, 1
    %v3646 = vadd.f32 %v3644, %v3645
    %v3647 = vsel %vm116, %v3639, 0.0
    %v3648 = vrot.slane %v3647, 4
    %v3649 = vadd.f32 %v3647, %v3648
    %v3650 = vrot.slane %v3649, 2
    %v3651 = vadd.f32 %v3649, %v3650
    %v3652 = vrot.slane %v3651, 1
    %v3653 = vadd.f32 %v3651, %v3652
    %v3654 = vrcp.pop 8.0
    %v3655 = vmul.f32 %v3646, %v3654
    %v3656 = vmul.f32 %v3653, %v3654
    %vm3659 = vcmask 1041409
    %v3660 = vsel %vm3659, %v3656, %v3655
    %vm3662 = vcmask 1041408
    %v3663 = vsel %vm3662, %v3660, 0.0
    %v3664 = vpack.c.bf16 %v3663, %v3663
    %v3665 = vld [vmem:[#allocation2 + $0x48] sm:$0xf]
    %v3666 = vld [vmem:[#allocation2 + $0x4c] sm:$0xf]
    %v3667 = vld [vmem:[#allocation2 + $0x50] sm:$0xf]
    %v3668 = vld [vmem:[#allocation2 + $0x54] sm:$0xf]
    %v3669 = vld [vmem:[%s2 + $0x1] sm:$0x1]
    %v3670 = vlaneseq
    %v3671 = vshrl.u32 %v3670, 7
    %v3672 = vsub.s32 0, %v3671
    %v3673 = vrot.slane %v3669, %v3672
    %v3678 = vunpack.c.l.b16 %v3665
    %v3679 = vunpack.c.l.b16 %v3666
    %v3680 = vunpack.c.l.b16 %v3667
    %v3681 = vunpack.c.l.b16 %v3668
    %v3682 = vpack.c.b16 %v3679, %v3678
    %v3683 = vpack.c.b16 %v3681, %v3680
    %v3687 = vsel %vm116, %v3664, 0
    %3689 = vmatprep.subr.bf16.mxu0 0
    %3690 = vmatpush1.bf16.msra.mxu0 %v3682
    %3691 = vmatprep.subr.bf16.mxu0 0
    %3692 = vmatpush1.bf16.msra.mxu0 %v3683
    %3693 = vmatprep.subr.bf16.mxu0 0
    %3694 = vmatpush1.bf16.msra.mxu0 0
    %3695 = vmatprep.subr.bf16.mxu0 0
    %3696 = vmatpush1.bf16.msra.mxu0 0
    %3697 = vmatprep.subr.bf16.mxu0 0
    %3698 = vmatpush1.bf16.msra.mxu0 0
    %3699 = vmatprep.subr.bf16.mxu0 0
    %3700 = vmatpush1.bf16.msra.mxu0 0
    %3701 = vmatprep.subr.bf16.mxu0 0
    %3702 = vmatpush1.bf16.msra.mxu0 0
    %3703 = vmatprep.subr.bf16.mxu0 0
    %3704 = vmatpush1.bf16.msra.mxu0 0
    %3705 = vmatprep.subr.bf16.mxu0 0
    %3706 = vmatpush1.bf16.msra.mxu0 0
    %3707 = vmatprep.subr.bf16.mxu0 0
    %3708 = vmatpush1.bf16.msra.mxu0 0
    %3709 = vmatprep.subr.bf16.mxu0 0
    %3710 = vmatpush1.bf16.msra.mxu0 0
    %3711 = vmatprep.subr.bf16.mxu0 0
    %3712 = vmatpush1.bf16.msra.mxu0 0
    %3713 = vmatprep.subr.bf16.mxu0 0
    %3714 = vmatpush1.bf16.msra.mxu0 0
    %3715 = vmatprep.subr.bf16.mxu0 0
    %3716 = vmatpush1.bf16.msra.mxu0 0
    %3717 = vmatprep.subr.bf16.mxu0 0
    %3718 = vmatpush1.bf16.msra.mxu0 0
    %3719 = vmatprep.subr.bf16.mxu0 0
    %3720 = vmatpush1.bf16.msra.mxu0 0
    %3721 = vmatprep.mubr.bf16.mxu0 0
    %3722 = vmatmul.mubr.bf16.gmra.mrb[0].mxu0 %v3687
    %v3723 = vpop.f32.mrb[0].mxu0
    %v3724 = vadd.f32 %v3673, %v3723
    %v3725 = vpop.f32.mrb[0].mxu0
    %v3726 = vpop.f32.mrb[0].mxu0
    %v3727 = vpop.f32.mrb[0].mxu0
    %3728 = vdwg.mxu0
    %3729 = vst [vmem:[%s3] sm:$0xff] %v3724
    // Predicated region
    $region18: #{imu_transformer_forward.1} parent=1 // pred_check
      _
    $region19: #{imu_transformer_forward.1} parent=1 // pred_check_branch
      %3731 = sbr.rel (0) target = $region21
    $region20: #{imu_transformer_forward.1} parent=1 // pred_region
      _
    $region21: #{imu_transformer_forward.1} parent=1 // pred_fallthru
      _
    // Predicated region
    $region22: #{imu_transformer_forward.1} parent=1 // pred_check
      _
    $region23: #{imu_transformer_forward.1} parent=1 // pred_check_branch
      %3733 = sbr.rel (0) target = $region25
    $region24: #{imu_transformer_forward.1} parent=1 // pred_region
      _
    $region25: #{imu_transformer_forward.1} parent=1 // pred_fallthru
      _
    %3734 = vsyncpa [#allocation3], 1

</llo_original>
